<compile_context>
chip_gen: v7x
topology: tpu7x:2x2x1
jax: 0.10.0
libtpu: 0.0.40
codegen_flags: <defaults>
</compile_context>

<pallas_src>
import math
import numpy as np
import jax
import jax.numpy as jnp
from jax.experimental import pallas as pl
from jax.experimental.pallas import tpu as pltpu

# ----------------------------- configuration (small, consistent with the module) -------
B = 2            # batch
L = 16           # sequence length == l_max
D = 32           # d_model
N_LAYER = 2      # n_layer
D_INNER = 128    # d_inner (MLP hidden)
VOCAB = 12       # vocab_size (DNA-ish)
PAD_MULT = 8     # pad_vocab_size_multiple
ORDER = 2        # hyena order
FILTER_ORDER = 16       # implicit filter MLP width
EMB_DIM = 3             # filter positional-embedding dim (odd, >= 3)
NUM_INNER_MLPS = 2
SIN_W = 1.0
LN_EPS = 1e-5
D3 = (ORDER + 1) * D    # true fused in_proj width (x0 | x1 | v) = 96
P_IN = 128              # lane-padded fused in_proj width


# ----------------------------- Pallas kernel -------------------------------------------
def hyena_backbone_kernel(ids_ref, emb_ref,            # (L, 1) int32 block, (V, D) f32
                          ln1_w_ref, ln1_b_ref,        # (n, D)
                          w_in_ref, b_in_ref,          # (n, D, 128) bf16, (n, 128) f32
                          taps_ref, b_short_ref,       # (n, 3, 128), (n, 128) short-conv taps
                          kfir_ref, fbias_ref,         # (n, L, D), (n, D) implicit filter
                          w_out_ref, b_out_ref,        # (n, D, D) bf16, (n, D)
                          ln2_w_ref, ln2_b_ref,        # (n, D)
                          w_fc1_ref, b_fc1_ref,        # (n, D, H) bf16, (n, H)
                          w_fc2_ref, b_fc2_ref,        # (n, H, D) bf16, (n, D)
                          lnf_w_ref, lnf_b_ref,        # (1, D)
                          out_ref):                    # (L, D) f32 block of (B*L, D)
    Lk, Dk = out_ref.shape
    n_layer = ln1_w_ref.shape[0]
    vocab = emb_ref.shape[0]
    Pk = w_in_ref.shape[-1]
    inv_d = 1.0 / Dk

    def layer_norm(x, w, b):
        # single-pass LN: sum(x) and sum(x*x) are independent lane reductions
        s1 = jnp.sum(x, axis=-1, keepdims=True)
        s2 = jnp.sum(x * x, axis=-1, keepdims=True)
        mu = s1 * inv_d
        var = s2 * inv_d - mu * mu
        return (x - mu) * jax.lax.rsqrt(var + LN_EPS) * w[None, :] + b[None, :]

    def matmul(x, w_bf16, bias):
        # bf16 MXU matmul, f32 accumulation, f32 bias add
        y = jnp.dot(x.astype(jnp.bfloat16), w_bf16, preferred_element_type=jnp.float32)
        return y + bias[None, :]

    def gelu_tanh(x):  # tanh-form GELU: transcendental goes to the EUP slot
        c = math.sqrt(2.0 / math.pi)
        return 0.5 * x * (1.0 + jnp.tanh(c * (x + 0.044715 * (x * x * x))))

    # ---- token embedding gather, fused in-kernel (exact f32 select-sum, tiny vocab) ---
    ids = ids_ref[...]                      # (L, 1) int32
    emb = emb_ref[...]                      # (V, D) f32
    x = jnp.zeros((Lk, Dk), jnp.float32)
    for tok in range(vocab):
        sel = (ids == tok).astype(jnp.float32)          # (L, 1)
        x = x + sel * emb[tok][None, :]

    # hoisted zero pads: one broadcast each, reused by every layer / every tap
    zpad_short = jnp.zeros((2, Pk), jnp.float32)
    zpad_fir = jnp.zeros((Lk - 1, Dk), jnp.float32)

    hidden = x
    residual = hidden           # layer 0: residual = hidden (no zero-init + add)

    for layer in range(n_layer):
        if layer > 0:
            residual = hidden + residual
        h = layer_norm(residual, ln1_w_ref[layer], ln1_b_ref[layer])

        # ---- Hyena mixer (order=2) ----
        # fused in_proj, lane-padded to 128: packed x0 | x1 | v live in lanes 0..3D-1
        u = matmul(h, w_in_ref[layer], b_in_ref[layer])               # (L, 128)

        # depthwise causal short conv (kernel 3, padding 2, truncated to L) as three
        # shifted multiply-adds on the packed stream (static sublane slices of u_pad)
        taps = taps_ref[layer]                                        # (3, 128)
        u_pad = jnp.concatenate([zpad_short, u], axis=0)              # (L+2, 128)
        uc = (taps[0][None, :] * u                                    # u[t]
              + taps[1][None, :] * u_pad[1:Lk + 1]                    # u[t-1]
              + taps[2][None, :] * u_pad[0:Lk]                        # u[t-2]
              + b_short_ref[layer][None, :])

        # TODO(synk): if these 32-lane sub-slices show up as XLU relayout hotspots in the
        # bundle dump, keep the gating on the packed stream via pltpu.roll(uc, -D/-2D)
        # and extract only the final D-wide result.
        x0 = uc[:, 0:Dk]
        x1 = uc[:, Dk:2 * Dk]
        v = uc[:, 2 * Dk:3 * Dk]

        v = v * x1

        # long implicit causal conv (== torch fftconv) as a depthwise time-domain FIR:
        # y[t, d] = sum_j k[j, d] * v[t-j, d]  -- L shifted VALU FMAs, O(L*D) memory.
        kf = kfir_ref[layer]                                          # (L, D)
        v_pad = jnp.concatenate([zpad_fir, v], axis=0)                # (2L-1, D)
        acc = kf[0][None, :] * v
        for j in range(1, Lk):
            acc = acc + kf[j][None, :] * v_pad[Lk - 1 - j:2 * Lk - 1 - j]
        # TODO(synk): at larger L switch this unrolled tap loop to lax.fori_loop over a
        # VMEM-resident padded buffer to bound live ranges / vreg pressure.
        v = acc + v * fbias_ref[layer][None, :]

        y = v * x0
        y = matmul(y, w_out_ref[layer], b_out_ref[layer])

        # ---- second residual + norm2 + MLP ----
        residual = y + residual
        h2 = layer_norm(residual, ln2_w_ref[layer], ln2_b_ref[layer])
        z = gelu_tanh(matmul(h2, w_fc1_ref[layer], b_fc1_ref[layer]))
        hidden = matmul(z, w_fc2_ref[layer], b_fc2_ref[layer])

    # ---- final residual add + ln_f ----
    residual = hidden + residual
    out_ref[...] = layer_norm(residual, lnf_w_ref[0], lnf_b_ref[0])
    # TODO(synk): when n_layer / L grow: move the layer loop onto an 'arbitrary' grid
    # axis with per-layer weight index_maps (keeps one layer's weights live within
    # v7x's 64 MiB VMEM) and fold more sequences into the matmul M dim to fill the
    # 256x256 MXU; at this size everything is VMEM-resident per grid point.


# ----------------------------- parameter construction (deterministic, synthetic) -------
def hyena_filter_k(fp):
    """Implicit Hyena filter h(t): pos-emb -> Sin MLP -> exponential modulation. (L, D)"""
    t = jnp.linspace(0.0, 1.0, L)[:, None]                       # (L, 1)
    bands = (EMB_DIM - 1) // 2
    t_rescaled = jnp.linspace(0.0, L - 1, L)[:, None]
    w = 2.0 * math.pi * t_rescaled / L
    f = jnp.linspace(1e-4, bands - 1, bands)[None, :]
    zc = jnp.exp(-1j * f * w)
    z = jnp.concatenate([t, zc.real, zc.imag], axis=-1).astype(jnp.float32)   # (L, EMB_DIM)
    h = jnp.sin(fp["freq"] * (z @ fp["W1"] + fp["b1"]))
    for Wi, bi in fp["inner"]:
        h = jnp.sin(fp["freq"] * (h @ Wi + bi))
    h = h @ fp["Wlast"]                                          # (L, D)
    max_decay = math.log(1e-2) / 0.3
    min_decay = math.log(1e-2) / 1.5
    deltas = jnp.linspace(min_decay, max_decay, D)[None, :]
    decay = jnp.exp(-t * jnp.abs(deltas))
    return (h * decay).astype(jnp.float32)


def make_params(key):
    keys = iter(jax.random.split(key, 256))

    def nrm(shape, std):
        return std * jax.random.normal(next(keys), shape, dtype=jnp.float32)

    def uni(shape, bound):
        return jax.random.uniform(next(keys), shape, dtype=jnp.float32, minval=-bound, maxval=bound)

    vocab_padded = VOCAB + (PAD_MULT - VOCAB % PAD_MULT) % PAD_MULT
    out_std = 0.02 / math.sqrt(2 * N_LAYER)   # _init_weights rescale for out_proj / fc2

    params = {"emb": nrm((vocab_padded, D), 0.02),
              "lnf_w": jnp.ones((D,), jnp.float32),
              "lnf_b": jnp.zeros((D,), jnp.float32),
              "layers": []}

    for _ in range(N_LAYER):
        fp = {"W1": nrm((EMB_DIM, FILTER_ORDER), 0.02),
              "b1": jnp.zeros((FILTER_ORDER,), jnp.float32),
              "freq": SIN_W * jnp.ones((FILTER_ORDER,), jnp.float32),
              "inner": [(nrm((FILTER_ORDER, FILTER_ORDER), 0.02),
                         jnp.zeros((FILTER_ORDER,), jnp.float32))
                        for _ in range(NUM_INNER_MLPS)],
              "Wlast": nrm((FILTER_ORDER, D), 0.02)}
        conv_bound = 1.0 / math.sqrt(3.0)
        lp = {"ln1_w": jnp.ones((D,), jnp.float32), "ln1_b": jnp.zeros((D,), jnp.float32),
              "ln2_w": jnp.ones((D,), jnp.float32), "ln2_b": jnp.zeros((D,), jnp.float32),
              "w_in": nrm((D, D3), 0.02), "b_in": jnp.zeros((D3,), jnp.float32),
              "w_short": uni((D3, 3), conv_bound),           # (3D, 3) taps [t-2, t-1, t]
              "b_short": uni((D3,), conv_bound),
              "k_filter": hyena_filter_k(fp),                # (L, D) implicit filter
              "fbias": nrm((D,), 1.0),                       # HyenaFilter.bias = randn
              "w_out": nrm((D, D), out_std), "b_out": jnp.zeros((D,), jnp.float32),
              "w_fc1": nrm((D, D_INNER), 0.02), "b_fc1": jnp.zeros((D_INNER,), jnp.float32),
              "w_fc2": nrm((D_INNER, D), out_std), "b_fc2": jnp.zeros((D,), jnp.float32)}
        params["layers"].append(lp)
    return params


def build_kernel_inputs(params):
    """Pre-build all kernel operands (run once, outside the jitted per-call path)."""
    layers = params["layers"]
    stack = lambda name: jnp.stack([lp[name] for lp in layers])

    def pad_lanes(a, width):
        pad = width - a.shape[-1]
        return jnp.pad(a, [(0, 0)] * (a.ndim - 1) + [(0, pad)])

    # fused in_proj padded 96 -> 128 lanes; padded columns are zero-filled so the
    # padded lanes of u / uc are exactly zero (and never read: x0|x1|v use 0/D/2D).
    w_in = pad_lanes(stack("w_in"), P_IN).astype(jnp.bfloat16)        # (n, D, 128)
    b_in = pad_lanes(stack("b_in"), P_IN)                             # (n, 128)

    # short-conv taps packed per layer as (3, 128): taps[d, :] multiplies u[t - d]
    taps = jnp.stack([jnp.stack([lp["w_short"][:, 2],
                                 lp["w_short"][:, 1],
                                 lp["w_short"][:, 0]], axis=0) for lp in layers])
    taps = pad_lanes(taps, P_IN)                                      # (n, 3, 128)
    b_short = pad_lanes(stack("b_short"), P_IN)                       # (n, 128)

    return (params["emb"],                                            # (V, D) f32
            stack("ln1_w"), stack("ln1_b"),
            w_in, b_in,
            taps, b_short,
            stack("k_filter"), stack("fbias"),                        # FIR kernel (n, L, D)
            stack("w_out").astype(jnp.bfloat16), stack("b_out"),
            stack("ln2_w"), stack("ln2_b"),
            stack("w_fc1").astype(jnp.bfloat16), stack("b_fc1"),
            stack("w_fc2").astype(jnp.bfloat16), stack("b_fc2"),
            params["lnf_w"][None, :], params["lnf_b"][None, :])


# ----------------------------- wrapper ---------------------------------------------------
def _pallas_forward(ids_flat, kernel_args):
    vfull = pl.BlockSpec(memory_space=pltpu.MemorySpace.VMEM)   # whole array, VMEM-resident

    bytes_accessed = int(ids_flat.size) * 4 + B * L * D * 4
    bytes_accessed += sum(int(a.size) * a.dtype.itemsize for a in kernel_args)
    flops = B * N_LAYER * (2 * L * D * P_IN          # in_proj
                           + 6 * L * P_IN            # short conv
                           + 2 * L * L * D           # long FIR
                           + 6 * L * D               # gating + bias skip
                           + 2 * L * D * D           # out_proj
                           + 4 * L * D * D_INNER     # fc1 + fc2
                           + 16 * L * D)             # layernorms / residuals
    transcendentals = B * N_LAYER * L * D_INNER + B * (2 * N_LAYER + 1) * L

    return pl.pallas_call(
        hyena_backbone_kernel,
        out_shape=jax.ShapeDtypeStruct((B * L, D), jnp.float32),   # lane-flattened output
        grid=(B,),                                                 # batch -> parallel axis
        in_specs=[pl.BlockSpec((L, 1), lambda b: (b, 0))] + [vfull] * len(kernel_args),
        out_specs=pl.BlockSpec((L, D), lambda b: (b, 0)),
        compiler_params=pltpu.CompilerParams(dimension_semantics=("parallel",)),
        cost_estimate=pl.CostEstimate(flops=flops, transcendentals=transcendentals,
                                      bytes_accessed=bytes_accessed),
    )(ids_flat, *kernel_args)


@jax.jit
def hyena_dna_forward(input_ids, kernel_args):
    ids_flat = input_ids.reshape(B * L, 1).astype(jnp.int32)   # time-on-sublanes layout
    out_flat = _pallas_forward(ids_flat, kernel_args)
    return out_flat.reshape(B, L, D)
    # TODO(synk): use_head=False path only (SequenceDecoder pooling head not instantiated).


# ----------------------------- pure-JAX reference (mirrors the PyTorch math) ------------
def reference_forward(params, input_ids):
    hi = jax.lax.Precision.HIGHEST

    def ln(x, w, b):
        mu = jnp.mean(x, axis=-1, keepdims=True)
        var = jnp.mean((x - mu) ** 2, axis=-1, keepdims=True)
        return (x - mu) / jnp.sqrt(var + LN_EPS) * w + b

    hidden = params["emb"][input_ids]
    residual = None
    for lp in params["layers"]:
        residual = hidden + residual if residual is not None else hidden
        h = ln(residual, lp["ln1_w"], lp["ln1_b"])
        u = jnp.matmul(h, lp["w_in"], precision=hi) + lp["b_in"]          # (B, L, 3D)
        u = jnp.transpose(u, (0, 2, 1))                                   # (B, 3D, L)  NCW
        u_pad = jnp.pad(u, ((0, 0), (0, 0), (2, 2)))
        w3 = lp["w_short"]
        uc = (w3[:, 0][None, :, None] * u_pad[:, :, 0:L]
              + w3[:, 1][None, :, None] * u_pad[:, :, 1:L + 1]
              + w3[:, 2][None, :, None] * u_pad[:, :, 2:L + 2]) + lp["b_short"][None, :, None]
        x0, x1, v = uc[:, 0:D], uc[:, D:2 * D], uc[:, 2 * D:]
        v = v * x1
        fft_size = 2 * L
        k_f = jnp.fft.rfft(lp["k_filter"].T, n=fft_size) / fft_size
        v_f = jnp.fft.rfft(v, n=fft_size)
        y = (jnp.fft.irfft(v_f * k_f[None], n=fft_size) * fft_size)[..., :L]
        v = y + v * lp["fbias"][None, :, None]
        y = v * x0
        y = jnp.matmul(jnp.transpose(y, (0, 2, 1)), lp["w_out"], precision=hi) + lp["b_out"]
        residual = y + residual
        h2 = ln(residual, lp["ln2_w"], lp["ln2_b"])
        z = jax.nn.gelu(jnp.matmul(h2, lp["w_fc1"], precision=hi) + lp["b_fc1"], approximate=False)
        hidden = jnp.matmul(z, lp["w_fc2"], precision=hi) + lp["b_fc2"]
    residual = hidden + residual
    return ln(residual, params["lnf_w"], params["lnf_b"])


# ----------------------------- main ------------------------------------------------------
if __name__ == "__main__":
    key = jax.random.PRNGKey(0)
    pkey, dkey = jax.random.split(key)
    params = make_params(pkey)
    input_ids = jax.random.randint(dkey, (B, L), 0, VOCAB, dtype=jnp.int32)

    # Build kernel operands (implicit-filter MLP, lane padding, bf16 casts) once.
    kernel_args = build_kernel_inputs(params)

    out = hyena_dna_forward(input_ids, kernel_args)
    out = jax.block_until_ready(out)

    ref = jax.block_until_ready(reference_forward(params, input_ids))
    assert out.shape == (B, L, D) and out.dtype == jnp.float32
    # Tolerance is intentionally loose to absorb bf16 MXU weights + tanh-GELU vs the
    # f32 / exact-erf reference; do not tighten without revisiting those choices.
    np.testing.assert_allclose(np.asarray(out), np.asarray(ref), rtol=2e-2, atol=2e-2)

    print("KERNEL_OK")
</pallas_src>

<mosaic_0001>
module attributes {stable_mosaic.version = 11 : i64} {
  func.func @hyena_backbone_kernel(%arg0: i32, %arg1: memref<16x1xi32, #tpu.memory_space<vmem>>, %arg2: memref<16x32xf32, #tpu.memory_space<vmem>>, %arg3: memref<2x32xf32, #tpu.memory_space<vmem>>, %arg4: memref<2x32xf32, #tpu.memory_space<vmem>>, %arg5: memref<2x32x128xbf16, #tpu.memory_space<vmem>>, %arg6: memref<2x128xf32, #tpu.memory_space<vmem>>, %arg7: memref<2x3x128xf32, #tpu.memory_space<vmem>>, %arg8: memref<2x128xf32, #tpu.memory_space<vmem>>, %arg9: memref<2x16x32xf32, #tpu.memory_space<vmem>>, %arg10: memref<2x32xf32, #tpu.memory_space<vmem>>, %arg11: memref<2x32x32xbf16, #tpu.memory_space<vmem>>, %arg12: memref<2x32xf32, #tpu.memory_space<vmem>>, %arg13: memref<2x32xf32, #tpu.memory_space<vmem>>, %arg14: memref<2x32xf32, #tpu.memory_space<vmem>>, %arg15: memref<2x32x128xbf16, #tpu.memory_space<vmem>>, %arg16: memref<2x128xf32, #tpu.memory_space<vmem>>, %arg17: memref<2x128x32xbf16, #tpu.memory_space<vmem>>, %arg18: memref<2x32xf32, #tpu.memory_space<vmem>>, %arg19: memref<1x32xf32, #tpu.memory_space<vmem>>, %arg20: memref<1x32xf32, #tpu.memory_space<vmem>>, %arg21: memref<16x32xf32, #tpu.memory_space<vmem>>) attributes {dimension_semantics = [#tpu.dimension_semantics<parallel>], iteration_bounds = array<i64: 2>, scalar_prefetch = 0 : i64, scratch_operands = 0 : i64, tpu.core_type = #tpu.core_type<tc>, window_params = [{transform_indices = @transform_0, window_bounds = array<i64: 16, 1>}, {pipeline_mode = #tpu.pipeline_mode<synchronous>, transform_indices = @transform_1, window_bounds = array<i64: 16, 32>}, {pipeline_mode = #tpu.pipeline_mode<synchronous>, transform_indices = @transform_2, window_bounds = array<i64: 2, 32>}, {pipeline_mode = #tpu.pipeline_mode<synchronous>, transform_indices = @transform_3, window_bounds = array<i64: 2, 32>}, {pipeline_mode = #tpu.pipeline_mode<synchronous>, transform_indices = @transform_4, window_bounds = array<i64: 2, 32, 128>}, {pipeline_mode = #tpu.pipeline_mode<synchronous>, transform_indices = @transform_5, window_bounds = array<i64: 2, 128>}, {pipeline_mode = #tpu.pipeline_mode<synchronous>, transform_indices = @transform_6, window_bounds = array<i64: 2, 3, 128>}, {pipeline_mode = #tpu.pipeline_mode<synchronous>, transform_indices = @transform_7, window_bounds = array<i64: 2, 128>}, {pipeline_mode = #tpu.pipeline_mode<synchronous>, transform_indices = @transform_8, window_bounds = array<i64: 2, 16, 32>}, {pipeline_mode = #tpu.pipeline_mode<synchronous>, transform_indices = @transform_9, window_bounds = array<i64: 2, 32>}, {pipeline_mode = #tpu.pipeline_mode<synchronous>, transform_indices = @transform_10, window_bounds = array<i64: 2, 32, 32>}, {pipeline_mode = #tpu.pipeline_mode<synchronous>, transform_indices = @transform_11, window_bounds = array<i64: 2, 32>}, {pipeline_mode = #tpu.pipeline_mode<synchronous>, transform_indices = @transform_12, window_bounds = array<i64: 2, 32>}, {pipeline_mode = #tpu.pipeline_mode<synchronous>, transform_indices = @transform_13, window_bounds = array<i64: 2, 32>}, {pipeline_mode = #tpu.pipeline_mode<synchronous>, transform_indices = @transform_14, window_bounds = array<i64: 2, 32, 128>}, {pipeline_mode = #tpu.pipeline_mode<synchronous>, transform_indices = @transform_15, window_bounds = array<i64: 2, 128>}, {pipeline_mode = #tpu.pipeline_mode<synchronous>, transform_indices = @transform_16, window_bounds = array<i64: 2, 128, 32>}, {pipeline_mode = #tpu.pipeline_mode<synchronous>, transform_indices = @transform_17, window_bounds = array<i64: 2, 32>}, {pipeline_mode = #tpu.pipeline_mode<synchronous>, transform_indices = @transform_18, window_bounds = array<i64: 1, 32>}, {pipeline_mode = #tpu.pipeline_mode<synchronous>, transform_indices = @transform_19, window_bounds = array<i64: 1, 32>}, {transform_indices = @transform_20, window_bounds = array<i64: 16, 32>}]} {
    %c0 = arith.constant 0 : index
    %c0_0 = arith.constant 0 : index
    %0 = vector.load %arg1[%c0, %c0_0] : memref<16x1xi32, #tpu.memory_space<vmem>>, vector<16x1xi32>
    %c0_1 = arith.constant 0 : index
    %c0_2 = arith.constant 0 : index
    %1 = vector.load %arg2[%c0_1, %c0_2] : memref<16x32xf32, #tpu.memory_space<vmem>>, vector<16x32xf32>
    %cst = arith.constant 0.000000e+00 : f32
    %2 = vector.broadcast %cst : f32 to vector<16x32xf32>
    %c0_i32 = arith.constant 0 : i32
    %3 = vector.broadcast %c0_i32 : i32 to vector<16x1xi32>
    %4 = arith.cmpi eq, %0, %3 : vector<16x1xi32>
    %5 = arith.extui %4 : vector<16x1xi1> to vector<16x1xi32>
    %6 = arith.sitofp %5 : vector<16x1xi32> to vector<16x1xf32>
    %7 = vector.extract_strided_slice %1 {offsets = [0, 0], sizes = [1, 32], strides = [1, 1]} : vector<16x32xf32> to vector<1x32xf32>
    %8 = vector.shape_cast %7 : vector<1x32xf32> to vector<32xf32>
    %9 = vector.shape_cast %8 : vector<32xf32> to vector<1x32xf32>
    %10 = vector.broadcast %6 : vector<16x1xf32> to vector<16x32xf32>
    %11 = vector.broadcast %9 : vector<1x32xf32> to vector<16x32xf32>
    %12 = arith.mulf %10, %11 : vector<16x32xf32>
    %13 = arith.addf %2, %12 : vector<16x32xf32>
    %c1_i32 = arith.constant 1 : i32
    %14 = vector.broadcast %c1_i32 : i32 to vector<16x1xi32>
    %15 = arith.cmpi eq, %0, %14 : vector<16x1xi32>
    %16 = arith.extui %15 : vector<16x1xi1> to vector<16x1xi32>
    %17 = arith.sitofp %16 : vector<16x1xi32> to vector<16x1xf32>
    %18 = vector.extract_strided_slice %1 {offsets = [1, 0], sizes = [1, 32], strides = [1, 1]} : vector<16x32xf32> to vector<1x32xf32>
    %19 = vector.shape_cast %18 : vector<1x32xf32> to vector<32xf32>
    %20 = vector.shape_cast %19 : vector<32xf32> to vector<1x32xf32>
    %21 = vector.broadcast %17 : vector<16x1xf32> to vector<16x32xf32>
    %22 = vector.broadcast %20 : vector<1x32xf32> to vector<16x32xf32>
    %23 = arith.mulf %21, %22 : vector<16x32xf32>
    %24 = arith.addf %13, %23 : vector<16x32xf32>
    %c2_i32 = arith.constant 2 : i32
    %25 = vector.broadcast %c2_i32 : i32 to vector<16x1xi32>
    %26 = arith.cmpi eq, %0, %25 : vector<16x1xi32>
    %27 = arith.extui %26 : vector<16x1xi1> to vector<16x1xi32>
    %28 = arith.sitofp %27 : vector<16x1xi32> to vector<16x1xf32>
    %29 = vector.extract_strided_slice %1 {offsets = [2, 0], sizes = [1, 32], strides = [1, 1]} : vector<16x32xf32> to vector<1x32xf32>
    %30 = vector.shape_cast %29 : vector<1x32xf32> to vector<32xf32>
    %31 = vector.shape_cast %30 : vector<32xf32> to vector<1x32xf32>
    %32 = vector.broadcast %28 : vector<16x1xf32> to vector<16x32xf32>
    %33 = vector.broadcast %31 : vector<1x32xf32> to vector<16x32xf32>
    %34 = arith.mulf %32, %33 : vector<16x32xf32>
    %35 = arith.addf %24, %34 : vector<16x32xf32>
    %c3_i32 = arith.constant 3 : i32
    %36 = vector.broadcast %c3_i32 : i32 to vector<16x1xi32>
    %37 = arith.cmpi eq, %0, %36 : vector<16x1xi32>
    %38 = arith.extui %37 : vector<16x1xi1> to vector<16x1xi32>
    %39 = arith.sitofp %38 : vector<16x1xi32> to vector<16x1xf32>
    %40 = vector.extract_strided_slice %1 {offsets = [3, 0], sizes = [1, 32], strides = [1, 1]} : vector<16x32xf32> to vector<1x32xf32>
    %41 = vector.shape_cast %40 : vector<1x32xf32> to vector<32xf32>
    %42 = vector.shape_cast %41 : vector<32xf32> to vector<1x32xf32>
    %43 = vector.broadcast %39 : vector<16x1xf32> to vector<16x32xf32>
    %44 = vector.broadcast %42 : vector<1x32xf32> to vector<16x32xf32>
    %45 = arith.mulf %43, %44 : vector<16x32xf32>
    %46 = arith.addf %35, %45 : vector<16x32xf32>
    %c4_i32 = arith.constant 4 : i32
    %47 = vector.broadcast %c4_i32 : i32 to vector<16x1xi32>
    %48 = arith.cmpi eq, %0, %47 : vector<16x1xi32>
    %49 = arith.extui %48 : vector<16x1xi1> to vector<16x1xi32>
    %50 = arith.sitofp %49 : vector<16x1xi32> to vector<16x1xf32>
    %51 = vector.extract_strided_slice %1 {offsets = [4, 0], sizes = [1, 32], strides = [1, 1]} : vector<16x32xf32> to vector<1x32xf32>
    %52 = vector.shape_cast %51 : vector<1x32xf32> to vector<32xf32>
    %53 = vector.shape_cast %52 : vector<32xf32> to vector<1x32xf32>
    %54 = vector.broadcast %50 : vector<16x1xf32> to vector<16x32xf32>
    %55 = vector.broadcast %53 : vector<1x32xf32> to vector<16x32xf32>
    %56 = arith.mulf %54, %55 : vector<16x32xf32>
    %57 = arith.addf %46, %56 : vector<16x32xf32>
    %c5_i32 = arith.constant 5 : i32
    %58 = vector.broadcast %c5_i32 : i32 to vector<16x1xi32>
    %59 = arith.cmpi eq, %0, %58 : vector<16x1xi32>
    %60 = arith.extui %59 : vector<16x1xi1> to vector<16x1xi32>
    %61 = arith.sitofp %60 : vector<16x1xi32> to vector<16x1xf32>
    %62 = vector.extract_strided_slice %1 {offsets = [5, 0], sizes = [1, 32], strides = [1, 1]} : vector<16x32xf32> to vector<1x32xf32>
    %63 = vector.shape_cast %62 : vector<1x32xf32> to vector<32xf32>
    %64 = vector.shape_cast %63 : vector<32xf32> to vector<1x32xf32>
    %65 = vector.broadcast %61 : vector<16x1xf32> to vector<16x32xf32>
    %66 = vector.broadcast %64 : vector<1x32xf32> to vector<16x32xf32>
    %67 = arith.mulf %65, %66 : vector<16x32xf32>
    %68 = arith.addf %57, %67 : vector<16x32xf32>
    %c6_i32 = arith.constant 6 : i32
    %69 = vector.broadcast %c6_i32 : i32 to vector<16x1xi32>
    %70 = arith.cmpi eq, %0, %69 : vector<16x1xi32>
    %71 = arith.extui %70 : vector<16x1xi1> to vector<16x1xi32>
    %72 = arith.sitofp %71 : vector<16x1xi32> to vector<16x1xf32>
    %73 = vector.extract_strided_slice %1 {offsets = [6, 0], sizes = [1, 32], strides = [1, 1]} : vector<16x32xf32> to vector<1x32xf32>
    %74 = vector.shape_cast %73 : vector<1x32xf32> to vector<32xf32>
    %75 = vector.shape_cast %74 : vector<32xf32> to vector<1x32xf32>
    %76 = vector.broadcast %72 : vector<16x1xf32> to vector<16x32xf32>
    %77 = vector.broadcast %75 : vector<1x32xf32> to vector<16x32xf32>
    %78 = arith.mulf %76, %77 : vector<16x32xf32>
    %79 = arith.addf %68, %78 : vector<16x32xf32>
    %c7_i32 = arith.constant 7 : i32
    %80 = vector.broadcast %c7_i32 : i32 to vector<16x1xi32>
    %81 = arith.cmpi eq, %0, %80 : vector<16x1xi32>
    %82 = arith.extui %81 : vector<16x1xi1> to vector<16x1xi32>
    %83 = arith.sitofp %82 : vector<16x1xi32> to vector<16x1xf32>
    %84 = vector.extract_strided_slice %1 {offsets = [7, 0], sizes = [1, 32], strides = [1, 1]} : vector<16x32xf32> to vector<1x32xf32>
    %85 = vector.shape_cast %84 : vector<1x32xf32> to vector<32xf32>
    %86 = vector.shape_cast %85 : vector<32xf32> to vector<1x32xf32>
    %87 = vector.broadcast %83 : vector<16x1xf32> to vector<16x32xf32>
    %88 = vector.broadcast %86 : vector<1x32xf32> to vector<16x32xf32>
    %89 = arith.mulf %87, %88 : vector<16x32xf32>
    %90 = arith.addf %79, %89 : vector<16x32xf32>
    %c8_i32 = arith.constant 8 : i32
    %91 = vector.broadcast %c8_i32 : i32 to vector<16x1xi32>
    %92 = arith.cmpi eq, %0, %91 : vector<16x1xi32>
    %93 = arith.extui %92 : vector<16x1xi1> to vector<16x1xi32>
    %94 = arith.sitofp %93 : vector<16x1xi32> to vector<16x1xf32>
    %95 = vector.extract_strided_slice %1 {offsets = [8, 0], sizes = [1, 32], strides = [1, 1]} : vector<16x32xf32> to vector<1x32xf32>
    %96 = vector.shape_cast %95 : vector<1x32xf32> to vector<32xf32>
    %97 = vector.shape_cast %96 : vector<32xf32> to vector<1x32xf32>
    %98 = vector.broadcast %94 : vector<16x1xf32> to vector<16x32xf32>
    %99 = vector.broadcast %97 : vector<1x32xf32> to vector<16x32xf32>
    %100 = arith.mulf %98, %99 : vector<16x32xf32>
    %101 = arith.addf %90, %100 : vector<16x32xf32>
    %c9_i32 = arith.constant 9 : i32
    %102 = vector.broadcast %c9_i32 : i32 to vector<16x1xi32>
    %103 = arith.cmpi eq, %0, %102 : vector<16x1xi32>
    %104 = arith.extui %103 : vector<16x1xi1> to vector<16x1xi32>
    %105 = arith.sitofp %104 : vector<16x1xi32> to vector<16x1xf32>
    %106 = vector.extract_strided_slice %1 {offsets = [9, 0], sizes = [1, 32], strides = [1, 1]} : vector<16x32xf32> to vector<1x32xf32>
    %107 = vector.shape_cast %106 : vector<1x32xf32> to vector<32xf32>
    %108 = vector.shape_cast %107 : vector<32xf32> to vector<1x32xf32>
    %109 = vector.broadcast %105 : vector<16x1xf32> to vector<16x32xf32>
    %110 = vector.broadcast %108 : vector<1x32xf32> to vector<16x32xf32>
    %111 = arith.mulf %109, %110 : vector<16x32xf32>
    %112 = arith.addf %101, %111 : vector<16x32xf32>
    %c10_i32 = arith.constant 10 : i32
    %113 = vector.broadcast %c10_i32 : i32 to vector<16x1xi32>
    %114 = arith.cmpi eq, %0, %113 : vector<16x1xi32>
    %115 = arith.extui %114 : vector<16x1xi1> to vector<16x1xi32>
    %116 = arith.sitofp %115 : vector<16x1xi32> to vector<16x1xf32>
    %117 = vector.extract_strided_slice %1 {offsets = [10, 0], sizes = [1, 32], strides = [1, 1]} : vector<16x32xf32> to vector<1x32xf32>
    %118 = vector.shape_cast %117 : vector<1x32xf32> to vector<32xf32>
    %119 = vector.shape_cast %118 : vector<32xf32> to vector<1x32xf32>
    %120 = vector.broadcast %116 : vector<16x1xf32> to vector<16x32xf32>
    %121 = vector.broadcast %119 : vector<1x32xf32> to vector<16x32xf32>
    %122 = arith.mulf %120, %121 : vector<16x32xf32>
    %123 = arith.addf %112, %122 : vector<16x32xf32>
    %c11_i32 = arith.constant 11 : i32
    %124 = vector.broadcast %c11_i32 : i32 to vector<16x1xi32>
    %125 = arith.cmpi eq, %0, %124 : vector<16x1xi32>
    %126 = arith.extui %125 : vector<16x1xi1> to vector<16x1xi32>
    %127 = arith.sitofp %126 : vector<16x1xi32> to vector<16x1xf32>
    %128 = vector.extract_strided_slice %1 {offsets = [11, 0], sizes = [1, 32], strides = [1, 1]} : vector<16x32xf32> to vector<1x32xf32>
    %129 = vector.shape_cast %128 : vector<1x32xf32> to vector<32xf32>
    %130 = vector.shape_cast %129 : vector<32xf32> to vector<1x32xf32>
    %131 = vector.broadcast %127 : vector<16x1xf32> to vector<16x32xf32>
    %132 = vector.broadcast %130 : vector<1x32xf32> to vector<16x32xf32>
    %133 = arith.mulf %131, %132 : vector<16x32xf32>
    %134 = arith.addf %123, %133 : vector<16x32xf32>
    %c12_i32 = arith.constant 12 : i32
    %135 = vector.broadcast %c12_i32 : i32 to vector<16x1xi32>
    %136 = arith.cmpi eq, %0, %135 : vector<16x1xi32>
    %137 = arith.extui %136 : vector<16x1xi1> to vector<16x1xi32>
    %138 = arith.sitofp %137 : vector<16x1xi32> to vector<16x1xf32>
    %139 = vector.extract_strided_slice %1 {offsets = [12, 0], sizes = [1, 32], strides = [1, 1]} : vector<16x32xf32> to vector<1x32xf32>
    %140 = vector.shape_cast %139 : vector<1x32xf32> to vector<32xf32>
    %141 = vector.shape_cast %140 : vector<32xf32> to vector<1x32xf32>
    %142 = vector.broadcast %138 : vector<16x1xf32> to vector<16x32xf32>
    %143 = vector.broadcast %141 : vector<1x32xf32> to vector<16x32xf32>
    %144 = arith.mulf %142, %143 : vector<16x32xf32>
    %145 = arith.addf %134, %144 : vector<16x32xf32>
    %c13_i32 = arith.constant 13 : i32
    %146 = vector.broadcast %c13_i32 : i32 to vector<16x1xi32>
    %147 = arith.cmpi eq, %0, %146 : vector<16x1xi32>
    %148 = arith.extui %147 : vector<16x1xi1> to vector<16x1xi32>
    %149 = arith.sitofp %148 : vector<16x1xi32> to vector<16x1xf32>
    %150 = vector.extract_strided_slice %1 {offsets = [13, 0], sizes = [1, 32], strides = [1, 1]} : vector<16x32xf32> to vector<1x32xf32>
    %151 = vector.shape_cast %150 : vector<1x32xf32> to vector<32xf32>
    %152 = vector.shape_cast %151 : vector<32xf32> to vector<1x32xf32>
    %153 = vector.broadcast %149 : vector<16x1xf32> to vector<16x32xf32>
    %154 = vector.broadcast %152 : vector<1x32xf32> to vector<16x32xf32>
    %155 = arith.mulf %153, %154 : vector<16x32xf32>
    %156 = arith.addf %145, %155 : vector<16x32xf32>
    %c14_i32 = arith.constant 14 : i32
    %157 = vector.broadcast %c14_i32 : i32 to vector<16x1xi32>
    %158 = arith.cmpi eq, %0, %157 : vector<16x1xi32>
    %159 = arith.extui %158 : vector<16x1xi1> to vector<16x1xi32>
    %160 = arith.sitofp %159 : vector<16x1xi32> to vector<16x1xf32>
    %161 = vector.extract_strided_slice %1 {offsets = [14, 0], sizes = [1, 32], strides = [1, 1]} : vector<16x32xf32> to vector<1x32xf32>
    %162 = vector.shape_cast %161 : vector<1x32xf32> to vector<32xf32>
    %163 = vector.shape_cast %162 : vector<32xf32> to vector<1x32xf32>
    %164 = vector.broadcast %160 : vector<16x1xf32> to vector<16x32xf32>
    %165 = vector.broadcast %163 : vector<1x32xf32> to vector<16x32xf32>
    %166 = arith.mulf %164, %165 : vector<16x32xf32>
    %167 = arith.addf %156, %166 : vector<16x32xf32>
    %c15_i32 = arith.constant 15 : i32
    %168 = vector.broadcast %c15_i32 : i32 to vector<16x1xi32>
    %169 = arith.cmpi eq, %0, %168 : vector<16x1xi32>
    %170 = arith.extui %169 : vector<16x1xi1> to vector<16x1xi32>
    %171 = arith.sitofp %170 : vector<16x1xi32> to vector<16x1xf32>
    %172 = vector.extract_strided_slice %1 {offsets = [15, 0], sizes = [1, 32], strides = [1, 1]} : vector<16x32xf32> to vector<1x32xf32>
    %173 = vector.shape_cast %172 : vector<1x32xf32> to vector<32xf32>
    %174 = vector.shape_cast %173 : vector<32xf32> to vector<1x32xf32>
    %175 = vector.broadcast %171 : vector<16x1xf32> to vector<16x32xf32>
    %176 = vector.broadcast %174 : vector<1x32xf32> to vector<16x32xf32>
    %177 = arith.mulf %175, %176 : vector<16x32xf32>
    %178 = arith.addf %167, %177 : vector<16x32xf32>
    %cst_3 = arith.constant 0.000000e+00 : f32
    %179 = vector.broadcast %cst_3 : f32 to vector<2x128xf32>
    %cst_4 = arith.constant 0.000000e+00 : f32
    %180 = vector.broadcast %cst_4 : f32 to vector<15x32xf32>
    %c0_5 = arith.constant 0 : index
    %c0_6 = arith.constant 0 : index
    %181 = vector.load %arg3[%c0_5, %c0_6] : memref<2x32xf32, #tpu.memory_space<vmem>>, vector<1x32xf32>
    %182 = vector.shape_cast %181 : vector<1x32xf32> to vector<32xf32>
    %c0_7 = arith.constant 0 : index
    %c0_8 = arith.constant 0 : index
    %183 = vector.load %arg4[%c0_7, %c0_8] : memref<2x32xf32, #tpu.memory_space<vmem>>, vector<1x32xf32>
    %184 = vector.shape_cast %183 : vector<1x32xf32> to vector<32xf32>
    %cst_9 = arith.constant dense<0.000000e+00> : vector<16xf32>
    %185 = vector.multi_reduction <add>, %178, %cst_9 [1] : vector<16x32xf32> to vector<16xf32>
    %186 = vector.shape_cast %185 : vector<16xf32> to vector<16x1xf32>
    %187 = arith.mulf %178, %178 : vector<16x32xf32>
    %cst_10 = arith.constant dense<0.000000e+00> : vector<16xf32>
    %188 = vector.multi_reduction <add>, %187, %cst_10 [1] : vector<16x32xf32> to vector<16xf32>
    %189 = vector.shape_cast %188 : vector<16xf32> to vector<16x1xf32>
    %cst_11 = arith.constant 3.125000e-02 : f32
    %190 = vector.broadcast %cst_11 : f32 to vector<16x1xf32>
    %191 = arith.mulf %186, %190 : vector<16x1xf32>
    %cst_12 = arith.constant 3.125000e-02 : f32
    %192 = vector.broadcast %cst_12 : f32 to vector<16x1xf32>
    %193 = arith.mulf %189, %192 : vector<16x1xf32>
    %194 = arith.mulf %191, %191 : vector<16x1xf32>
    %195 = arith.subf %193, %194 : vector<16x1xf32>
    %196 = vector.broadcast %191 : vector<16x1xf32> to vector<16x32xf32>
    %197 = arith.subf %178, %196 : vector<16x32xf32>
    %cst_13 = arith.constant 9.99999974E-6 : f32
    %198 = vector.broadcast %cst_13 : f32 to vector<16x1xf32>
    %199 = arith.addf %195, %198 : vector<16x1xf32>
    %200 = math.rsqrt %199 : vector<16x1xf32>
    %201 = vector.broadcast %200 : vector<16x1xf32> to vector<16x32xf32>
    %202 = arith.mulf %197, %201 : vector<16x32xf32>
    %203 = vector.shape_cast %182 : vector<32xf32> to vector<1x32xf32>
    %204 = vector.broadcast %203 : vector<1x32xf32> to vector<16x32xf32>
    %205 = arith.mulf %202, %204 : vector<16x32xf32>
    %206 = vector.shape_cast %184 : vector<32xf32> to vector<1x32xf32>
    %207 = vector.broadcast %206 : vector<1x32xf32> to vector<16x32xf32>
    %208 = arith.addf %205, %207 : vector<16x32xf32>
    %c0_14 = arith.constant 0 : index
    %c0_15 = arith.constant 0 : index
    %c0_16 = arith.constant 0 : index
    %209 = vector.load %arg5[%c0_14, %c0_15, %c0_16] : memref<2x32x128xbf16, #tpu.memory_space<vmem>>, vector<1x32x128xbf16>
    %210 = vector.shape_cast %209 : vector<1x32x128xbf16> to vector<32x128xbf16>
    %c0_17 = arith.constant 0 : index
    %c0_18 = arith.constant 0 : index
    %211 = vector.load %arg6[%c0_17, %c0_18] : memref<2x128xf32, #tpu.memory_space<vmem>>, vector<1x128xf32>
    %212 = vector.shape_cast %211 : vector<1x128xf32> to vector<128xf32>
    %213 = arith.truncf %208 : vector<16x32xf32> to vector<16x32xbf16>
    %cst_19 = arith.constant dense<0.000000e+00> : vector<16x128xf32>
    %214 = tpu.matmul %213, %210, %cst_19 {dimension_numbers = #tpu.dot_dimension_numbers<[1], [0], [0], [1], [0, 0, 1, 1], [], []>} : vector<16x32xbf16>, vector<32x128xbf16>, vector<16x128xf32> -> vector<16x128xf32>
    %215 = vector.shape_cast %212 : vector<128xf32> to vector<1x128xf32>
    %216 = vector.broadcast %215 : vector<1x128xf32> to vector<16x128xf32>
    %217 = arith.addf %214, %216 : vector<16x128xf32>
    %c0_20 = arith.constant 0 : index
    %c0_21 = arith.constant 0 : index
    %c0_22 = arith.constant 0 : index
    %218 = vector.load %arg7[%c0_20, %c0_21, %c0_22] : memref<2x3x128xf32, #tpu.memory_space<vmem>>, vector<1x3x128xf32>
    %219 = vector.shape_cast %218 : vector<1x3x128xf32> to vector<3x128xf32>
    %220 = tpu.concatenate %179, %217 in 0 : vector<2x128xf32>, vector<16x128xf32> -> vector<18x128xf32>
    %221 = vector.extract_strided_slice %219 {offsets = [0, 0], sizes = [1, 128], strides = [1, 1]} : vector<3x128xf32> to vector<1x128xf32>
    %222 = vector.shape_cast %221 : vector<1x128xf32> to vector<128xf32>
    %223 = vector.shape_cast %222 : vector<128xf32> to vector<1x128xf32>
    %224 = vector.broadcast %223 : vector<1x128xf32> to vector<16x128xf32>
    %225 = arith.mulf %224, %217 : vector<16x128xf32>
    %226 = vector.extract_strided_slice %219 {offsets = [1, 0], sizes = [1, 128], strides = [1, 1]} : vector<3x128xf32> to vector<1x128xf32>
    %227 = vector.shape_cast %226 : vector<1x128xf32> to vector<128xf32>
    %228 = vector.shape_cast %227 : vector<128xf32> to vector<1x128xf32>
    %229 = vector.extract_strided_slice %220 {offsets = [1, 0], sizes = [16, 128], strides = [1, 1]} : vector<18x128xf32> to vector<16x128xf32>
    %230 = vector.broadcast %228 : vector<1x128xf32> to vector<16x128xf32>
    %231 = arith.mulf %230, %229 : vector<16x128xf32>
    %232 = arith.addf %225, %231 : vector<16x128xf32>
    %233 = vector.extract_strided_slice %219 {offsets = [2, 0], sizes = [1, 128], strides = [1, 1]} : vector<3x128xf32> to vector<1x128xf32>
    %234 = vector.shape_cast %233 : vector<1x128xf32> to vector<128xf32>
    %235 = vector.shape_cast %234 : vector<128xf32> to vector<1x128xf32>
    %236 = vector.extract_strided_slice %220 {offsets = [0, 0], sizes = [16, 128], strides = [1, 1]} : vector<18x128xf32> to vector<16x128xf32>
    %237 = vector.broadcast %235 : vector<1x128xf32> to vector<16x128xf32>
    %238 = arith.mulf %237, %236 : vector<16x128xf32>
    %239 = arith.addf %232, %238 : vector<16x128xf32>
    %c0_23 = arith.constant 0 : index
    %c0_24 = arith.constant 0 : index
    %240 = vector.load %arg8[%c0_23, %c0_24] : memref<2x128xf32, #tpu.memory_space<vmem>>, vector<1x128xf32>
    %241 = vector.shape_cast %240 : vector<1x128xf32> to vector<128xf32>
    %242 = vector.shape_cast %241 : vector<128xf32> to vector<1x128xf32>
    %243 = vector.broadcast %242 : vector<1x128xf32> to vector<16x128xf32>
    %244 = arith.addf %239, %243 : vector<16x128xf32>
    %245 = vector.extract_strided_slice %244 {offsets = [0, 0], sizes = [16, 32], strides = [1, 1]} : vector<16x128xf32> to vector<16x32xf32>
    %246 = vector.extract_strided_slice %244 {offsets = [0, 32], sizes = [16, 32], strides = [1, 1]} : vector<16x128xf32> to vector<16x32xf32>
    %247 = vector.extract_strided_slice %244 {offsets = [0, 64], sizes = [16, 32], strides = [1, 1]} : vector<16x128xf32> to vector<16x32xf32>
    %248 = arith.mulf %247, %246 : vector<16x32xf32>
    %c0_25 = arith.constant 0 : index
    %c0_26 = arith.constant 0 : index
    %c0_27 = arith.constant 0 : index
    %249 = vector.load %arg9[%c0_25, %c0_26, %c0_27] : memref<2x16x32xf32, #tpu.memory_space<vmem>>, vector<1x16x32xf32>
    %250 = vector.shape_cast %249 : vector<1x16x32xf32> to vector<16x32xf32>
    %251 = tpu.concatenate %180, %248 in 0 : vector<15x32xf32>, vector<16x32xf32> -> vector<31x32xf32>
    %252 = vector.extract_strided_slice %250 {offsets = [0, 0], sizes = [1, 32], strides = [1, 1]} : vector<16x32xf32> to vector<1x32xf32>
    %253 = vector.shape_cast %252 : vector<1x32xf32> to vector<32xf32>
    %254 = vector.shape_cast %253 : vector<32xf32> to vector<1x32xf32>
    %255 = vector.broadcast %254 : vector<1x32xf32> to vector<16x32xf32>
    %256 = arith.mulf %255, %248 : vector<16x32xf32>
    %257 = vector.extract_strided_slice %250 {offsets = [1, 0], sizes = [1, 32], strides = [1, 1]} : vector<16x32xf32> to vector<1x32xf32>
    %258 = vector.shape_cast %257 : vector<1x32xf32> to vector<32xf32>
    %259 = vector.shape_cast %258 : vector<32xf32> to vector<1x32xf32>
    %260 = vector.extract_strided_slice %251 {offsets = [14, 0], sizes = [16, 32], strides = [1, 1]} : vector<31x32xf32> to vector<16x32xf32>
    %261 = vector.broadcast %259 : vector<1x32xf32> to vector<16x32xf32>
    %262 = arith.mulf %261, %260 : vector<16x32xf32>
    %263 = arith.addf %256, %262 : vector<16x32xf32>
    %264 = vector.extract_strided_slice %250 {offsets = [2, 0], sizes = [1, 32], strides = [1, 1]} : vector<16x32xf32> to vector<1x32xf32>
    %265 = vector.shape_cast %264 : vector<1x32xf32> to vector<32xf32>
    %266 = vector.shape_cast %265 : vector<32xf32> to vector<1x32xf32>
    %267 = vector.extract_strided_slice %251 {offsets = [13, 0], sizes = [16, 32], strides = [1, 1]} : vector<31x32xf32> to vector<16x32xf32>
    %268 = vector.broadcast %266 : vector<1x32xf32> to vector<16x32xf32>
    %269 = arith.mulf %268, %267 : vector<16x32xf32>
    %270 = arith.addf %263, %269 : vector<16x32xf32>
    %271 = vector.extract_strided_slice %250 {offsets = [3, 0], sizes = [1, 32], strides = [1, 1]} : vector<16x32xf32> to vector<1x32xf32>
    %272 = vector.shape_cast %271 : vector<1x32xf32> to vector<32xf32>
    %273 = vector.shape_cast %272 : vector<32xf32> to vector<1x32xf32>
    %274 = vector.extract_strided_slice %251 {offsets = [12, 0], sizes = [16, 32], strides = [1, 1]} : vector<31x32xf32> to vector<16x32xf32>
    %275 = vector.broadcast %273 : vector<1x32xf32> to vector<16x32xf32>
    %276 = arith.mulf %275, %274 : vector<16x32xf32>
    %277 = arith.addf %270, %276 : vector<16x32xf32>
    %278 = vector.extract_strided_slice %250 {offsets = [4, 0], sizes = [1, 32], strides = [1, 1]} : vector<16x32xf32> to vector<1x32xf32>
    %279 = vector.shape_cast %278 : vector<1x32xf32> to vector<32xf32>
    %280 = vector.shape_cast %279 : vector<32xf32> to vector<1x32xf32>
    %281 = vector.extract_strided_slice %251 {offsets = [11, 0], sizes = [16, 32], strides = [1, 1]} : vector<31x32xf32> to vector<16x32xf32>
    %282 = vector.broadcast %280 : vector<1x32xf32> to vector<16x32xf32>
    %283 = arith.mulf %282, %281 : vector<16x32xf32>
    %284 = arith.addf %277, %283 : vector<16x32xf32>
    %285 = vector.extract_strided_slice %250 {offsets = [5, 0], sizes = [1, 32], strides = [1, 1]} : vector<16x32xf32> to vector<1x32xf32>
    %286 = vector.shape_cast %285 : vector<1x32xf32> to vector<32xf32>
    %287 = vector.shape_cast %286 : vector<32xf32> to vector<1x32xf32>
    %288 = vector.extract_strided_slice %251 {offsets = [10, 0], sizes = [16, 32], strides = [1, 1]} : vector<31x32xf32> to vector<16x32xf32>
    %289 = vector.broadcast %287 : vector<1x32xf32> to vector<16x32xf32>
    %290 = arith.mulf %289, %288 : vector<16x32xf32>
    %291 = arith.addf %284, %290 : vector<16x32xf32>
    %292 = vector.extract_strided_slice %250 {offsets = [6, 0], sizes = [1, 32], strides = [1, 1]} : vector<16x32xf32> to vector<1x32xf32>
    %293 = vector.shape_cast %292 : vector<1x32xf32> to vector<32xf32>
    %294 = vector.shape_cast %293 : vector<32xf32> to vector<1x32xf32>
    %295 = vector.extract_strided_slice %251 {offsets = [9, 0], sizes = [16, 32], strides = [1, 1]} : vector<31x32xf32> to vector<16x32xf32>
    %296 = vector.broadcast %294 : vector<1x32xf32> to vector<16x32xf32>
    %297 = arith.mulf %296, %295 : vector<16x32xf32>
    %298 = arith.addf %291, %297 : vector<16x32xf32>
    %299 = vector.extract_strided_slice %250 {offsets = [7, 0], sizes = [1, 32], strides = [1, 1]} : vector<16x32xf32> to vector<1x32xf32>
    %300 = vector.shape_cast %299 : vector<1x32xf32> to vector<32xf32>
    %301 = vector.shape_cast %300 : vector<32xf32> to vector<1x32xf32>
    %302 = vector.extract_strided_slice %251 {offsets = [8, 0], sizes = [16, 32], strides = [1, 1]} : vector<31x32xf32> to vector<16x32xf32>
    %303 = vector.broadcast %301 : vector<1x32xf32> to vector<16x32xf32>
    %304 = arith.mulf %303, %302 : vector<16x32xf32>
    %305 = arith.addf %298, %304 : vector<16x32xf32>
    %306 = vector.extract_strided_slice %250 {offsets = [8, 0], sizes = [1, 32], strides = [1, 1]} : vector<16x32xf32> to vector<1x32xf32>
    %307 = vector.shape_cast %306 : vector<1x32xf32> to vector<32xf32>
    %308 = vector.shape_cast %307 : vector<32xf32> to vector<1x32xf32>
    %309 = vector.extract_strided_slice %251 {offsets = [7, 0], sizes = [16, 32], strides = [1, 1]} : vector<31x32xf32> to vector<16x32xf32>
    %310 = vector.broadcast %308 : vector<1x32xf32> to vector<16x32xf32>
    %311 = arith.mulf %310, %309 : vector<16x32xf32>
    %312 = arith.addf %305, %311 : vector<16x32xf32>
    %313 = vector.extract_strided_slice %250 {offsets = [9, 0], sizes = [1, 32], strides = [1, 1]} : vector<16x32xf32> to vector<1x32xf32>
    %314 = vector.shape_cast %313 : vector<1x32xf32> to vector<32xf32>
    %315 = vector.shape_cast %314 : vector<32xf32> to vector<1x32xf32>
    %316 = vector.extract_strided_slice %251 {offsets = [6, 0], sizes = [16, 32], strides = [1, 1]} : vector<31x32xf32> to vector<16x32xf32>
    %317 = vector.broadcast %315 : vector<1x32xf32> to vector<16x32xf32>
    %318 = arith.mulf %317, %316 : vector<16x32xf32>
    %319 = arith.addf %312, %318 : vector<16x32xf32>
    %320 = vector.extract_strided_slice %250 {offsets = [10, 0], sizes = [1, 32], strides = [1, 1]} : vector<16x32xf32> to vector<1x32xf32>
    %321 = vector.shape_cast %320 : vector<1x32xf32> to vector<32xf32>
    %322 = vector.shape_cast %321 : vector<32xf32> to vector<1x32xf32>
    %323 = vector.extract_strided_slice %251 {offsets = [5, 0], sizes = [16, 32], strides = [1, 1]} : vector<31x32xf32> to vector<16x32xf32>
    %324 = vector.broadcast %322 : vector<1x32xf32> to vector<16x32xf32>
    %325 = arith.mulf %324, %323 : vector<16x32xf32>
    %326 = arith.addf %319, %325 : vector<16x32xf32>
    %327 = vector.extract_strided_slice %250 {offsets = [11, 0], sizes = [1, 32], strides = [1, 1]} : vector<16x32xf32> to vector<1x32xf32>
    %328 = vector.shape_cast %327 : vector<1x32xf32> to vector<32xf32>
    %329 = vector.shape_cast %328 : vector<32xf32> to vector<1x32xf32>
    %330 = vector.extract_strided_slice %251 {offsets = [4, 0], sizes = [16, 32], strides = [1, 1]} : vector<31x32xf32> to vector<16x32xf32>
    %331 = vector.broadcast %329 : vector<1x32xf32> to vector<16x32xf32>
    %332 = arith.mulf %331, %330 : vector<16x32xf32>
    %333 = arith.addf %326, %332 : vector<16x32xf32>
    %334 = vector.extract_strided_slice %250 {offsets = [12, 0], sizes = [1, 32], strides = [1, 1]} : vector<16x32xf32> to vector<1x32xf32>
    %335 = vector.shape_cast %334 : vector<1x32xf32> to vector<32xf32>
    %336 = vector.shape_cast %335 : vector<32xf32> to vector<1x32xf32>
    %337 = vector.extract_strided_slice %251 {offsets = [3, 0], sizes = [16, 32], strides = [1, 1]} : vector<31x32xf32> to vector<16x32xf32>
    %338 = vector.broadcast %336 : vector<1x32xf32> to vector<16x32xf32>
    %339 = arith.mulf %338, %337 : vector<16x32xf32>
    %340 = arith.addf %333, %339 : vector<16x32xf32>
    %341 = vector.extract_strided_slice %250 {offsets = [13, 0], sizes = [1, 32], strides = [1, 1]} : vector<16x32xf32> to vector<1x32xf32>
    %342 = vector.shape_cast %341 : vector<1x32xf32> to vector<32xf32>
    %343 = vector.shape_cast %342 : vector<32xf32> to vector<1x32xf32>
    %344 = vector.extract_strided_slice %251 {offsets = [2, 0], sizes = [16, 32], strides = [1, 1]} : vector<31x32xf32> to vector<16x32xf32>
    %345 = vector.broadcast %343 : vector<1x32xf32> to vector<16x32xf32>
    %346 = arith.mulf %345, %344 : vector<16x32xf32>
    %347 = arith.addf %340, %346 : vector<16x32xf32>
    %348 = vector.extract_strided_slice %250 {offsets = [14, 0], sizes = [1, 32], strides = [1, 1]} : vector<16x32xf32> to vector<1x32xf32>
    %349 = vector.shape_cast %348 : vector<1x32xf32> to vector<32xf32>
    %350 = vector.shape_cast %349 : vector<32xf32> to vector<1x32xf32>
    %351 = vector.extract_strided_slice %251 {offsets = [1, 0], sizes = [16, 32], strides = [1, 1]} : vector<31x32xf32> to vector<16x32xf32>
    %352 = vector.broadcast %350 : vector<1x32xf32> to vector<16x32xf32>
    %353 = arith.mulf %352, %351 : vector<16x32xf32>
    %354 = arith.addf %347, %353 : vector<16x32xf32>
    %355 = vector.extract_strided_slice %250 {offsets = [15, 0], sizes = [1, 32], strides = [1, 1]} : vector<16x32xf32> to vector<1x32xf32>
    %356 = vector.shape_cast %355 : vector<1x32xf32> to vector<32xf32>
    %357 = vector.shape_cast %356 : vector<32xf32> to vector<1x32xf32>
    %358 = vector.extract_strided_slice %251 {offsets = [0, 0], sizes = [16, 32], strides = [1, 1]} : vector<31x32xf32> to vector<16x32xf32>
    %359 = vector.broadcast %357 : vector<1x32xf32> to vector<16x32xf32>
    %360 = arith.mulf %359, %358 : vector<16x32xf32>
    %361 = arith.addf %354, %360 : vector<16x32xf32>
    %c0_28 = arith.constant 0 : index
    %c0_29 = arith.constant 0 : index
    %362 = vector.load %arg10[%c0_28, %c0_29] : memref<2x32xf32, #tpu.memory_space<vmem>>, vector<1x32xf32>
    %363 = vector.shape_cast %362 : vector<1x32xf32> to vector<32xf32>
    %364 = vector.shape_cast %363 : vector<32xf32> to vector<1x32xf32>
    %365 = vector.broadcast %364 : vector<1x32xf32> to vector<16x32xf32>
    %366 = arith.mulf %248, %365 : vector<16x32xf32>
    %367 = arith.addf %361, %366 : vector<16x32xf32>
    %368 = arith.mulf %367, %245 : vector<16x32xf32>
    %c0_30 = arith.constant 0 : index
    %c0_31 = arith.constant 0 : index
    %c0_32 = arith.constant 0 : index
    %369 = vector.load %arg11[%c0_30, %c0_31, %c0_32] : memref<2x32x32xbf16, #tpu.memory_space<vmem>>, vector<1x32x32xbf16>
    %370 = vector.shape_cast %369 : vector<1x32x32xbf16> to vector<32x32xbf16>
    %c0_33 = arith.constant 0 : index
    %c0_34 = arith.constant 0 : index
    %371 = vector.load %arg12[%c0_33, %c0_34] : memref<2x32xf32, #tpu.memory_space<vmem>>, vector<1x32xf32>
    %372 = vector.shape_cast %371 : vector<1x32xf32> to vector<32xf32>
    %373 = arith.truncf %368 : vector<16x32xf32> to vector<16x32xbf16>
    %cst_35 = arith.constant dense<0.000000e+00> : vector<16x32xf32>
    %374 = tpu.matmul %373, %370, %cst_35 {dimension_numbers = #tpu.dot_dimension_numbers<[1], [0], [0], [1], [0, 0, 1, 1], [], []>} : vector<16x32xbf16>, vector<32x32xbf16>, vector<16x32xf32> -> vector<16x32xf32>
    %375 = vector.shape_cast %372 : vector<32xf32> to vector<1x32xf32>
    %376 = vector.broadcast %375 : vector<1x32xf32> to vector<16x32xf32>
    %377 = arith.addf %374, %376 : vector<16x32xf32>
    %378 = arith.addf %377, %178 : vector<16x32xf32>
    %c0_36 = arith.constant 0 : index
    %c0_37 = arith.constant 0 : index
    %379 = vector.load %arg13[%c0_36, %c0_37] : memref<2x32xf32, #tpu.memory_space<vmem>>, vector<1x32xf32>
    %380 = vector.shape_cast %379 : vector<1x32xf32> to vector<32xf32>
    %c0_38 = arith.constant 0 : index
    %c0_39 = arith.constant 0 : index
    %381 = vector.load %arg14[%c0_38, %c0_39] : memref<2x32xf32, #tpu.memory_space<vmem>>, vector<1x32xf32>
    %382 = vector.shape_cast %381 : vector<1x32xf32> to vector<32xf32>
    %cst_40 = arith.constant dense<0.000000e+00> : vector<16xf32>
    %383 = vector.multi_reduction <add>, %378, %cst_40 [1] : vector<16x32xf32> to vector<16xf32>
    %384 = vector.shape_cast %383 : vector<16xf32> to vector<16x1xf32>
    %385 = arith.mulf %378, %378 : vector<16x32xf32>
    %cst_41 = arith.constant dense<0.000000e+00> : vector<16xf32>
    %386 = vector.multi_reduction <add>, %385, %cst_41 [1] : vector<16x32xf32> to vector<16xf32>
    %387 = vector.shape_cast %386 : vector<16xf32> to vector<16x1xf32>
    %cst_42 = arith.constant 3.125000e-02 : f32
    %388 = vector.broadcast %cst_42 : f32 to vector<16x1xf32>
    %389 = arith.mulf %384, %388 : vector<16x1xf32>
    %cst_43 = arith.constant 3.125000e-02 : f32
    %390 = vector.broadcast %cst_43 : f32 to vector<16x1xf32>
    %391 = arith.mulf %387, %390 : vector<16x1xf32>
    %392 = arith.mulf %389, %389 : vector<16x1xf32>
    %393 = arith.subf %391, %392 : vector<16x1xf32>
    %394 = vector.broadcast %389 : vector<16x1xf32> to vector<16x32xf32>
    %395 = arith.subf %378, %394 : vector<16x32xf32>
    %cst_44 = arith.constant 9.99999974E-6 : f32
    %396 = vector.broadcast %cst_44 : f32 to vector<16x1xf32>
    %397 = arith.addf %393, %396 : vector<16x1xf32>
    %398 = math.rsqrt %397 : vector<16x1xf32>
    %399 = vector.broadcast %398 : vector<16x1xf32> to vector<16x32xf32>
    %400 = arith.mulf %395, %399 : vector<16x32xf32>
    %401 = vector.shape_cast %380 : vector<32xf32> to vector<1x32xf32>
    %402 = vector.broadcast %401 : vector<1x32xf32> to vector<16x32xf32>
    %403 = arith.mulf %400, %402 : vector<16x32xf32>
    %404 = vector.shape_cast %382 : vector<32xf32> to vector<1x32xf32>
    %405 = vector.broadcast %404 : vector<1x32xf32> to vector<16x32xf32>
    %406 = arith.addf %403, %405 : vector<16x32xf32>
    %c0_45 = arith.constant 0 : index
    %c0_46 = arith.constant 0 : index
    %c0_47 = arith.constant 0 : index
    %407 = vector.load %arg15[%c0_45, %c0_46, %c0_47] : memref<2x32x128xbf16, #tpu.memory_space<vmem>>, vector<1x32x128xbf16>
    %408 = vector.shape_cast %407 : vector<1x32x128xbf16> to vector<32x128xbf16>
    %c0_48 = arith.constant 0 : index
    %c0_49 = arith.constant 0 : index
    %409 = vector.load %arg16[%c0_48, %c0_49] : memref<2x128xf32, #tpu.memory_space<vmem>>, vector<1x128xf32>
    %410 = vector.shape_cast %409 : vector<1x128xf32> to vector<128xf32>
    %411 = arith.truncf %406 : vector<16x32xf32> to vector<16x32xbf16>
    %cst_50 = arith.constant dense<0.000000e+00> : vector<16x128xf32>
    %412 = tpu.matmul %411, %408, %cst_50 {dimension_numbers = #tpu.dot_dimension_numbers<[1], [0], [0], [1], [0, 0, 1, 1], [], []>} : vector<16x32xbf16>, vector<32x128xbf16>, vector<16x128xf32> -> vector<16x128xf32>
    %413 = vector.shape_cast %410 : vector<128xf32> to vector<1x128xf32>
    %414 = vector.broadcast %413 : vector<1x128xf32> to vector<16x128xf32>
    %415 = arith.addf %412, %414 : vector<16x128xf32>
    %cst_51 = arith.constant 5.000000e-01 : f32
    %416 = vector.broadcast %cst_51 : f32 to vector<16x128xf32>
    %417 = arith.mulf %416, %415 : vector<16x128xf32>
    %418 = arith.mulf %415, %415 : vector<16x128xf32>
    %419 = arith.mulf %418, %415 : vector<16x128xf32>
    %cst_52 = arith.constant 4.471500e-02 : f32
    %420 = vector.broadcast %cst_52 : f32 to vector<16x128xf32>
    %421 = arith.mulf %420, %419 : vector<16x128xf32>
    %422 = arith.addf %415, %421 : vector<16x128xf32>
    %cst_53 = arith.constant 0.797884583 : f32
    %423 = vector.broadcast %cst_53 : f32 to vector<16x128xf32>
    %424 = arith.mulf %423, %422 : vector<16x128xf32>
    %425 = math.tanh %424 : vector<16x128xf32>
    %cst_54 = arith.constant 1.000000e+00 : f32
    %426 = vector.broadcast %cst_54 : f32 to vector<16x128xf32>
    %427 = arith.addf %426, %425 : vector<16x128xf32>
    %428 = arith.mulf %417, %427 : vector<16x128xf32>
    %c0_55 = arith.constant 0 : index
    %c0_56 = arith.constant 0 : index
    %c0_57 = arith.constant 0 : index
    %429 = vector.load %arg17[%c0_55, %c0_56, %c0_57] : memref<2x128x32xbf16, #tpu.memory_space<vmem>>, vector<1x128x32xbf16>
    %430 = vector.shape_cast %429 : vector<1x128x32xbf16> to vector<128x32xbf16>
    %c0_58 = arith.constant 0 : index
    %c0_59 = arith.constant 0 : index
    %431 = vector.load %arg18[%c0_58, %c0_59] : memref<2x32xf32, #tpu.memory_space<vmem>>, vector<1x32xf32>
    %432 = vector.shape_cast %431 : vector<1x32xf32> to vector<32xf32>
    %433 = arith.truncf %428 : vector<16x128xf32> to vector<16x128xbf16>
    %cst_60 = arith.constant dense<0.000000e+00> : vector<16x32xf32>
    %434 = tpu.matmul %433, %430, %cst_60 {dimension_numbers = #tpu.dot_dimension_numbers<[1], [0], [0], [1], [0, 0, 1, 1], [], []>} : vector<16x128xbf16>, vector<128x32xbf16>, vector<16x32xf32> -> vector<16x32xf32>
    %435 = vector.shape_cast %432 : vector<32xf32> to vector<1x32xf32>
    %436 = vector.broadcast %435 : vector<1x32xf32> to vector<16x32xf32>
    %437 = arith.addf %434, %436 : vector<16x32xf32>
    %438 = arith.addf %437, %378 : vector<16x32xf32>
    %c1 = arith.constant 1 : index
    %c0_61 = arith.constant 0 : index
    %439 = vector.load %arg3[%c1, %c0_61] : memref<2x32xf32, #tpu.memory_space<vmem>>, vector<1x32xf32>
    %440 = vector.shape_cast %439 : vector<1x32xf32> to vector<32xf32>
    %c1_62 = arith.constant 1 : index
    %c0_63 = arith.constant 0 : index
    %441 = vector.load %arg4[%c1_62, %c0_63] : memref<2x32xf32, #tpu.memory_space<vmem>>, vector<1x32xf32>
    %442 = vector.shape_cast %441 : vector<1x32xf32> to vector<32xf32>
    %cst_64 = arith.constant dense<0.000000e+00> : vector<16xf32>
    %443 = vector.multi_reduction <add>, %438, %cst_64 [1] : vector<16x32xf32> to vector<16xf32>
    %444 = vector.shape_cast %443 : vector<16xf32> to vector<16x1xf32>
    %445 = arith.mulf %438, %438 : vector<16x32xf32>
    %cst_65 = arith.constant dense<0.000000e+00> : vector<16xf32>
    %446 = vector.multi_reduction <add>, %445, %cst_65 [1] : vector<16x32xf32> to vector<16xf32>
    %447 = vector.shape_cast %446 : vector<16xf32> to vector<16x1xf32>
    %cst_66 = arith.constant 3.125000e-02 : f32
    %448 = vector.broadcast %cst_66 : f32 to vector<16x1xf32>
    %449 = arith.mulf %444, %448 : vector<16x1xf32>
    %cst_67 = arith.constant 3.125000e-02 : f32
    %450 = vector.broadcast %cst_67 : f32 to vector<16x1xf32>
    %451 = arith.mulf %447, %450 : vector<16x1xf32>
    %452 = arith.mulf %449, %449 : vector<16x1xf32>
    %453 = arith.subf %451, %452 : vector<16x1xf32>
    %454 = vector.broadcast %449 : vector<16x1xf32> to vector<16x32xf32>
    %455 = arith.subf %438, %454 : vector<16x32xf32>
    %cst_68 = arith.constant 9.99999974E-6 : f32
    %456 = vector.broadcast %cst_68 : f32 to vector<16x1xf32>
    %457 = arith.addf %453, %456 : vector<16x1xf32>
    %458 = math.rsqrt %457 : vector<16x1xf32>
    %459 = vector.broadcast %458 : vector<16x1xf32> to vector<16x32xf32>
    %460 = arith.mulf %455, %459 : vector<16x32xf32>
    %461 = vector.shape_cast %440 : vector<32xf32> to vector<1x32xf32>
    %462 = vector.broadcast %461 : vector<1x32xf32> to vector<16x32xf32>
    %463 = arith.mulf %460, %462 : vector<16x32xf32>
    %464 = vector.shape_cast %442 : vector<32xf32> to vector<1x32xf32>
    %465 = vector.broadcast %464 : vector<1x32xf32> to vector<16x32xf32>
    %466 = arith.addf %463, %465 : vector<16x32xf32>
    %c1_69 = arith.constant 1 : index
    %c0_70 = arith.constant 0 : index
    %c0_71 = arith.constant 0 : index
    %467 = vector.load %arg5[%c1_69, %c0_70, %c0_71] : memref<2x32x128xbf16, #tpu.memory_space<vmem>>, vector<1x32x128xbf16>
    %468 = vector.shape_cast %467 : vector<1x32x128xbf16> to vector<32x128xbf16>
    %c1_72 = arith.constant 1 : index
    %c0_73 = arith.constant 0 : index
    %469 = vector.load %arg6[%c1_72, %c0_73] : memref<2x128xf32, #tpu.memory_space<vmem>>, vector<1x128xf32>
    %470 = vector.shape_cast %469 : vector<1x128xf32> to vector<128xf32>
    %471 = arith.truncf %466 : vector<16x32xf32> to vector<16x32xbf16>
    %cst_74 = arith.constant dense<0.000000e+00> : vector<16x128xf32>
    %472 = tpu.matmul %471, %468, %cst_74 {dimension_numbers = #tpu.dot_dimension_numbers<[1], [0], [0], [1], [0, 0, 1, 1], [], []>} : vector<16x32xbf16>, vector<32x128xbf16>, vector<16x128xf32> -> vector<16x128xf32>
    %473 = vector.shape_cast %470 : vector<128xf32> to vector<1x128xf32>
    %474 = vector.broadcast %473 : vector<1x128xf32> to vector<16x128xf32>
    %475 = arith.addf %472, %474 : vector<16x128xf32>
    %c1_75 = arith.constant 1 : index
    %c0_76 = arith.constant 0 : index
    %c0_77 = arith.constant 0 : index
    %476 = vector.load %arg7[%c1_75, %c0_76, %c0_77] : memref<2x3x128xf32, #tpu.memory_space<vmem>>, vector<1x3x128xf32>
    %477 = vector.shape_cast %476 : vector<1x3x128xf32> to vector<3x128xf32>
    %478 = tpu.concatenate %179, %475 in 0 : vector<2x128xf32>, vector<16x128xf32> -> vector<18x128xf32>
    %479 = vector.extract_strided_slice %477 {offsets = [0, 0], sizes = [1, 128], strides = [1, 1]} : vector<3x128xf32> to vector<1x128xf32>
    %480 = vector.shape_cast %479 : vector<1x128xf32> to vector<128xf32>
    %481 = vector.shape_cast %480 : vector<128xf32> to vector<1x128xf32>
    %482 = vector.broadcast %481 : vector<1x128xf32> to vector<16x128xf32>
    %483 = arith.mulf %482, %475 : vector<16x128xf32>
    %484 = vector.extract_strided_slice %477 {offsets = [1, 0], sizes = [1, 128], strides = [1, 1]} : vector<3x128xf32> to vector<1x128xf32>
    %485 = vector.shape_cast %484 : vector<1x128xf32> to vector<128xf32>
    %486 = vector.shape_cast %485 : vector<128xf32> to vector<1x128xf32>
    %487 = vector.extract_strided_slice %478 {offsets = [1, 0], sizes = [16, 128], strides = [1, 1]} : vector<18x128xf32> to vector<16x128xf32>
    %488 = vector.broadcast %486 : vector<1x128xf32> to vector<16x128xf32>
    %489 = arith.mulf %488, %487 : vector<16x128xf32>
    %490 = arith.addf %483, %489 : vector<16x128xf32>
    %491 = vector.extract_strided_slice %477 {offsets = [2, 0], sizes = [1, 128], strides = [1, 1]} : vector<3x128xf32> to vector<1x128xf32>
    %492 = vector.shape_cast %491 : vector<1x128xf32> to vector<128xf32>
    %493 = vector.shape_cast %492 : vector<128xf32> to vector<1x128xf32>
    %494 = vector.extract_strided_slice %478 {offsets = [0, 0], sizes = [16, 128], strides = [1, 1]} : vector<18x128xf32> to vector<16x128xf32>
    %495 = vector.broadcast %493 : vector<1x128xf32> to vector<16x128xf32>
    %496 = arith.mulf %495, %494 : vector<16x128xf32>
    %497 = arith.addf %490, %496 : vector<16x128xf32>
    %c1_78 = arith.constant 1 : index
    %c0_79 = arith.constant 0 : index
    %498 = vector.load %arg8[%c1_78, %c0_79] : memref<2x128xf32, #tpu.memory_space<vmem>>, vector<1x128xf32>
    %499 = vector.shape_cast %498 : vector<1x128xf32> to vector<128xf32>
    %500 = vector.shape_cast %499 : vector<128xf32> to vector<1x128xf32>
    %501 = vector.broadcast %500 : vector<1x128xf32> to vector<16x128xf32>
    %502 = arith.addf %497, %501 : vector<16x128xf32>
    %503 = vector.extract_strided_slice %502 {offsets = [0, 0], sizes = [16, 32], strides = [1, 1]} : vector<16x128xf32> to vector<16x32xf32>
    %504 = vector.extract_strided_slice %502 {offsets = [0, 32], sizes = [16, 32], strides = [1, 1]} : vector<16x128xf32> to vector<16x32xf32>
    %505 = vector.extract_strided_slice %502 {offsets = [0, 64], sizes = [16, 32], strides = [1, 1]} : vector<16x128xf32> to vector<16x32xf32>
    %506 = arith.mulf %505, %504 : vector<16x32xf32>
    %c1_80 = arith.constant 1 : index
    %c0_81 = arith.constant 0 : index
    %c0_82 = arith.constant 0 : index
    %507 = vector.load %arg9[%c1_80, %c0_81, %c0_82] : memref<2x16x32xf32, #tpu.memory_space<vmem>>, vector<1x16x32xf32>
    %508 = vector.shape_cast %507 : vector<1x16x32xf32> to vector<16x32xf32>
    %509 = tpu.concatenate %180, %506 in 0 : vector<15x32xf32>, vector<16x32xf32> -> vector<31x32xf32>
    %510 = vector.extract_strided_slice %508 {offsets = [0, 0], sizes = [1, 32], strides = [1, 1]} : vector<16x32xf32> to vector<1x32xf32>
    %511 = vector.shape_cast %510 : vector<1x32xf32> to vector<32xf32>
    %512 = vector.shape_cast %511 : vector<32xf32> to vector<1x32xf32>
    %513 = vector.broadcast %512 : vector<1x32xf32> to vector<16x32xf32>
    %514 = arith.mulf %513, %506 : vector<16x32xf32>
    %515 = vector.extract_strided_slice %508 {offsets = [1, 0], sizes = [1, 32], strides = [1, 1]} : vector<16x32xf32> to vector<1x32xf32>
    %516 = vector.shape_cast %515 : vector<1x32xf32> to vector<32xf32>
    %517 = vector.shape_cast %516 : vector<32xf32> to vector<1x32xf32>
    %518 = vector.extract_strided_slice %509 {offsets = [14, 0], sizes = [16, 32], strides = [1, 1]} : vector<31x32xf32> to vector<16x32xf32>
    %519 = vector.broadcast %517 : vector<1x32xf32> to vector<16x32xf32>
    %520 = arith.mulf %519, %518 : vector<16x32xf32>
    %521 = arith.addf %514, %520 : vector<16x32xf32>
    %522 = vector.extract_strided_slice %508 {offsets = [2, 0], sizes = [1, 32], strides = [1, 1]} : vector<16x32xf32> to vector<1x32xf32>
    %523 = vector.shape_cast %522 : vector<1x32xf32> to vector<32xf32>
    %524 = vector.shape_cast %523 : vector<32xf32> to vector<1x32xf32>
    %525 = vector.extract_strided_slice %509 {offsets = [13, 0], sizes = [16, 32], strides = [1, 1]} : vector<31x32xf32> to vector<16x32xf32>
    %526 = vector.broadcast %524 : vector<1x32xf32> to vector<16x32xf32>
    %527 = arith.mulf %526, %525 : vector<16x32xf32>
    %528 = arith.addf %521, %527 : vector<16x32xf32>
    %529 = vector.extract_strided_slice %508 {offsets = [3, 0], sizes = [1, 32], strides = [1, 1]} : vector<16x32xf32> to vector<1x32xf32>
    %530 = vector.shape_cast %529 : vector<1x32xf32> to vector<32xf32>
    %531 = vector.shape_cast %530 : vector<32xf32> to vector<1x32xf32>
    %532 = vector.extract_strided_slice %509 {offsets = [12, 0], sizes = [16, 32], strides = [1, 1]} : vector<31x32xf32> to vector<16x32xf32>
    %533 = vector.broadcast %531 : vector<1x32xf32> to vector<16x32xf32>
    %534 = arith.mulf %533, %532 : vector<16x32xf32>
    %535 = arith.addf %528, %534 : vector<16x32xf32>
    %536 = vector.extract_strided_slice %508 {offsets = [4, 0], sizes = [1, 32], strides = [1, 1]} : vector<16x32xf32> to vector<1x32xf32>
    %537 = vector.shape_cast %536 : vector<1x32xf32> to vector<32xf32>
    %538 = vector.shape_cast %537 : vector<32xf32> to vector<1x32xf32>
    %539 = vector.extract_strided_slice %509 {offsets = [11, 0], sizes = [16, 32], strides = [1, 1]} : vector<31x32xf32> to vector<16x32xf32>
    %540 = vector.broadcast %538 : vector<1x32xf32> to vector<16x32xf32>
    %541 = arith.mulf %540, %539 : vector<16x32xf32>
    %542 = arith.addf %535, %541 : vector<16x32xf32>
    %543 = vector.extract_strided_slice %508 {offsets = [5, 0], sizes = [1, 32], strides = [1, 1]} : vector<16x32xf32> to vector<1x32xf32>
    %544 = vector.shape_cast %543 : vector<1x32xf32> to vector<32xf32>
    %545 = vector.shape_cast %544 : vector<32xf32> to vector<1x32xf32>
    %546 = vector.extract_strided_slice %509 {offsets = [10, 0], sizes = [16, 32], strides = [1, 1]} : vector<31x32xf32> to vector<16x32xf32>
    %547 = vector.broadcast %545 : vector<1x32xf32> to vector<16x32xf32>
    %548 = arith.mulf %547, %546 : vector<16x32xf32>
    %549 = arith.addf %542, %548 : vector<16x32xf32>
    %550 = vector.extract_strided_slice %508 {offsets = [6, 0], sizes = [1, 32], strides = [1, 1]} : vector<16x32xf32> to vector<1x32xf32>
    %551 = vector.shape_cast %550 : vector<1x32xf32> to vector<32xf32>
    %552 = vector.shape_cast %551 : vector<32xf32> to vector<1x32xf32>
    %553 = vector.extract_strided_slice %509 {offsets = [9, 0], sizes = [16, 32], strides = [1, 1]} : vector<31x32xf32> to vector<16x32xf32>
    %554 = vector.broadcast %552 : vector<1x32xf32> to vector<16x32xf32>
    %555 = arith.mulf %554, %553 : vector<16x32xf32>
    %556 = arith.addf %549, %555 : vector<16x32xf32>
    %557 = vector.extract_strided_slice %508 {offsets = [7, 0], sizes = [1, 32], strides = [1, 1]} : vector<16x32xf32> to vector<1x32xf32>
    %558 = vector.shape_cast %557 : vector<1x32xf32> to vector<32xf32>
    %559 = vector.shape_cast %558 : vector<32xf32> to vector<1x32xf32>
    %560 = vector.extract_strided_slice %509 {offsets = [8, 0], sizes = [16, 32], strides = [1, 1]} : vector<31x32xf32> to vector<16x32xf32>
    %561 = vector.broadcast %559 : vector<1x32xf32> to vector<16x32xf32>
    %562 = arith.mulf %561, %560 : vector<16x32xf32>
    %563 = arith.addf %556, %562 : vector<16x32xf32>
    %564 = vector.extract_strided_slice %508 {offsets = [8, 0], sizes = [1, 32], strides = [1, 1]} : vector<16x32xf32> to vector<1x32xf32>
    %565 = vector.shape_cast %564 : vector<1x32xf32> to vector<32xf32>
    %566 = vector.shape_cast %565 : vector<32xf32> to vector<1x32xf32>
    %567 = vector.extract_strided_slice %509 {offsets = [7, 0], sizes = [16, 32], strides = [1, 1]} : vector<31x32xf32> to vector<16x32xf32>
    %568 = vector.broadcast %566 : vector<1x32xf32> to vector<16x32xf32>
    %569 = arith.mulf %568, %567 : vector<16x32xf32>
    %570 = arith.addf %563, %569 : vector<16x32xf32>
    %571 = vector.extract_strided_slice %508 {offsets = [9, 0], sizes = [1, 32], strides = [1, 1]} : vector<16x32xf32> to vector<1x32xf32>
    %572 = vector.shape_cast %571 : vector<1x32xf32> to vector<32xf32>
    %573 = vector.shape_cast %572 : vector<32xf32> to vector<1x32xf32>
    %574 = vector.extract_strided_slice %509 {offsets = [6, 0], sizes = [16, 32], strides = [1, 1]} : vector<31x32xf32> to vector<16x32xf32>
    %575 = vector.broadcast %573 : vector<1x32xf32> to vector<16x32xf32>
    %576 = arith.mulf %575, %574 : vector<16x32xf32>
    %577 = arith.addf %570, %576 : vector<16x32xf32>
    %578 = vector.extract_strided_slice %508 {offsets = [10, 0], sizes = [1, 32], strides = [1, 1]} : vector<16x32xf32> to vector<1x32xf32>
    %579 = vector.shape_cast %578 : vector<1x32xf32> to vector<32xf32>
    %580 = vector.shape_cast %579 : vector<32xf32> to vector<1x32xf32>
    %581 = vector.extract_strided_slice %509 {offsets = [5, 0], sizes = [16, 32], strides = [1, 1]} : vector<31x32xf32> to vector<16x32xf32>
    %582 = vector.broadcast %580 : vector<1x32xf32> to vector<16x32xf32>
    %583 = arith.mulf %582, %581 : vector<16x32xf32>
    %584 = arith.addf %577, %583 : vector<16x32xf32>
    %585 = vector.extract_strided_slice %508 {offsets = [11, 0], sizes = [1, 32], strides = [1, 1]} : vector<16x32xf32> to vector<1x32xf32>
    %586 = vector.shape_cast %585 : vector<1x32xf32> to vector<32xf32>
    %587 = vector.shape_cast %586 : vector<32xf32> to vector<1x32xf32>
    %588 = vector.extract_strided_slice %509 {offsets = [4, 0], sizes = [16, 32], strides = [1, 1]} : vector<31x32xf32> to vector<16x32xf32>
    %589 = vector.broadcast %587 : vector<1x32xf32> to vector<16x32xf32>
    %590 = arith.mulf %589, %588 : vector<16x32xf32>
    %591 = arith.addf %584, %590 : vector<16x32xf32>
    %592 = vector.extract_strided_slice %508 {offsets = [12, 0], sizes = [1, 32], strides = [1, 1]} : vector<16x32xf32> to vector<1x32xf32>
    %593 = vector.shape_cast %592 : vector<1x32xf32> to vector<32xf32>
    %594 = vector.shape_cast %593 : vector<32xf32> to vector<1x32xf32>
    %595 = vector.extract_strided_slice %509 {offsets = [3, 0], sizes = [16, 32], strides = [1, 1]} : vector<31x32xf32> to vector<16x32xf32>
    %596 = vector.broadcast %594 : vector<1x32xf32> to vector<16x32xf32>
    %597 = arith.mulf %596, %595 : vector<16x32xf32>
    %598 = arith.addf %591, %597 : vector<16x32xf32>
    %599 = vector.extract_strided_slice %508 {offsets = [13, 0], sizes = [1, 32], strides = [1, 1]} : vector<16x32xf32> to vector<1x32xf32>
    %600 = vector.shape_cast %599 : vector<1x32xf32> to vector<32xf32>
    %601 = vector.shape_cast %600 : vector<32xf32> to vector<1x32xf32>
    %602 = vector.extract_strided_slice %509 {offsets = [2, 0], sizes = [16, 32], strides = [1, 1]} : vector<31x32xf32> to vector<16x32xf32>
    %603 = vector.broadcast %601 : vector<1x32xf32> to vector<16x32xf32>
    %604 = arith.mulf %603, %602 : vector<16x32xf32>
    %605 = arith.addf %598, %604 : vector<16x32xf32>
    %606 = vector.extract_strided_slice %508 {offsets = [14, 0], sizes = [1, 32], strides = [1, 1]} : vector<16x32xf32> to vector<1x32xf32>
    %607 = vector.shape_cast %606 : vector<1x32xf32> to vector<32xf32>
    %608 = vector.shape_cast %607 : vector<32xf32> to vector<1x32xf32>
    %609 = vector.extract_strided_slice %509 {offsets = [1, 0], sizes = [16, 32], strides = [1, 1]} : vector<31x32xf32> to vector<16x32xf32>
    %610 = vector.broadcast %608 : vector<1x32xf32> to vector<16x32xf32>
    %611 = arith.mulf %610, %609 : vector<16x32xf32>
    %612 = arith.addf %605, %611 : vector<16x32xf32>
    %613 = vector.extract_strided_slice %508 {offsets = [15, 0], sizes = [1, 32], strides = [1, 1]} : vector<16x32xf32> to vector<1x32xf32>
    %614 = vector.shape_cast %613 : vector<1x32xf32> to vector<32xf32>
    %615 = vector.shape_cast %614 : vector<32xf32> to vector<1x32xf32>
    %616 = vector.extract_strided_slice %509 {offsets = [0, 0], sizes = [16, 32], strides = [1, 1]} : vector<31x32xf32> to vector<16x32xf32>
    %617 = vector.broadcast %615 : vector<1x32xf32> to vector<16x32xf32>
    %618 = arith.mulf %617, %616 : vector<16x32xf32>
    %619 = arith.addf %612, %618 : vector<16x32xf32>
    %c1_83 = arith.constant 1 : index
    %c0_84 = arith.constant 0 : index
    %620 = vector.load %arg10[%c1_83, %c0_84] : memref<2x32xf32, #tpu.memory_space<vmem>>, vector<1x32xf32>
    %621 = vector.shape_cast %620 : vector<1x32xf32> to vector<32xf32>
    %622 = vector.shape_cast %621 : vector<32xf32> to vector<1x32xf32>
    %623 = vector.broadcast %622 : vector<1x32xf32> to vector<16x32xf32>
    %624 = arith.mulf %506, %623 : vector<16x32xf32>
    %625 = arith.addf %619, %624 : vector<16x32xf32>
    %626 = arith.mulf %625, %503 : vector<16x32xf32>
    %c1_85 = arith.constant 1 : index
    %c0_86 = arith.constant 0 : index
    %c0_87 = arith.constant 0 : index
    %627 = vector.load %arg11[%c1_85, %c0_86, %c0_87] : memref<2x32x32xbf16, #tpu.memory_space<vmem>>, vector<1x32x32xbf16>
    %628 = vector.shape_cast %627 : vector<1x32x32xbf16> to vector<32x32xbf16>
    %c1_88 = arith.constant 1 : index
    %c0_89 = arith.constant 0 : index
    %629 = vector.load %arg12[%c1_88, %c0_89] : memref<2x32xf32, #tpu.memory_space<vmem>>, vector<1x32xf32>
    %630 = vector.shape_cast %629 : vector<1x32xf32> to vector<32xf32>
    %631 = arith.truncf %626 : vector<16x32xf32> to vector<16x32xbf16>
    %cst_90 = arith.constant dense<0.000000e+00> : vector<16x32xf32>
    %632 = tpu.matmul %631, %628, %cst_90 {dimension_numbers = #tpu.dot_dimension_numbers<[1], [0], [0], [1], [0, 0, 1, 1], [], []>} : vector<16x32xbf16>, vector<32x32xbf16>, vector<16x32xf32> -> vector<16x32xf32>
    %633 = vector.shape_cast %630 : vector<32xf32> to vector<1x32xf32>
    %634 = vector.broadcast %633 : vector<1x32xf32> to vector<16x32xf32>
    %635 = arith.addf %632, %634 : vector<16x32xf32>
    %636 = arith.addf %635, %438 : vector<16x32xf32>
    %c1_91 = arith.constant 1 : index
    %c0_92 = arith.constant 0 : index
    %637 = vector.load %arg13[%c1_91, %c0_92] : memref<2x32xf32, #tpu.memory_space<vmem>>, vector<1x32xf32>
    %638 = vector.shape_cast %637 : vector<1x32xf32> to vector<32xf32>
    %c1_93 = arith.constant 1 : index
    %c0_94 = arith.constant 0 : index
    %639 = vector.load %arg14[%c1_93, %c0_94] : memref<2x32xf32, #tpu.memory_space<vmem>>, vector<1x32xf32>
    %640 = vector.shape_cast %639 : vector<1x32xf32> to vector<32xf32>
    %cst_95 = arith.constant dense<0.000000e+00> : vector<16xf32>
    %641 = vector.multi_reduction <add>, %636, %cst_95 [1] : vector<16x32xf32> to vector<16xf32>
    %642 = vector.shape_cast %641 : vector<16xf32> to vector<16x1xf32>
    %643 = arith.mulf %636, %636 : vector<16x32xf32>
    %cst_96 = arith.constant dense<0.000000e+00> : vector<16xf32>
    %644 = vector.multi_reduction <add>, %643, %cst_96 [1] : vector<16x32xf32> to vector<16xf32>
    %645 = vector.shape_cast %644 : vector<16xf32> to vector<16x1xf32>
    %cst_97 = arith.constant 3.125000e-02 : f32
    %646 = vector.broadcast %cst_97 : f32 to vector<16x1xf32>
    %647 = arith.mulf %642, %646 : vector<16x1xf32>
    %cst_98 = arith.constant 3.125000e-02 : f32
    %648 = vector.broadcast %cst_98 : f32 to vector<16x1xf32>
    %649 = arith.mulf %645, %648 : vector<16x1xf32>
    %650 = arith.mulf %647, %647 : vector<16x1xf32>
    %651 = arith.subf %649, %650 : vector<16x1xf32>
    %652 = vector.broadcast %647 : vector<16x1xf32> to vector<16x32xf32>
    %653 = arith.subf %636, %652 : vector<16x32xf32>
    %cst_99 = arith.constant 9.99999974E-6 : f32
    %654 = vector.broadcast %cst_99 : f32 to vector<16x1xf32>
    %655 = arith.addf %651, %654 : vector<16x1xf32>
    %656 = math.rsqrt %655 : vector<16x1xf32>
    %657 = vector.broadcast %656 : vector<16x1xf32> to vector<16x32xf32>
    %658 = arith.mulf %653, %657 : vector<16x32xf32>
    %659 = vector.shape_cast %638 : vector<32xf32> to vector<1x32xf32>
    %660 = vector.broadcast %659 : vector<1x32xf32> to vector<16x32xf32>
    %661 = arith.mulf %658, %660 : vector<16x32xf32>
    %662 = vector.shape_cast %640 : vector<32xf32> to vector<1x32xf32>
    %663 = vector.broadcast %662 : vector<1x32xf32> to vector<16x32xf32>
    %664 = arith.addf %661, %663 : vector<16x32xf32>
    %c1_100 = arith.constant 1 : index
    %c0_101 = arith.constant 0 : index
    %c0_102 = arith.constant 0 : index
    %665 = vector.load %arg15[%c1_100, %c0_101, %c0_102] : memref<2x32x128xbf16, #tpu.memory_space<vmem>>, vector<1x32x128xbf16>
    %666 = vector.shape_cast %665 : vector<1x32x128xbf16> to vector<32x128xbf16>
    %c1_103 = arith.constant 1 : index
    %c0_104 = arith.constant 0 : index
    %667 = vector.load %arg16[%c1_103, %c0_104] : memref<2x128xf32, #tpu.memory_space<vmem>>, vector<1x128xf32>
    %668 = vector.shape_cast %667 : vector<1x128xf32> to vector<128xf32>
    %669 = arith.truncf %664 : vector<16x32xf32> to vector<16x32xbf16>
    %cst_105 = arith.constant dense<0.000000e+00> : vector<16x128xf32>
    %670 = tpu.matmul %669, %666, %cst_105 {dimension_numbers = #tpu.dot_dimension_numbers<[1], [0], [0], [1], [0, 0, 1, 1], [], []>} : vector<16x32xbf16>, vector<32x128xbf16>, vector<16x128xf32> -> vector<16x128xf32>
    %671 = vector.shape_cast %668 : vector<128xf32> to vector<1x128xf32>
    %672 = vector.broadcast %671 : vector<1x128xf32> to vector<16x128xf32>
    %673 = arith.addf %670, %672 : vector<16x128xf32>
    %cst_106 = arith.constant 5.000000e-01 : f32
    %674 = vector.broadcast %cst_106 : f32 to vector<16x128xf32>
    %675 = arith.mulf %674, %673 : vector<16x128xf32>
    %676 = arith.mulf %673, %673 : vector<16x128xf32>
    %677 = arith.mulf %676, %673 : vector<16x128xf32>
    %cst_107 = arith.constant 4.471500e-02 : f32
    %678 = vector.broadcast %cst_107 : f32 to vector<16x128xf32>
    %679 = arith.mulf %678, %677 : vector<16x128xf32>
    %680 = arith.addf %673, %679 : vector<16x128xf32>
    %cst_108 = arith.constant 0.797884583 : f32
    %681 = vector.broadcast %cst_108 : f32 to vector<16x128xf32>
    %682 = arith.mulf %681, %680 : vector<16x128xf32>
    %683 = math.tanh %682 : vector<16x128xf32>
    %cst_109 = arith.constant 1.000000e+00 : f32
    %684 = vector.broadcast %cst_109 : f32 to vector<16x128xf32>
    %685 = arith.addf %684, %683 : vector<16x128xf32>
    %686 = arith.mulf %675, %685 : vector<16x128xf32>
    %c1_110 = arith.constant 1 : index
    %c0_111 = arith.constant 0 : index
    %c0_112 = arith.constant 0 : index
    %687 = vector.load %arg17[%c1_110, %c0_111, %c0_112] : memref<2x128x32xbf16, #tpu.memory_space<vmem>>, vector<1x128x32xbf16>
    %688 = vector.shape_cast %687 : vector<1x128x32xbf16> to vector<128x32xbf16>
    %c1_113 = arith.constant 1 : index
    %c0_114 = arith.constant 0 : index
    %689 = vector.load %arg18[%c1_113, %c0_114] : memref<2x32xf32, #tpu.memory_space<vmem>>, vector<1x32xf32>
    %690 = vector.shape_cast %689 : vector<1x32xf32> to vector<32xf32>
    %691 = arith.truncf %686 : vector<16x128xf32> to vector<16x128xbf16>
    %cst_115 = arith.constant dense<0.000000e+00> : vector<16x32xf32>
    %692 = tpu.matmul %691, %688, %cst_115 {dimension_numbers = #tpu.dot_dimension_numbers<[1], [0], [0], [1], [0, 0, 1, 1], [], []>} : vector<16x128xbf16>, vector<128x32xbf16>, vector<16x32xf32> -> vector<16x32xf32>
    %693 = vector.shape_cast %690 : vector<32xf32> to vector<1x32xf32>
    %694 = vector.broadcast %693 : vector<1x32xf32> to vector<16x32xf32>
    %695 = arith.addf %692, %694 : vector<16x32xf32>
    %696 = arith.addf %695, %636 : vector<16x32xf32>
    %c0_116 = arith.constant 0 : index
    %c0_117 = arith.constant 0 : index
    %697 = vector.load %arg19[%c0_116, %c0_117] : memref<1x32xf32, #tpu.memory_space<vmem>>, vector<1x32xf32>
    %698 = vector.shape_cast %697 : vector<1x32xf32> to vector<32xf32>
    %c0_118 = arith.constant 0 : index
    %c0_119 = arith.constant 0 : index
    %699 = vector.load %arg20[%c0_118, %c0_119] : memref<1x32xf32, #tpu.memory_space<vmem>>, vector<1x32xf32>
    %700 = vector.shape_cast %699 : vector<1x32xf32> to vector<32xf32>
    %cst_120 = arith.constant dense<0.000000e+00> : vector<16xf32>
    %701 = vector.multi_reduction <add>, %696, %cst_120 [1] : vector<16x32xf32> to vector<16xf32>
    %702 = vector.shape_cast %701 : vector<16xf32> to vector<16x1xf32>
    %703 = arith.mulf %696, %696 : vector<16x32xf32>
    %cst_121 = arith.constant dense<0.000000e+00> : vector<16xf32>
    %704 = vector.multi_reduction <add>, %703, %cst_121 [1] : vector<16x32xf32> to vector<16xf32>
    %705 = vector.shape_cast %704 : vector<16xf32> to vector<16x1xf32>
    %cst_122 = arith.constant 3.125000e-02 : f32
    %706 = vector.broadcast %cst_122 : f32 to vector<16x1xf32>
    %707 = arith.mulf %702, %706 : vector<16x1xf32>
    %cst_123 = arith.constant 3.125000e-02 : f32
    %708 = vector.broadcast %cst_123 : f32 to vector<16x1xf32>
    %709 = arith.mulf %705, %708 : vector<16x1xf32>
    %710 = arith.mulf %707, %707 : vector<16x1xf32>
    %711 = arith.subf %709, %710 : vector<16x1xf32>
    %712 = vector.broadcast %707 : vector<16x1xf32> to vector<16x32xf32>
    %713 = arith.subf %696, %712 : vector<16x32xf32>
    %cst_124 = arith.constant 9.99999974E-6 : f32
    %714 = vector.broadcast %cst_124 : f32 to vector<16x1xf32>
    %715 = arith.addf %711, %714 : vector<16x1xf32>
    %716 = math.rsqrt %715 : vector<16x1xf32>
    %717 = vector.broadcast %716 : vector<16x1xf32> to vector<16x32xf32>
    %718 = arith.mulf %713, %717 : vector<16x32xf32>
    %719 = vector.shape_cast %698 : vector<32xf32> to vector<1x32xf32>
    %720 = vector.broadcast %719 : vector<1x32xf32> to vector<16x32xf32>
    %721 = arith.mulf %718, %720 : vector<16x32xf32>
    %722 = vector.shape_cast %700 : vector<32xf32> to vector<1x32xf32>
    %723 = vector.broadcast %722 : vector<1x32xf32> to vector<16x32xf32>
    %724 = arith.addf %721, %723 : vector<16x32xf32>
    %c0_125 = arith.constant 0 : index
    %c0_126 = arith.constant 0 : index
    %725 = vector.load %arg21[%c0_125, %c0_126] : memref<16x32xf32, #tpu.memory_space<vmem>>, vector<16x32xf32>
    tpu.vector_store %arg21[%c0_125, %c0_126], %724 {strides = array<i32>} : memref<16x32xf32, #tpu.memory_space<vmem>>, vector<16x32xf32>,
    return
  }
  func.func @transform_0(%arg0: i32) -> (i32, i32) {
    %c0_i32 = arith.constant 0 : i32
    %c0_i32_0 = arith.constant 0 : i32
    return %arg0, %c0_i32 : i32, i32
  }
  func.func @transform_1(%arg0: i32) -> (i32, i32) {
    %c0_i32 = arith.constant 0 : i32
    %c0_i32_0 = arith.constant 0 : i32
    %c0_i32_1 = arith.constant 0 : i32
    return %c0_i32, %c0_i32_0 : i32, i32
  }
  func.func @transform_2(%arg0: i32) -> (i32, i32) {
    %c0_i32 = arith.constant 0 : i32
    %c0_i32_0 = arith.constant 0 : i32
    %c0_i32_1 = arith.constant 0 : i32
    return %c0_i32, %c0_i32_0 : i32, i32
  }
  func.func @transform_3(%arg0: i32) -> (i32, i32) {
    %c0_i32 = arith.constant 0 : i32
    %c0_i32_0 = arith.constant 0 : i32
    %c0_i32_1 = arith.constant 0 : i32
    return %c0_i32, %c0_i32_0 : i32, i32
  }
  func.func @transform_4(%arg0: i32) -> (i32, i32, i32) {
    %c0_i32 = arith.constant 0 : i32
    %c0_i32_0 = arith.constant 0 : i32
    %c0_i32_1 = arith.constant 0 : i32
    %c0_i32_2 = arith.constant 0 : i32
    return %c0_i32, %c0_i32_0, %c0_i32_1 : i32, i32, i32
  }
  func.func @transform_5(%arg0: i32) -> (i32, i32) {
    %c0_i32 = arith.constant 0 : i32
    %c0_i32_0 = arith.constant 0 : i32
    %c0_i32_1 = arith.constant 0 : i32
    return %c0_i32, %c0_i32_0 : i32, i32
  }
  func.func @transform_6(%arg0: i32) -> (i32, i32, i32) {
    %c0_i32 = arith.constant 0 : i32
    %c0_i32_0 = arith.constant 0 : i32
    %c0_i32_1 = arith.constant 0 : i32
    %c0_i32_2 = arith.constant 0 : i32
    return %c0_i32, %c0_i32_0, %c0_i32_1 : i32, i32, i32
  }
  func.func @transform_7(%arg0: i32) -> (i32, i32) {
    %c0_i32 = arith.constant 0 : i32
    %c0_i32_0 = arith.constant 0 : i32
    %c0_i32_1 = arith.constant 0 : i32
    return %c0_i32, %c0_i32_0 : i32, i32
  }
  func.func @transform_8(%arg0: i32) -> (i32, i32, i32) {
    %c0_i32 = arith.constant 0 : i32
    %c0_i32_0 = arith.constant 0 : i32
    %c0_i32_1 = arith.constant 0 : i32
    %c0_i32_2 = arith.constant 0 : i32
    return %c0_i32, %c0_i32_0, %c0_i32_1 : i32, i32, i32
  }
  func.func @transform_9(%arg0: i32) -> (i32, i32) {
    %c0_i32 = arith.constant 0 : i32
    %c0_i32_0 = arith.constant 0 : i32
    %c0_i32_1 = arith.constant 0 : i32
    return %c0_i32, %c0_i32_0 : i32, i32
  }
  func.func @transform_10(%arg0: i32) -> (i32, i32, i32) {
    %c0_i32 = arith.constant 0 : i32
    %c0_i32_0 = arith.constant 0 : i32
    %c0_i32_1 = arith.constant 0 : i32
    %c0_i32_2 = arith.constant 0 : i32
    return %c0_i32, %c0_i32_0, %c0_i32_1 : i32, i32, i32
  }
  func.func @transform_11(%arg0: i32) -> (i32, i32) {
    %c0_i32 = arith.constant 0 : i32
    %c0_i32_0 = arith.constant 0 : i32
    %c0_i32_1 = arith.constant 0 : i32
    return %c0_i32, %c0_i32_0 : i32, i32
  }
  func.func @transform_12(%arg0: i32) -> (i32, i32) {
    %c0_i32 = arith.constant 0 : i32
    %c0_i32_0 = arith.constant 0 : i32
    %c0_i32_1 = arith.constant 0 : i32
    return %c0_i32, %c0_i32_0 : i32, i32
  }
  func.func @transform_13(%arg0: i32) -> (i32, i32) {
    %c0_i32 = arith.constant 0 : i32
    %c0_i32_0 = arith.constant 0 : i32
    %c0_i32_1 = arith.constant 0 : i32
    return %c0_i32, %c0_i32_0 : i32, i32
  }
  func.func @transform_14(%arg0: i32) -> (i32, i32, i32) {
    %c0_i32 = arith.constant 0 : i32
    %c0_i32_0 = arith.constant 0 : i32
    %c0_i32_1 = arith.constant 0 : i32
    %c0_i32_2 = arith.constant 0 : i32
    return %c0_i32, %c0_i32_0, %c0_i32_1 : i32, i32, i32
  }
  func.func @transform_15(%arg0: i32) -> (i32, i32) {
    %c0_i32 = arith.constant 0 : i32
    %c0_i32_0 = arith.constant 0 : i32
    %c0_i32_1 = arith.constant 0 : i32
    return %c0_i32, %c0_i32_0 : i32, i32
  }
  func.func @transform_16(%arg0: i32) -> (i32, i32, i32) {
    %c0_i32 = arith.constant 0 : i32
    %c0_i32_0 = arith.constant 0 : i32
    %c0_i32_1 = arith.constant 0 : i32
    %c0_i32_2 = arith.constant 0 : i32
    return %c0_i32, %c0_i32_0, %c0_i32_1 : i32, i32, i32
  }
  func.func @transform_17(%arg0: i32) -> (i32, i32) {
    %c0_i32 = arith.constant 0 : i32
    %c0_i32_0 = arith.constant 0 : i32
    %c0_i32_1 = arith.constant 0 : i32
    return %c0_i32, %c0_i32_0 : i32, i32
  }
  func.func @transform_18(%arg0: i32) -> (i32, i32) {
    %c0_i32 = arith.constant 0 : i32
    %c0_i32_0 = arith.constant 0 : i32
    %c0_i32_1 = arith.constant 0 : i32
    return %c0_i32, %c0_i32_0 : i32, i32
  }
  func.func @transform_19(%arg0: i32) -> (i32, i32) {
    %c0_i32 = arith.constant 0 : i32
    %c0_i32_0 = arith.constant 0 : i32
    %c0_i32_1 = arith.constant 0 : i32
    return %c0_i32, %c0_i32_0 : i32, i32
  }
  func.func @transform_20(%arg0: i32) -> (i32, i32) {
    %c0_i32 = arith.constant 0 : i32
    %c0_i32_0 = arith.constant 0 : i32
    return %arg0, %c0_i32 : i32, i32
  }
}

</mosaic_0001>

<llo_original>
// kernel: hyena_dna_forward.1
$region0: #{hyena_dna_forward.1}
  #allocation0 [shape = 'u32[]', space=smem, size = 0x4, offset = 0x4, fixed_abs, tag = 'smem constant byte address 0x4 - core index']
  #allocation1 [shape = 'u32[144,128]{1,0:T(1,128)}', space=vmem, size = 0x12000, scoped, tag = 'internal scratch']
  %s0 = inlined_call_operand.vmem [shape: s32[32,1], index: 0, kind: input, shape index: {}]
  %s1 = inlined_call_operand.vmem [shape: f32[16,32], index: 1, kind: input, shape index: {}]
  %s2 = inlined_call_operand.vmem [shape: f32[2,32], index: 2, kind: input, shape index: {}]
  %s3 = inlined_call_operand.vmem [shape: f32[2,32], index: 3, kind: input, shape index: {}]
  %s4 = inlined_call_operand.vmem [shape: bf16[2,32,128], index: 4, kind: input, shape index: {}]
  %s5 = inlined_call_operand.vmem [shape: f32[2,128], index: 5, kind: input, shape index: {}]
  %s6 = inlined_call_operand.vmem [shape: f32[2,3,128], index: 6, kind: input, shape index: {}]
  %s7 = inlined_call_operand.vmem [shape: f32[2,128], index: 7, kind: input, shape index: {}]
  %s8 = inlined_call_operand.vmem [shape: f32[2,16,32], index: 8, kind: input, shape index: {}]
  %s9 = inlined_call_operand.vmem [shape: f32[2,32], index: 9, kind: input, shape index: {}]
  %s10 = inlined_call_operand.vmem [shape: bf16[2,32,32], index: 10, kind: input, shape index: {}]
  %s11 = inlined_call_operand.vmem [shape: f32[2,32], index: 11, kind: input, shape index: {}]
  %s12 = inlined_call_operand.vmem [shape: f32[2,32], index: 12, kind: input, shape index: {}]
  %s13 = inlined_call_operand.vmem [shape: f32[2,32], index: 13, kind: input, shape index: {}]
  %s14 = inlined_call_operand.vmem [shape: bf16[2,32,128], index: 14, kind: input, shape index: {}]
  %s15 = inlined_call_operand.vmem [shape: f32[2,128], index: 15, kind: input, shape index: {}]
  %s16 = inlined_call_operand.vmem [shape: bf16[2,128,32], index: 16, kind: input, shape index: {}]
  %s17 = inlined_call_operand.vmem [shape: f32[2,32], index: 17, kind: input, shape index: {}]
  %s18 = inlined_call_operand.vmem [shape: f32[1,32], index: 18, kind: input, shape index: {}]
  %s19 = inlined_call_operand.vmem [shape: f32[1,32], index: 19, kind: input, shape index: {}]
  %s20 = inlined_call_operand.hbm [shape: f32[32,32], index: 20, kind: output, shape index: {}]
  %s21 = sld [smem:[#allocation0]]
  $region113: #{hyena_dna_forward.1} parent=0
    _
  %s23 = ssub.s32 1, %s21
  %s24 = scalar_select 0, %s23, %s21
  $region1: #{hyena_dna_forward.1} parent=0
    #allocation2 [shape = 'u8[16384]{0}', space=vmem, size = 0x4000, scoped, tag = 'output window, operand 0']
    #allocation3 [shape = 's32[2]{0}', space=sflag, size = 0x8, scoped, tag = 'scoped memory for hyena_dna_forward.1']
    %25 = vsyncpa [#allocation3], 0
    %s26 = scalar_lea.sflag [#allocation3], 1
    %27 = vsyncpa %s26, 0
    loop: start=0, step=1, limit=4
    $region2: #{hyena_dna_forward.1} parent=1 // loop_pre_header
      _
    $region3: #{hyena_dna_forward.1} parent=1 // loop_header
      %s29 = sphi 0, %s33
      %p30 = scmp.ge.s32.totalorder %s29, 4
      %s39 = sphi 0, %s41
      %s42 = sphi 0, %s39
      %s43 = sphi 0, %s42
      %s59 = sphi 0, %s43
      %s63 = sphi 0, %s63
      %s65 = sphi 0, %s63
      %s66 = sphi 0, %s65
      %s80 = sphi 0, %s66
      %s84 = sphi 0, %s84
      %s86 = sphi 0, %s84
      %s87 = sphi 0, %s86
      %s101 = sphi 0, %s87
      %s105 = sphi 0, %s105
      %s107 = sphi 0, %s105
      %s108 = sphi 0, %s107
      %s122 = sphi 0, %s108
      %s126 = sphi 0, %s126
      %s128 = sphi 0, %s126
      %s129 = sphi 0, %s128
      %s143 = sphi 0, %s129
      %s147 = sphi 0, %s147
      %s149 = sphi 0, %s147
      %s150 = sphi 0, %s149
      %s164 = sphi 0, %s150
      %s168 = sphi 0, %s168
      %s170 = sphi 0, %s168
      %s171 = sphi 0, %s170
      %s185 = sphi 0, %s171
      %s189 = sphi 0, %s189
      %s191 = sphi 0, %s189
      %s192 = sphi 0, %s191
      %s206 = sphi 0, %s192
      %s210 = sphi 0, %s210
      %s212 = sphi 0, %s210
      %s213 = sphi 0, %s212
      %s227 = sphi 0, %s213
      %s231 = sphi 0, %s231
      %s233 = sphi 0, %s231
      %s234 = sphi 0, %s233
      %s248 = sphi 0, %s234
      %s252 = sphi 0, %s252
      %s254 = sphi 0, %s252
      %s255 = sphi 0, %s254
      %s269 = sphi 0, %s255
      %s273 = sphi 0, %s273
      %s275 = sphi 0, %s273
      %s276 = sphi 0, %s275
      %s290 = sphi 0, %s276
      %s294 = sphi 0, %s294
      %s296 = sphi 0, %s294
      %s297 = sphi 0, %s296
      %s311 = sphi 0, %s297
      %s315 = sphi 0, %s315
      %s317 = sphi 0, %s315
      %s318 = sphi 0, %s317
      %s332 = sphi 0, %s318
      %s336 = sphi 0, %s336
      %s338 = sphi 0, %s336
      %s339 = sphi 0, %s338
      %s353 = sphi 0, %s339
      %s357 = sphi 0, %s357
      %s359 = sphi 0, %s357
      %s360 = sphi 0, %s359
      %s374 = sphi 0, %s360
      %s378 = sphi 0, %s378
      %s380 = sphi 0, %s378
      %s381 = sphi 0, %s380
      %s395 = sphi 0, %s381
      %s399 = sphi 0, %s399
      %s401 = sphi 0, %s399
      %s402 = sphi 0, %s401
      %s416 = sphi 0, %s402
      %s420 = sphi 0, %s420
      %s422 = sphi 0, %s420
      %s423 = sphi 0, %s422
      %s437 = sphi 0, %s423
      %s441 = sphi 0, %s441
      %s443 = sphi 0, %s441
      %s444 = sphi 0, %s443
      %s458 = sphi 0, %s444
      %s464 = sphi 0, %s466
      %s467 = sphi 0, %s464
      %s468 = sphi 0, %s467
      %s484 = sphi 0, %s468
    $region4: #{hyena_dna_forward.1} parent=1 // loop_header_branch
      %32 = sbr.rel (%p30) target = $region8
    $region5: #{hyena_dna_forward.1} parent=1 // loop_body
      %s34 = ssub.s32 %s29, 1
      %s35 = ssub.s32 %s29, 2
      %s36 = sadd.s32 %s29, 1
      %s37 = ssub.s32 %s29, %s36
      %p38 = scmp.eq.s32.totalorder %s37, 0
      %s40 = sadd.s32 %s39, 1
      %s41 = scalar_select %p38, %s39, %s40
      %p44 = pneg %p38
      %p45 = scmp.eq.s32.totalorder %s29, 1
      %p46 = por %p44, %p45
      %p47 = scmp.ne.s32.totalorder %s39, %s42
      %p48 = scmp.eq.s32.totalorder %s29, 0
      %p49 = por %p47, %p48
      %p50 = scmp.ne.s32.totalorder %s39, %s42
      %p51 = scmp.eq.s32.totalorder %s34, 1
      %p52 = por %p50, %p51
      %p53 = scmp.ne.s32.totalorder %s42, %s43
      %p54 = scmp.eq.s32.totalorder %s34, 0
      %p55 = por %p53, %p54
      %p56 = scmp.ne.s32.totalorder %s42, %s43
      %p57 = scmp.eq.s32.totalorder %s35, 1
      %p58 = por %p56, %p57
      %p60 = scmp.ne.s32.totalorder %s43, %s59
      %p61 = scmp.eq.s32.totalorder %s35, 0
      %p62 = por %p60, %p61
      %s64 = sadd.s32 %s63, 1
      %p67 = scmp.eq.s32.totalorder %s29, 1
      %p68 = scmp.ne.s32.totalorder %s63, %s65
      %p69 = scmp.eq.s32.totalorder %s29, 0
      %p70 = por %p68, %p69
      %p71 = scmp.ne.s32.totalorder %s63, %s65
      %p72 = scmp.eq.s32.totalorder %s34, 1
      %p73 = por %p71, %p72
      %p74 = scmp.ne.s32.totalorder %s65, %s66
      %p75 = scmp.eq.s32.totalorder %s34, 0
      %p76 = por %p74, %p75
      %p77 = scmp.ne.s32.totalorder %s65, %s66
      %p78 = scmp.eq.s32.totalorder %s35, 1
      %p79 = por %p77, %p78
      %p81 = scmp.ne.s32.totalorder %s66, %s80
      %p82 = scmp.eq.s32.totalorder %s35, 0
      %p83 = por %p81, %p82
      %s85 = sadd.s32 %s84, 1
      %p88 = scmp.eq.s32.totalorder %s29, 1
      %p89 = scmp.ne.s32.totalorder %s84, %s86
      %p90 = scmp.eq.s32.totalorder %s29, 0
      %p91 = por %p89, %p90
      %p92 = scmp.ne.s32.totalorder %s84, %s86
      %p93 = scmp.eq.s32.totalorder %s34, 1
      %p94 = por %p92, %p93
      %p95 = scmp.ne.s32.totalorder %s86, %s87
      %p96 = scmp.eq.s32.totalorder %s34, 0
      %p97 = por %p95, %p96
      %p98 = scmp.ne.s32.totalorder %s86, %s87
      %p99 = scmp.eq.s32.totalorder %s35, 1
      %p100 = por %p98, %p99
      %p102 = scmp.ne.s32.totalorder %s87, %s101
      %p103 = scmp.eq.s32.totalorder %s35, 0
      %p104 = por %p102, %p103
      %s106 = sadd.s32 %s105, 1
      %p109 = scmp.eq.s32.totalorder %s29, 1
      %p110 = scmp.ne.s32.totalorder %s105, %s107
      %p111 = scmp.eq.s32.totalorder %s29, 0
      %p112 = por %p110, %p111
      %p113 = scmp.ne.s32.totalorder %s105, %s107
      %p114 = scmp.eq.s32.totalorder %s34, 1
      %p115 = por %p113, %p114
      %p116 = scmp.ne.s32.totalorder %s107, %s108
      %p117 = scmp.eq.s32.totalorder %s34, 0
      %p118 = por %p116, %p117
      %p119 = scmp.ne.s32.totalorder %s107, %s108
      %p120 = scmp.eq.s32.totalorder %s35, 1
      %p121 = por %p119, %p120
      %p123 = scmp.ne.s32.totalorder %s108, %s122
      %p124 = scmp.eq.s32.totalorder %s35, 0
      %p125 = por %p123, %p124
      %s127 = sadd.s32 %s126, 1
      %p130 = scmp.eq.s32.totalorder %s29, 1
      %p131 = scmp.ne.s32.totalorder %s126, %s128
      %p132 = scmp.eq.s32.totalorder %s29, 0
      %p133 = por %p131, %p132
      %p134 = scmp.ne.s32.totalorder %s126, %s128
      %p135 = scmp.eq.s32.totalorder %s34, 1
      %p136 = por %p134, %p135
      %p137 = scmp.ne.s32.totalorder %s128, %s129
      %p138 = scmp.eq.s32.totalorder %s34, 0
      %p139 = por %p137, %p138
      %p140 = scmp.ne.s32.totalorder %s128, %s129
      %p141 = scmp.eq.s32.totalorder %s35, 1
      %p142 = por %p140, %p141
      %p144 = scmp.ne.s32.totalorder %s129, %s143
      %p145 = scmp.eq.s32.totalorder %s35, 0
      %p146 = por %p144, %p145
      %s148 = sadd.s32 %s147, 1
      %p151 = scmp.eq.s32.totalorder %s29, 1
      %p152 = scmp.ne.s32.totalorder %s147, %s149
      %p153 = scmp.eq.s32.totalorder %s29, 0
      %p154 = por %p152, %p153
      %p155 = scmp.ne.s32.totalorder %s147, %s149
      %p156 = scmp.eq.s32.totalorder %s34, 1
      %p157 = por %p155, %p156
      %p158 = scmp.ne.s32.totalorder %s149, %s150
      %p159 = scmp.eq.s32.totalorder %s34, 0
      %p160 = por %p158, %p159
      %p161 = scmp.ne.s32.totalorder %s149, %s150
      %p162 = scmp.eq.s32.totalorder %s35, 1
      %p163 = por %p161, %p162
      %p165 = scmp.ne.s32.totalorder %s150, %s164
      %p166 = scmp.eq.s32.totalorder %s35, 0
      %p167 = por %p165, %p166
      %s169 = sadd.s32 %s168, 1
      %p172 = scmp.eq.s32.totalorder %s29, 1
      %p173 = scmp.ne.s32.totalorder %s168, %s170
      %p174 = scmp.eq.s32.totalorder %s29, 0
      %p175 = por %p173, %p174
      %p176 = scmp.ne.s32.totalorder %s168, %s170
      %p177 = scmp.eq.s32.totalorder %s34, 1
      %p178 = por %p176, %p177
      %p179 = scmp.ne.s32.totalorder %s170, %s171
      %p180 = scmp.eq.s32.totalorder %s34, 0
      %p181 = por %p179, %p180
      %p182 = scmp.ne.s32.totalorder %s170, %s171
      %p183 = scmp.eq.s32.totalorder %s35, 1
      %p184 = por %p182, %p183
      %p186 = scmp.ne.s32.totalorder %s171, %s185
      %p187 = scmp.eq.s32.totalorder %s35, 0
      %p188 = por %p186, %p187
      %s190 = sadd.s32 %s189, 1
      %p193 = scmp.eq.s32.totalorder %s29, 1
      %p194 = scmp.ne.s32.totalorder %s189, %s191
      %p195 = scmp.eq.s32.totalorder %s29, 0
      %p196 = por %p194, %p195
      %p197 = scmp.ne.s32.totalorder %s189, %s191
      %p198 = scmp.eq.s32.totalorder %s34, 1
      %p199 = por %p197, %p198
      %p200 = scmp.ne.s32.totalorder %s191, %s192
      %p201 = scmp.eq.s32.totalorder %s34, 0
      %p202 = por %p200, %p201
      %p203 = scmp.ne.s32.totalorder %s191, %s192
      %p204 = scmp.eq.s32.totalorder %s35, 1
      %p205 = por %p203, %p204
      %p207 = scmp.ne.s32.totalorder %s192, %s206
      %p208 = scmp.eq.s32.totalorder %s35, 0
      %p209 = por %p207, %p208
      %s211 = sadd.s32 %s210, 1
      %p214 = scmp.eq.s32.totalorder %s29, 1
      %p215 = scmp.ne.s32.totalorder %s210, %s212
      %p216 = scmp.eq.s32.totalorder %s29, 0
      %p217 = por %p215, %p216
      %p218 = scmp.ne.s32.totalorder %s210, %s212
      %p219 = scmp.eq.s32.totalorder %s34, 1
      %p220 = por %p218, %p219
      %p221 = scmp.ne.s32.totalorder %s212, %s213
      %p222 = scmp.eq.s32.totalorder %s34, 0
      %p223 = por %p221, %p222
      %p224 = scmp.ne.s32.totalorder %s212, %s213
      %p225 = scmp.eq.s32.totalorder %s35, 1
      %p226 = por %p224, %p225
      %p228 = scmp.ne.s32.totalorder %s213, %s227
      %p229 = scmp.eq.s32.totalorder %s35, 0
      %p230 = por %p228, %p229
      %s232 = sadd.s32 %s231, 1
      %p235 = scmp.eq.s32.totalorder %s29, 1
      %p236 = scmp.ne.s32.totalorder %s231, %s233
      %p237 = scmp.eq.s32.totalorder %s29, 0
      %p238 = por %p236, %p237
      %p239 = scmp.ne.s32.totalorder %s231, %s233
      %p240 = scmp.eq.s32.totalorder %s34, 1
      %p241 = por %p239, %p240
      %p242 = scmp.ne.s32.totalorder %s233, %s234
      %p243 = scmp.eq.s32.totalorder %s34, 0
      %p244 = por %p242, %p243
      %p245 = scmp.ne.s32.totalorder %s233, %s234
      %p246 = scmp.eq.s32.totalorder %s35, 1
      %p247 = por %p245, %p246
      %p249 = scmp.ne.s32.totalorder %s234, %s248
      %p250 = scmp.eq.s32.totalorder %s35, 0
      %p251 = por %p249, %p250
      %s253 = sadd.s32 %s252, 1
      %p256 = scmp.eq.s32.totalorder %s29, 1
      %p257 = scmp.ne.s32.totalorder %s252, %s254
      %p258 = scmp.eq.s32.totalorder %s29, 0
      %p259 = por %p257, %p258
      %p260 = scmp.ne.s32.totalorder %s252, %s254
      %p261 = scmp.eq.s32.totalorder %s34, 1
      %p262 = por %p260, %p261
      %p263 = scmp.ne.s32.totalorder %s254, %s255
      %p264 = scmp.eq.s32.totalorder %s34, 0
      %p265 = por %p263, %p264
      %p266 = scmp.ne.s32.totalorder %s254, %s255
      %p267 = scmp.eq.s32.totalorder %s35, 1
      %p268 = por %p266, %p267
      %p270 = scmp.ne.s32.totalorder %s255, %s269
      %p271 = scmp.eq.s32.totalorder %s35, 0
      %p272 = por %p270, %p271
      %s274 = sadd.s32 %s273, 1
      %p277 = scmp.eq.s32.totalorder %s29, 1
      %p278 = scmp.ne.s32.totalorder %s273, %s275
      %p279 = scmp.eq.s32.totalorder %s29, 0
      %p280 = por %p278, %p279
      %p281 = scmp.ne.s32.totalorder %s273, %s275
      %p282 = scmp.eq.s32.totalorder %s34, 1
      %p283 = por %p281, %p282
      %p284 = scmp.ne.s32.totalorder %s275, %s276
      %p285 = scmp.eq.s32.totalorder %s34, 0
      %p286 = por %p284, %p285
      %p287 = scmp.ne.s32.totalorder %s275, %s276
      %p288 = scmp.eq.s32.totalorder %s35, 1
      %p289 = por %p287, %p288
      %p291 = scmp.ne.s32.totalorder %s276, %s290
      %p292 = scmp.eq.s32.totalorder %s35, 0
      %p293 = por %p291, %p292
      %s295 = sadd.s32 %s294, 1
      %p298 = scmp.eq.s32.totalorder %s29, 1
      %p299 = scmp.ne.s32.totalorder %s294, %s296
      %p300 = scmp.eq.s32.totalorder %s29, 0
      %p301 = por %p299, %p300
      %p302 = scmp.ne.s32.totalorder %s294, %s296
      %p303 = scmp.eq.s32.totalorder %s34, 1
      %p304 = por %p302, %p303
      %p305 = scmp.ne.s32.totalorder %s296, %s297
      %p306 = scmp.eq.s32.totalorder %s34, 0
      %p307 = por %p305, %p306
      %p308 = scmp.ne.s32.totalorder %s296, %s297
      %p309 = scmp.eq.s32.totalorder %s35, 1
      %p310 = por %p308, %p309
      %p312 = scmp.ne.s32.totalorder %s297, %s311
      %p313 = scmp.eq.s32.totalorder %s35, 0
      %p314 = por %p312, %p313
      %s316 = sadd.s32 %s315, 1
      %p319 = scmp.eq.s32.totalorder %s29, 1
      %p320 = scmp.ne.s32.totalorder %s315, %s317
      %p321 = scmp.eq.s32.totalorder %s29, 0
      %p322 = por %p320, %p321
      %p323 = scmp.ne.s32.totalorder %s315, %s317
      %p324 = scmp.eq.s32.totalorder %s34, 1
      %p325 = por %p323, %p324
      %p326 = scmp.ne.s32.totalorder %s317, %s318
      %p327 = scmp.eq.s32.totalorder %s34, 0
      %p328 = por %p326, %p327
      %p329 = scmp.ne.s32.totalorder %s317, %s318
      %p330 = scmp.eq.s32.totalorder %s35, 1
      %p331 = por %p329, %p330
      %p333 = scmp.ne.s32.totalorder %s318, %s332
      %p334 = scmp.eq.s32.totalorder %s35, 0
      %p335 = por %p333, %p334
      %s337 = sadd.s32 %s336, 1
      %p340 = scmp.eq.s32.totalorder %s29, 1
      %p341 = scmp.ne.s32.totalorder %s336, %s338
      %p342 = scmp.eq.s32.totalorder %s29, 0
      %p343 = por %p341, %p342
      %p344 = scmp.ne.s32.totalorder %s336, %s338
      %p345 = scmp.eq.s32.totalorder %s34, 1
      %p346 = por %p344, %p345
      %p347 = scmp.ne.s32.totalorder %s338, %s339
      %p348 = scmp.eq.s32.totalorder %s34, 0
      %p349 = por %p347, %p348
      %p350 = scmp.ne.s32.totalorder %s338, %s339
      %p351 = scmp.eq.s32.totalorder %s35, 1
      %p352 = por %p350, %p351
      %p354 = scmp.ne.s32.totalorder %s339, %s353
      %p355 = scmp.eq.s32.totalorder %s35, 0
      %p356 = por %p354, %p355
      %s358 = sadd.s32 %s357, 1
      %p361 = scmp.eq.s32.totalorder %s29, 1
      %p362 = scmp.ne.s32.totalorder %s357, %s359
      %p363 = scmp.eq.s32.totalorder %s29, 0
      %p364 = por %p362, %p363
      %p365 = scmp.ne.s32.totalorder %s357, %s359
      %p366 = scmp.eq.s32.totalorder %s34, 1
      %p367 = por %p365, %p366
      %p368 = scmp.ne.s32.totalorder %s359, %s360
      %p369 = scmp.eq.s32.totalorder %s34, 0
      %p370 = por %p368, %p369
      %p371 = scmp.ne.s32.totalorder %s359, %s360
      %p372 = scmp.eq.s32.totalorder %s35, 1
      %p373 = por %p371, %p372
      %p375 = scmp.ne.s32.totalorder %s360, %s374
      %p376 = scmp.eq.s32.totalorder %s35, 0
      %p377 = por %p375, %p376
      %s379 = sadd.s32 %s378, 1
      %p382 = scmp.eq.s32.totalorder %s29, 1
      %p383 = scmp.ne.s32.totalorder %s378, %s380
      %p384 = scmp.eq.s32.totalorder %s29, 0
      %p385 = por %p383, %p384
      %p386 = scmp.ne.s32.totalorder %s378, %s380
      %p387 = scmp.eq.s32.totalorder %s34, 1
      %p388 = por %p386, %p387
      %p389 = scmp.ne.s32.totalorder %s380, %s381
      %p390 = scmp.eq.s32.totalorder %s34, 0
      %p391 = por %p389, %p390
      %p392 = scmp.ne.s32.totalorder %s380, %s381
      %p393 = scmp.eq.s32.totalorder %s35, 1
      %p394 = por %p392, %p393
      %p396 = scmp.ne.s32.totalorder %s381, %s395
      %p397 = scmp.eq.s32.totalorder %s35, 0
      %p398 = por %p396, %p397
      %s400 = sadd.s32 %s399, 1
      %p403 = scmp.eq.s32.totalorder %s29, 1
      %p404 = scmp.ne.s32.totalorder %s399, %s401
      %p405 = scmp.eq.s32.totalorder %s29, 0
      %p406 = por %p404, %p405
      %p407 = scmp.ne.s32.totalorder %s399, %s401
      %p408 = scmp.eq.s32.totalorder %s34, 1
      %p409 = por %p407, %p408
      %p410 = scmp.ne.s32.totalorder %s401, %s402
      %p411 = scmp.eq.s32.totalorder %s34, 0
      %p412 = por %p410, %p411
      %p413 = scmp.ne.s32.totalorder %s401, %s402
      %p414 = scmp.eq.s32.totalorder %s35, 1
      %p415 = por %p413, %p414
      %p417 = scmp.ne.s32.totalorder %s402, %s416
      %p418 = scmp.eq.s32.totalorder %s35, 0
      %p419 = por %p417, %p418
      %s421 = sadd.s32 %s420, 1
      %p424 = scmp.eq.s32.totalorder %s29, 1
      %p425 = scmp.ne.s32.totalorder %s420, %s422
      %p426 = scmp.eq.s32.totalorder %s29, 0
      %p427 = por %p425, %p426
      %p428 = scmp.ne.s32.totalorder %s420, %s422
      %p429 = scmp.eq.s32.totalorder %s34, 1
      %p430 = por %p428, %p429
      %p431 = scmp.ne.s32.totalorder %s422, %s423
      %p432 = scmp.eq.s32.totalorder %s34, 0
      %p433 = por %p431, %p432
      %p434 = scmp.ne.s32.totalorder %s422, %s423
      %p435 = scmp.eq.s32.totalorder %s35, 1
      %p436 = por %p434, %p435
      %p438 = scmp.ne.s32.totalorder %s423, %s437
      %p439 = scmp.eq.s32.totalorder %s35, 0
      %p440 = por %p438, %p439
      %s442 = sadd.s32 %s441, 1
      %p445 = scmp.eq.s32.totalorder %s29, 1
      %p446 = scmp.ne.s32.totalorder %s441, %s443
      %p447 = scmp.eq.s32.totalorder %s29, 0
      %p448 = por %p446, %p447
      %p449 = scmp.ne.s32.totalorder %s441, %s443
      %p450 = scmp.eq.s32.totalorder %s34, 1
      %p451 = por %p449, %p450
      %p452 = scmp.ne.s32.totalorder %s443, %s444
      %p453 = scmp.eq.s32.totalorder %s34, 0
      %p454 = por %p452, %p453
      %p455 = scmp.ne.s32.totalorder %s443, %s444
      %p456 = scmp.eq.s32.totalorder %s35, 1
      %p457 = por %p455, %p456
      %p459 = scmp.ne.s32.totalorder %s444, %s458
      %p460 = scmp.eq.s32.totalorder %s35, 0
      %p461 = por %p459, %p460
      %s462 = ssub.s32 %s29, %s36
      %p463 = scmp.eq.s32.totalorder %s462, 0
      %s465 = sadd.s32 %s464, 1
      %s466 = scalar_select %p463, %s464, %s465
      %p469 = pneg %p463
      %p470 = scmp.eq.s32.totalorder %s29, 1
      %p471 = por %p469, %p470
      %p472 = scmp.ne.s32.totalorder %s464, %s467
      %p473 = scmp.eq.s32.totalorder %s29, 0
      %p474 = por %p472, %p473
      %p475 = scmp.ne.s32.totalorder %s464, %s467
      %p476 = scmp.eq.s32.totalorder %s34, 1
      %p477 = por %p475, %p476
      %p478 = scmp.ne.s32.totalorder %s467, %s468
      %p479 = scmp.eq.s32.totalorder %s34, 0
      %p480 = por %p478, %p479
      %p481 = scmp.ne.s32.totalorder %s467, %s468
      %p482 = scmp.eq.s32.totalorder %s35, 1
      %p483 = por %p481, %p482
      %p485 = scmp.ne.s32.totalorder %s468, %s484
      %p486 = scmp.eq.s32.totalorder %s35, 0
      %p487 = por %p485, %p486
      %p488 = scmp.le.s32.totalorder 1, %s29
      %p489 = scmp.lt.s32.totalorder %s29, 3
      %p490 = pnand %p488, %p489
      %p491 = pneg %p490
      // Predicated region
      $region9: #{hyena_dna_forward.1} parent=5 // pred_check
        _
      $region10: #{hyena_dna_forward.1} parent=5 // pred_check_branch
        %493 = sbr.rel (%p490) target = $region12
      $region11: #{hyena_dna_forward.1} parent=5 // pred_region
        %s494 = ssub.s32 %s29, 1
        // Predicated region
        $region13: #{hyena_dna_forward.1} parent=11 // pred_check
          %p495 = pneg %p76
        $region14: #{hyena_dna_forward.1} parent=11 // pred_check_branch
          %497 = sbr.rel (%p495) target = $region16
        $region15: #{hyena_dna_forward.1} parent=11 // pred_region
          _
        $region16: #{hyena_dna_forward.1} parent=11 // pred_fallthru
          _
        // Predicated region
        $region17: #{hyena_dna_forward.1} parent=11 // pred_check
          %p498 = pneg %p97
        $region18: #{hyena_dna_forward.1} parent=11 // pred_check_branch
          %500 = sbr.rel (%p498) target = $region20
        $region19: #{hyena_dna_forward.1} parent=11 // pred_region
          _
        $region20: #{hyena_dna_forward.1} parent=11 // pred_fallthru
          _
        // Predicated region
        $region21: #{hyena_dna_forward.1} parent=11 // pred_check
          %p501 = pneg %p118
        $region22: #{hyena_dna_forward.1} parent=11 // pred_check_branch
          %503 = sbr.rel (%p501) target = $region24
        $region23: #{hyena_dna_forward.1} parent=11 // pred_region
          _
        $region24: #{hyena_dna_forward.1} parent=11 // pred_fallthru
          _
        // Predicated region
        $region25: #{hyena_dna_forward.1} parent=11 // pred_check
          %p504 = pneg %p139
        $region26: #{hyena_dna_forward.1} parent=11 // pred_check_branch
          %506 = sbr.rel (%p504) target = $region28
        $region27: #{hyena_dna_forward.1} parent=11 // pred_region
          _
        $region28: #{hyena_dna_forward.1} parent=11 // pred_fallthru
          _
        // Predicated region
        $region29: #{hyena_dna_forward.1} parent=11 // pred_check
          %p507 = pneg %p160
        $region30: #{hyena_dna_forward.1} parent=11 // pred_check_branch
          %509 = sbr.rel (%p507) target = $region32
        $region31: #{hyena_dna_forward.1} parent=11 // pred_region
          _
        $region32: #{hyena_dna_forward.1} parent=11 // pred_fallthru
          _
        // Predicated region
        $region33: #{hyena_dna_forward.1} parent=11 // pred_check
          %p510 = pneg %p181
        $region34: #{hyena_dna_forward.1} parent=11 // pred_check_branch
          %512 = sbr.rel (%p510) target = $region36
        $region35: #{hyena_dna_forward.1} parent=11 // pred_region
          _
        $region36: #{hyena_dna_forward.1} parent=11 // pred_fallthru
          _
        // Predicated region
        $region37: #{hyena_dna_forward.1} parent=11 // pred_check
          %p513 = pneg %p202
        $region38: #{hyena_dna_forward.1} parent=11 // pred_check_branch
          %515 = sbr.rel (%p513) target = $region40
        $region39: #{hyena_dna_forward.1} parent=11 // pred_region
          _
        $region40: #{hyena_dna_forward.1} parent=11 // pred_fallthru
          _
        // Predicated region
        $region41: #{hyena_dna_forward.1} parent=11 // pred_check
          %p516 = pneg %p223
        $region42: #{hyena_dna_forward.1} parent=11 // pred_check_branch
          %518 = sbr.rel (%p516) target = $region44
        $region43: #{hyena_dna_forward.1} parent=11 // pred_region
          _
        $region44: #{hyena_dna_forward.1} parent=11 // pred_fallthru
          _
        // Predicated region
        $region45: #{hyena_dna_forward.1} parent=11 // pred_check
          %p519 = pneg %p244
        $region46: #{hyena_dna_forward.1} parent=11 // pred_check_branch
          %521 = sbr.rel (%p519) target = $region48
        $region47: #{hyena_dna_forward.1} parent=11 // pred_region
          _
        $region48: #{hyena_dna_forward.1} parent=11 // pred_fallthru
          _
        // Predicated region
        $region49: #{hyena_dna_forward.1} parent=11 // pred_check
          %p522 = pneg %p265
        $region50: #{hyena_dna_forward.1} parent=11 // pred_check_branch
          %524 = sbr.rel (%p522) target = $region52
        $region51: #{hyena_dna_forward.1} parent=11 // pred_region
          _
        $region52: #{hyena_dna_forward.1} parent=11 // pred_fallthru
          _
        // Predicated region
        $region53: #{hyena_dna_forward.1} parent=11 // pred_check
          %p525 = pneg %p286
        $region54: #{hyena_dna_forward.1} parent=11 // pred_check_branch
          %527 = sbr.rel (%p525) target = $region56
        $region55: #{hyena_dna_forward.1} parent=11 // pred_region
          _
        $region56: #{hyena_dna_forward.1} parent=11 // pred_fallthru
          _
        // Predicated region
        $region57: #{hyena_dna_forward.1} parent=11 // pred_check
          %p528 = pneg %p307
        $region58: #{hyena_dna_forward.1} parent=11 // pred_check_branch
          %530 = sbr.rel (%p528) target = $region60
        $region59: #{hyena_dna_forward.1} parent=11 // pred_region
          _
        $region60: #{hyena_dna_forward.1} parent=11 // pred_fallthru
          _
        // Predicated region
        $region61: #{hyena_dna_forward.1} parent=11 // pred_check
          %p531 = pneg %p328
        $region62: #{hyena_dna_forward.1} parent=11 // pred_check_branch
          %533 = sbr.rel (%p531) target = $region64
        $region63: #{hyena_dna_forward.1} parent=11 // pred_region
          _
        $region64: #{hyena_dna_forward.1} parent=11 // pred_fallthru
          _
        // Predicated region
        $region65: #{hyena_dna_forward.1} parent=11 // pred_check
          %p534 = pneg %p349
        $region66: #{hyena_dna_forward.1} parent=11 // pred_check_branch
          %536 = sbr.rel (%p534) target = $region68
        $region67: #{hyena_dna_forward.1} parent=11 // pred_region
          _
        $region68: #{hyena_dna_forward.1} parent=11 // pred_fallthru
          _
        // Predicated region
        $region69: #{hyena_dna_forward.1} parent=11 // pred_check
          %p537 = pneg %p370
        $region70: #{hyena_dna_forward.1} parent=11 // pred_check_branch
          %539 = sbr.rel (%p537) target = $region72
        $region71: #{hyena_dna_forward.1} parent=11 // pred_region
          _
        $region72: #{hyena_dna_forward.1} parent=11 // pred_fallthru
          _
        // Predicated region
        $region73: #{hyena_dna_forward.1} parent=11 // pred_check
          %p540 = pneg %p391
        $region74: #{hyena_dna_forward.1} parent=11 // pred_check_branch
          %542 = sbr.rel (%p540) target = $region76
        $region75: #{hyena_dna_forward.1} parent=11 // pred_region
          _
        $region76: #{hyena_dna_forward.1} parent=11 // pred_fallthru
          _
        // Predicated region
        $region77: #{hyena_dna_forward.1} parent=11 // pred_check
          %p543 = pneg %p412
        $region78: #{hyena_dna_forward.1} parent=11 // pred_check_branch
          %545 = sbr.rel (%p543) target = $region80
        $region79: #{hyena_dna_forward.1} parent=11 // pred_region
          _
        $region80: #{hyena_dna_forward.1} parent=11 // pred_fallthru
          _
        // Predicated region
        $region81: #{hyena_dna_forward.1} parent=11 // pred_check
          %p546 = pneg %p433
        $region82: #{hyena_dna_forward.1} parent=11 // pred_check_branch
          %548 = sbr.rel (%p546) target = $region84
        $region83: #{hyena_dna_forward.1} parent=11 // pred_region
          _
        $region84: #{hyena_dna_forward.1} parent=11 // pred_fallthru
          _
        // Predicated region
        $region85: #{hyena_dna_forward.1} parent=11 // pred_check
          %p549 = pneg %p454
        $region86: #{hyena_dna_forward.1} parent=11 // pred_check_branch
          %551 = sbr.rel (%p549) target = $region88
        $region87: #{hyena_dna_forward.1} parent=11 // pred_region
          _
        $region88: #{hyena_dna_forward.1} parent=11 // pred_fallthru
          _
      $region12: #{hyena_dna_forward.1} parent=5 // pred_fallthru
        _
      %p552 = scmp.lt.s32.totalorder %s29, 2
      // Predicated region
      $region89: #{hyena_dna_forward.1} parent=5 // pred_check
        %p553 = pneg %p552
      $region90: #{hyena_dna_forward.1} parent=5 // pred_check_branch
        %555 = sbr.rel (%p553) target = $region92
      $region91: #{hyena_dna_forward.1} parent=5 // pred_region
        // Predicated region
        $region93: #{hyena_dna_forward.1} parent=91 // pred_check
          %p556 = pneg %p49
        $region94: #{hyena_dna_forward.1} parent=91 // pred_check_branch
          %558 = sbr.rel (%p556) target = $region96
        $region95: #{hyena_dna_forward.1} parent=91 // pred_region
          %s559 = smul.u32 2, %s29
          %p560 = scmp.lt.s32.totalorder %s559, 3
          %s561 = scalar_select %p560, %s559, 3
          %s562 = smul.addr %s561, 8
          %s563 = scalar_lea.vmem %s0, %s562
          %s564 = smul.u32 2, %s29
        $region96: #{hyena_dna_forward.1} parent=91 // pred_fallthru
          _
      $region92: #{hyena_dna_forward.1} parent=5 // pred_fallthru
        _
      %p565 = scmp.le.s32.totalorder 1, %s29
      %p566 = scmp.lt.s32.totalorder %s29, 3
      %p567 = pnand %p565, %p566
      %p568 = pneg %p567
      // Predicated region
      $region97: #{hyena_dna_forward.1} parent=5 // pred_check
        _
      $region98: #{hyena_dna_forward.1} parent=5 // pred_check_branch
        %570 = sbr.rel (%p567) target = $region100
      $region99: #{hyena_dna_forward.1} parent=5 // pred_region
        %s571 = ssub.s32 %s29, 1
        %s572 = smul.u32 2, %s34
        %p573 = scmp.lt.s32.totalorder %s572, 3
        %s574 = scalar_select %p573, %s572, 3
        %s575 = smul.addr %s574, 8
        %s576 = scalar_lea.vmem %s0, %s575
        %p577 = pneg %p55
        %p578 = pneg %p52
        %p579 = pneg %p76
        %p580 = pneg %p73
        %p581 = pneg %p97
        %p582 = pneg %p94
        %p583 = pneg %p118
        %p584 = pneg %p115
        %p585 = pneg %p139
        %p586 = pneg %p136
        %p587 = pneg %p160
        %p588 = pneg %p157
        %p589 = pneg %p181
        %p590 = pneg %p178
        %p591 = pneg %p202
        %p592 = pneg %p199
        %p593 = pneg %p223
        %p594 = pneg %p220
        %p595 = pneg %p244
        %p596 = pneg %p241
        %p597 = pneg %p265
        %p598 = pneg %p262
        %p599 = pneg %p286
        %p600 = pneg %p283
        %p601 = pneg %p307
        %p602 = pneg %p304
        %p603 = pneg %p328
        %p604 = pneg %p325
        %p605 = pneg %p349
        %p606 = pneg %p346
        %p607 = pneg %p370
        %p608 = pneg %p367
        %p609 = pneg %p391
        %p610 = pneg %p388
        %p611 = pneg %p412
        %p612 = pneg %p409
        %p613 = pneg %p433
        %p614 = pneg %p430
        %p615 = pneg %p454
        %p616 = pneg %p451
        %p617 = pneg %p480
        %p618 = pneg %p477
        %s619 = sand.u32 %s467, 1
        %s620 = scalar_lea.sflag [#allocation3], %s619
        %s621 = sand.u32 %s467, 1
        %s622 = smul.addr %s621, 16
        %s623 = scalar_lea.vmem [#allocation2], %s622
        %s624 = smul.u32 2, %s34
        %p625 = scmp.lt.s32.totalorder %s624, 3
        %s626 = scalar_select %p625, %s624, 3
        %s627 = smul.addr %s626, 8
        %s628 = scalar_lea.vmem %s0, %s627
        %s629 = smul.u32 2, %s34
        %s630 = smul.u32 2, %s34
        %v632 = vld [vmem:[%s628] sm:$0xff]
        %v633 = vld [vmem:[%s628 + $0x8] sm:$0xff]
        %v634 = vld [vmem:[%s1] sm:$0xff]
        %v635 = vld [vmem:[%s1 + $0x8] sm:$0xff]
        %vm636 = vcmp.eq.s32.totalorder %v632, 0
        %vm637 = vcmp.eq.s32.totalorder %v633, 0
        %v638 = vsel %vm636, 1, 0
        %v639 = vsel %vm637, 1, 0
        %v640 = vcvt.s32.f32 %v638
        %v641 = vcvt.s32.f32 %v639
        %643 = vset.pattern.permute.xlu0 0
        %644 = vperm.xlu0 %643, %v640
        %v645 = vpop.permute.xlu0 %644
        %648 = vset.pattern.permute.xlu0 0
        %649 = vperm.xlu0 %648, %v641
        %v650 = vpop.permute.xlu0 %649
        %v652 = vlaneseq
        %v653 = vshrl.u32 %v652, 7
        %v654 = vsub.s32 0, %v653
        %v655 = vrot.slane %v634, %v654
        %v656 = vmul.f32 %v645, %v655
        %v657 = vmul.f32 %v650, %v655
        %v658 = vadd.f32 %v656, 0.0
        %v659 = vadd.f32 %v657, 0.0
        %vm660 = vcmp.eq.s32.totalorder %v632, 1
        %vm661 = vcmp.eq.s32.totalorder %v633, 1
        %v662 = vsel %vm660, 1, 0
        %v663 = vsel %vm661, 1, 0
        %v664 = vcvt.s32.f32 %v662
        %v665 = vcvt.s32.f32 %v663
        %667 = vset.pattern.permute.xlu0 0
        %668 = vperm.xlu0 %667, %v664
        %v669 = vpop.permute.xlu0 %668
        %672 = vset.pattern.permute.xlu0 0
        %673 = vperm.xlu0 %672, %v665
        %v674 = vpop.permute.xlu0 %673
        %v676 = vlaneseq
        %v677 = vshrl.u32 %v676, 7
        %v678 = vsub.s32 1, %v677
        %v679 = vrot.slane %v634, %v678
        %v680 = vmul.f32 %v669, %v679
        %v681 = vmul.f32 %v674, %v679
        %v682 = vadd.f32 %v658, %v680
        %v683 = vadd.f32 %v659, %v681
        %vm684 = vcmp.eq.s32.totalorder %v632, 2
        %vm685 = vcmp.eq.s32.totalorder %v633, 2
        %v686 = vsel %vm684, 1, 0
        %v687 = vsel %vm685, 1, 0
        %v688 = vcvt.s32.f32 %v686
        %v689 = vcvt.s32.f32 %v687
        %691 = vset.pattern.permute.xlu0 0
        %692 = vperm.xlu0 %691, %v688
        %v693 = vpop.permute.xlu0 %692
        %696 = vset.pattern.permute.xlu0 0
        %697 = vperm.xlu0 %696, %v689
        %v698 = vpop.permute.xlu0 %697
        %v700 = vlaneseq
        %v701 = vshrl.u32 %v700, 7
        %v702 = vsub.s32 2, %v701
        %v703 = vrot.slane %v634, %v702
        %v704 = vmul.f32 %v693, %v703
        %v705 = vmul.f32 %v698, %v703
        %v706 = vadd.f32 %v682, %v704
        %v707 = vadd.f32 %v683, %v705
        %vm708 = vcmp.eq.s32.totalorder %v632, 3
        %vm709 = vcmp.eq.s32.totalorder %v633, 3
        %v710 = vsel %vm708, 1, 0
        %v711 = vsel %vm709, 1, 0
        %v712 = vcvt.s32.f32 %v710
        %v713 = vcvt.s32.f32 %v711
        %715 = vset.pattern.permute.xlu0 0
        %716 = vperm.xlu0 %715, %v712
        %v717 = vpop.permute.xlu0 %716
        %720 = vset.pattern.permute.xlu0 0
        %721 = vperm.xlu0 %720, %v713
        %v722 = vpop.permute.xlu0 %721
        %v724 = vlaneseq
        %v725 = vshrl.u32 %v724, 7
        %v726 = vsub.s32 3, %v725
        %v727 = vrot.slane %v634, %v726
        %v728 = vmul.f32 %v717, %v727
        %v729 = vmul.f32 %v722, %v727
        %v730 = vadd.f32 %v706, %v728
        %v731 = vadd.f32 %v707, %v729
        %vm732 = vcmp.eq.s32.totalorder %v632, 4
        %vm733 = vcmp.eq.s32.totalorder %v633, 4
        %v734 = vsel %vm732, 1, 0
        %v735 = vsel %vm733, 1, 0
        %v736 = vcvt.s32.f32 %v734
        %v737 = vcvt.s32.f32 %v735
        %739 = vset.pattern.permute.xlu0 0
        %740 = vperm.xlu0 %739, %v736
        %v741 = vpop.permute.xlu0 %740
        %744 = vset.pattern.permute.xlu0 0
        %745 = vperm.xlu0 %744, %v737
        %v746 = vpop.permute.xlu0 %745
        %v748 = vlaneseq
        %v749 = vshrl.u32 %v748, 7
        %v750 = vsub.s32 4, %v749
        %v751 = vrot.slane %v634, %v750
        %v752 = vmul.f32 %v741, %v751
        %v753 = vmul.f32 %v746, %v751
        %v754 = vadd.f32 %v730, %v752
        %v755 = vadd.f32 %v731, %v753
        %vm756 = vcmp.eq.s32.totalorder %v632, 5
        %vm757 = vcmp.eq.s32.totalorder %v633, 5
        %v758 = vsel %vm756, 1, 0
        %v759 = vsel %vm757, 1, 0
        %v760 = vcvt.s32.f32 %v758
        %v761 = vcvt.s32.f32 %v759
        %763 = vset.pattern.permute.xlu0 0
        %764 = vperm.xlu0 %763, %v760
        %v765 = vpop.permute.xlu0 %764
        %768 = vset.pattern.permute.xlu0 0
        %769 = vperm.xlu0 %768, %v761
        %v770 = vpop.permute.xlu0 %769
        %v772 = vlaneseq
        %v773 = vshrl.u32 %v772, 7
        %v774 = vsub.s32 5, %v773
        %v775 = vrot.slane %v634, %v774
        %v776 = vmul.f32 %v765, %v775
        %v777 = vmul.f32 %v770, %v775
        %v778 = vadd.f32 %v754, %v776
        %v779 = vadd.f32 %v755, %v777
        %vm780 = vcmp.eq.s32.totalorder %v632, 6
        %vm781 = vcmp.eq.s32.totalorder %v633, 6
        %v782 = vsel %vm780, 1, 0
        %v783 = vsel %vm781, 1, 0
        %v784 = vcvt.s32.f32 %v782
        %v785 = vcvt.s32.f32 %v783
        %787 = vset.pattern.permute.xlu0 0
        %788 = vperm.xlu0 %787, %v784
        %v789 = vpop.permute.xlu0 %788
        %792 = vset.pattern.permute.xlu0 0
        %793 = vperm.xlu0 %792, %v785
        %v794 = vpop.permute.xlu0 %793
        %v796 = vlaneseq
        %v797 = vshrl.u32 %v796, 7
        %v798 = vsub.s32 6, %v797
        %v799 = vrot.slane %v634, %v798
        %v800 = vmul.f32 %v789, %v799
        %v801 = vmul.f32 %v794, %v799
        %v802 = vadd.f32 %v778, %v800
        %v803 = vadd.f32 %v779, %v801
        %vm804 = vcmp.eq.s32.totalorder %v632, 7
        %vm805 = vcmp.eq.s32.totalorder %v633, 7
        %v806 = vsel %vm804, 1, 0
        %v807 = vsel %vm805, 1, 0
        %v808 = vcvt.s32.f32 %v806
        %v809 = vcvt.s32.f32 %v807
        %811 = vset.pattern.permute.xlu0 0
        %812 = vperm.xlu0 %811, %v808
        %v813 = vpop.permute.xlu0 %812
        %816 = vset.pattern.permute.xlu0 0
        %817 = vperm.xlu0 %816, %v809
        %v818 = vpop.permute.xlu0 %817
        %v820 = vlaneseq
        %v821 = vshrl.u32 %v820, 7
        %v822 = vsub.s32 7, %v821
        %v823 = vrot.slane %v634, %v822
        %v824 = vmul.f32 %v813, %v823
        %v825 = vmul.f32 %v818, %v823
        %v826 = vadd.f32 %v802, %v824
        %v827 = vadd.f32 %v803, %v825
        %vm828 = vcmp.eq.s32.totalorder %v632, 8
        %vm829 = vcmp.eq.s32.totalorder %v633, 8
        %v830 = vsel %vm828, 1, 0
        %v831 = vsel %vm829, 1, 0
        %v832 = vcvt.s32.f32 %v830
        %v833 = vcvt.s32.f32 %v831
        %835 = vset.pattern.permute.xlu0 0
        %836 = vperm.xlu0 %835, %v832
        %v837 = vpop.permute.xlu0 %836
        %840 = vset.pattern.permute.xlu0 0
        %841 = vperm.xlu0 %840, %v833
        %v842 = vpop.permute.xlu0 %841
        %v844 = vlaneseq
        %v845 = vshrl.u32 %v844, 7
        %v846 = vsub.s32 0, %v845
        %v847 = vrot.slane %v635, %v846
        %v848 = vmul.f32 %v837, %v847
        %v849 = vmul.f32 %v842, %v847
        %v850 = vadd.f32 %v826, %v848
        %v851 = vadd.f32 %v827, %v849
        %vm852 = vcmp.eq.s32.totalorder %v632, 9
        %vm853 = vcmp.eq.s32.totalorder %v633, 9
        %v854 = vsel %vm852, 1, 0
        %v855 = vsel %vm853, 1, 0
        %v856 = vcvt.s32.f32 %v854
        %v857 = vcvt.s32.f32 %v855
        %859 = vset.pattern.permute.xlu0 0
        %860 = vperm.xlu0 %859, %v856
        %v861 = vpop.permute.xlu0 %860
        %864 = vset.pattern.permute.xlu0 0
        %865 = vperm.xlu0 %864, %v857
        %v866 = vpop.permute.xlu0 %865
        %v868 = vlaneseq
        %v869 = vshrl.u32 %v868, 7
        %v870 = vsub.s32 1, %v869
        %v871 = vrot.slane %v635, %v870
        %v872 = vmul.f32 %v861, %v871
        %v873 = vmul.f32 %v866, %v871
        %v874 = vadd.f32 %v850, %v872
        %v875 = vadd.f32 %v851, %v873
        %vm876 = vcmp.eq.s32.totalorder %v632, 10
        %vm877 = vcmp.eq.s32.totalorder %v633, 10
        %v878 = vsel %vm876, 1, 0
        %v879 = vsel %vm877, 1, 0
        %v880 = vcvt.s32.f32 %v878
        %v881 = vcvt.s32.f32 %v879
        %883 = vset.pattern.permute.xlu0 0
        %884 = vperm.xlu0 %883, %v880
        %v885 = vpop.permute.xlu0 %884
        %888 = vset.pattern.permute.xlu0 0
        %889 = vperm.xlu0 %888, %v881
        %v890 = vpop.permute.xlu0 %889
        %v892 = vlaneseq
        %v893 = vshrl.u32 %v892, 7
        %v894 = vsub.s32 2, %v893
        %v895 = vrot.slane %v635, %v894
        %v896 = vmul.f32 %v885, %v895
        %v897 = vmul.f32 %v890, %v895
        %v898 = vadd.f32 %v874, %v896
        %v899 = vadd.f32 %v875, %v897
        %vm900 = vcmp.eq.s32.totalorder %v632, 11
        %vm901 = vcmp.eq.s32.totalorder %v633, 11
        %v902 = vsel %vm900, 1, 0
        %v903 = vsel %vm901, 1, 0
        %v904 = vcvt.s32.f32 %v902
        %v905 = vcvt.s32.f32 %v903
        %907 = vset.pattern.permute.xlu0 0
        %908 = vperm.xlu0 %907, %v904
        %v909 = vpop.permute.xlu0 %908
        %912 = vset.pattern.permute.xlu0 0
        %913 = vperm.xlu0 %912, %v905
        %v914 = vpop.permute.xlu0 %913
        %v916 = vlaneseq
        %v917 = vshrl.u32 %v916, 7
        %v918 = vsub.s32 3, %v917
        %v919 = vrot.slane %v635, %v918
        %v920 = vmul.f32 %v909, %v919
        %v921 = vmul.f32 %v914, %v919
        %v922 = vadd.f32 %v898, %v920
        %v923 = vadd.f32 %v899, %v921
        %vm924 = vcmp.eq.s32.totalorder %v632, 12
        %vm925 = vcmp.eq.s32.totalorder %v633, 12
        %v926 = vsel %vm924, 1, 0
        %v927 = vsel %vm925, 1, 0
        %v928 = vcvt.s32.f32 %v926
        %v929 = vcvt.s32.f32 %v927
        %931 = vset.pattern.permute.xlu0 0
        %932 = vperm.xlu0 %931, %v928
        %v933 = vpop.permute.xlu0 %932
        %936 = vset.pattern.permute.xlu0 0
        %937 = vperm.xlu0 %936, %v929
        %v938 = vpop.permute.xlu0 %937
        %v940 = vlaneseq
        %v941 = vshrl.u32 %v940, 7
        %v942 = vsub.s32 4, %v941
        %v943 = vrot.slane %v635, %v942
        %v944 = vmul.f32 %v933, %v943
        %v945 = vmul.f32 %v938, %v943
        %v946 = vadd.f32 %v922, %v944
        %v947 = vadd.f32 %v923, %v945
        %vm948 = vcmp.eq.s32.totalorder %v632, 13
        %vm949 = vcmp.eq.s32.totalorder %v633, 13
        %v950 = vsel %vm948, 1, 0
        %v951 = vsel %vm949, 1, 0
        %v952 = vcvt.s32.f32 %v950
        %v953 = vcvt.s32.f32 %v951
        %955 = vset.pattern.permute.xlu0 0
        %956 = vperm.xlu0 %955, %v952
        %v957 = vpop.permute.xlu0 %956
        %960 = vset.pattern.permute.xlu0 0
        %961 = vperm.xlu0 %960, %v953
        %v962 = vpop.permute.xlu0 %961
        %v964 = vlaneseq
        %v965 = vshrl.u32 %v964, 7
        %v966 = vsub.s32 5, %v965
        %v967 = vrot.slane %v635, %v966
        %v968 = vmul.f32 %v957, %v967
        %v969 = vmul.f32 %v962, %v967
        %v970 = vadd.f32 %v946, %v968
        %v971 = vadd.f32 %v947, %v969
        %vm972 = vcmp.eq.s32.totalorder %v632, 14
        %vm973 = vcmp.eq.s32.totalorder %v633, 14
        %v974 = vsel %vm972, 1, 0
        %v975 = vsel %vm973, 1, 0
        %v976 = vcvt.s32.f32 %v974
        %v977 = vcvt.s32.f32 %v975
        %979 = vset.pattern.permute.xlu0 0
        %980 = vperm.xlu0 %979, %v976
        %v981 = vpop.permute.xlu0 %980
        %984 = vset.pattern.permute.xlu0 0
        %985 = vperm.xlu0 %984, %v977
        %v986 = vpop.permute.xlu0 %985
        %v988 = vlaneseq
        %v989 = vshrl.u32 %v988, 7
        %v990 = vsub.s32 6, %v989
        %v991 = vrot.slane %v635, %v990
        %v992 = vmul.f32 %v981, %v991
        %v993 = vmul.f32 %v986, %v991
        %v994 = vadd.f32 %v970, %v992
        %v995 = vadd.f32 %v971, %v993
        %vm996 = vcmp.eq.s32.totalorder %v632, 15
        %vm997 = vcmp.eq.s32.totalorder %v633, 15
        %v998 = vsel %vm996, 1, 0
        %v999 = vsel %vm997, 1, 0
        %v1000 = vcvt.s32.f32 %v998
        %v1001 = vcvt.s32.f32 %v999
        %1003 = vset.pattern.permute.xlu0 0
        %1004 = vperm.xlu0 %1003, %v1000
        %v1005 = vpop.permute.xlu0 %1004
        %1008 = vset.pattern.permute.xlu0 0
        %1009 = vperm.xlu0 %1008, %v1001
        %v1010 = vpop.permute.xlu0 %1009
        %v1012 = vlaneseq
        %v1013 = vshrl.u32 %v1012, 7
        %v1014 = vsub.s32 7, %v1013
        %v1015 = vrot.slane %v635, %v1014
        %v1016 = vmul.f32 %v1005, %v1015
        %v1017 = vmul.f32 %v1010, %v1015
        %v1018 = vadd.f32 %v994, %v1016
        %v1019 = vadd.f32 %v995, %v1017
        %v1020 = vld [vmem:[%s2] sm:$0x1]
        %v1021 = vld [vmem:[%s3] sm:$0x1]
        %vm1022 = vcmask 261120
        %v1023 = vsel %vm1022, %v1018, 0.0
        %1024 = vadd.xlane.f32.xlu0 %v1023
        %v1025 = vpop.xlane.xlu0 %1024
        %v1026 = vsel %vm1022, %v1019, 0.0
        %1027 = vadd.xlane.f32.xlu0 %v1026
        %v1028 = vpop.xlane.xlu0 %1027
        %v1029 = vmul.f32 %v1018, %v1018
        %v1030 = vmul.f32 %v1019, %v1019
        %v1031 = vsel %vm1022, %v1029, 0.0
        %1032 = vadd.xlane.f32.xlu0 %v1031
        %v1033 = vpop.xlane.xlu0 %1032
        %v1034 = vsel %vm1022, %v1030, 0.0
        %1035 = vadd.xlane.f32.xlu0 %v1034
        %v1036 = vpop.xlane.xlu0 %1035
        %v1037 = vmul.f32 %v1025, 0.03125
        %v1038 = vmul.f32 %v1028, 0.03125
        %v1039 = vmul.f32 %v1033, 0.03125
        %v1040 = vmul.f32 %v1036, 0.03125
        %v1041 = vmul.f32 %v1037, %v1037
        %v1042 = vmul.f32 %v1038, %v1038
        %v1043 = vsub.f32 %v1039, %v1041
        %v1044 = vsub.f32 %v1040, %v1042
        %v1045 = vsub.f32 %v1018, %v1037
        %v1046 = vsub.f32 %v1019, %v1038
        %v1047 = vadd.f32 %v1043, 1e-05
        %v1048 = vadd.f32 %v1044, 1e-05
        %v1049 = vrsqrt.pop %v1047
        %v1050 = vrsqrt.pop %v1048
        %v1051 = vmul.f32 %v1045, %v1049
        %v1052 = vmul.f32 %v1046, %v1050
        %v1053 = vlaneseq
        %v1054 = vshrl.u32 %v1053, 7
        %v1055 = vsub.s32 0, %v1054
        %v1056 = vrot.slane %v1020, %v1055
        %v1057 = vmul.f32 %v1051, %v1056
        %v1058 = vmul.f32 %v1052, %v1056
        %v1059 = vlaneseq
        %v1060 = vshrl.u32 %v1059, 7
        %v1061 = vsub.s32 0, %v1060
        %v1062 = vrot.slane %v1021, %v1061
        %v1063 = vadd.f32 %v1057, %v1062
        %v1064 = vadd.f32 %v1058, %v1062
        %v1065 = vld [vmem:[%s4] sm:$0xf]
        %v1066 = vld [vmem:[%s4 + $0x4] sm:$0xf]
        %v1067 = vld [vmem:[%s4 + $0x8] sm:$0xf]
        %v1068 = vld [vmem:[%s4 + $0xc] sm:$0xf]
        %v1069 = vld [vmem:[%s5] sm:$0x1]
        %v1070 = vpack.c.bf16 %v1064, %v1063
        %v1071 = vlaneseq
        %v1072 = vshrl.u32 %v1071, 7
        %v1073 = vsub.s32 0, %v1072
        %v1074 = vrot.slane %v1069, %v1073
        %v1079 = vunpack.c.l.b16 %v1065
        %v1080 = vunpack.c.l.b16 %v1066
        %v1081 = vunpack.c.l.b16 %v1067
        %v1082 = vunpack.c.l.b16 %v1068
        %v1083 = vpack.c.b16 %v1080, %v1079
        %v1084 = vpack.c.b16 %v1082, %v1081
        %v1088 = vsel %vm1022, %v1070, 0
        %1090 = vmatprep.subr.bf16.mxu0 0
        %1091 = vmatpush1.bf16.msra.mxu0 %v1083
        %1092 = vmatprep.subr.bf16.mxu0 0
        %1093 = vmatpush1.bf16.msra.mxu0 %v1084
        %1094 = vmatprep.subr.bf16.mxu0 0
        %1095 = vmatpush1.bf16.msra.mxu0 0
        %1096 = vmatprep.subr.bf16.mxu0 0
        %1097 = vmatpush1.bf16.msra.mxu0 0
        %1098 = vmatprep.subr.bf16.mxu0 0
        %1099 = vmatpush1.bf16.msra.mxu0 0
        %1100 = vmatprep.subr.bf16.mxu0 0
        %1101 = vmatpush1.bf16.msra.mxu0 0
        %1102 = vmatprep.subr.bf16.mxu0 0
        %1103 = vmatpush1.bf16.msra.mxu0 0
        %1104 = vmatprep.subr.bf16.mxu0 0
        %1105 = vmatpush1.bf16.msra.mxu0 0
        %1106 = vmatprep.subr.bf16.mxu0 0
        %1107 = vmatpush1.bf16.msra.mxu0 0
        %1108 = vmatprep.subr.bf16.mxu0 0
        %1109 = vmatpush1.bf16.msra.mxu0 0
        %1110 = vmatprep.subr.bf16.mxu0 0
        %1111 = vmatpush1.bf16.msra.mxu0 0
        %1112 = vmatprep.subr.bf16.mxu0 0
        %1113 = vmatpush1.bf16.msra.mxu0 0
        %1114 = vmatprep.subr.bf16.mxu0 0
        %1115 = vmatpush1.bf16.msra.mxu0 0
        %1116 = vmatprep.subr.bf16.mxu0 0
        %1117 = vmatpush1.bf16.msra.mxu0 0
        %1118 = vmatprep.subr.bf16.mxu0 0
        %1119 = vmatpush1.bf16.msra.mxu0 0
        %1120 = vmatprep.subr.bf16.mxu0 0
        %1121 = vmatpush1.bf16.msra.mxu0 0
        %1122 = vmatprep.mubr.bf16.mxu0 0
        %1123 = vmatmul.mubr.bf16.gmra.mrb[0].mxu0 %v1088
        %v1124 = vpop.f32.mrb[0].mxu0
        %v1125 = vadd.f32 %v1074, %v1124
        %v1126 = vpop.f32.mrb[0].mxu0
        %v1127 = vpop.f32.mrb[0].mxu0
        %v1128 = vadd.f32 %v1074, %v1127
        %v1129 = vpop.f32.mrb[0].mxu0
        %1130 = vdwg.mxu0
        %v1131 = vld [vmem:[%s6] sm:$0x7]
        %vm1134 = vcmask 1041408
        %v1135 = vrot.slane %v1125, 6
        %v1136 = vrot.slane %v1128, 6
        %v1137 = vsel %vm1134, %v1135, %v1136
        %v1141 = vsel %vm1134, 0.0, %v1135
        %v1142 = vlaneseq
        %v1143 = vshrl.u32 %v1142, 7
        %v1144 = vsub.s32 0, %v1143
        %v1145 = vrot.slane %v1131, %v1144
        %v1146 = vmul.f32 %v1145, %v1125
        %v1147 = vmul.f32 %v1145, %v1128
        %v1148 = vlaneseq
        %v1149 = vshrl.u32 %v1148, 7
        %v1150 = vsub.s32 1, %v1149
        %v1151 = vrot.slane %v1131, %v1150
        %v1152 = vmul.f32 %v1151, %v1141
        %v1153 = vmul.f32 %v1151, %v1137
        %v1154 = vmul.f32 %v1151, %v1136
        %vm1158 = vcmask 1046528
        %v1159 = vrot.slane %v1152, 1
        %v1160 = vrot.slane %v1153, 1
        %v1161 = vsel %vm1158, %v1159, %v1160
        %v1162 = vrot.slane %v1154, 1
        %v1163 = vsel %vm1158, %v1160, %v1162
        %v1166 = vadd.f32 %v1146, %v1161
        %v1167 = vadd.f32 %v1147, %v1163
        %v1168 = vlaneseq
        %v1169 = vshrl.u32 %v1168, 7
        %v1170 = vsub.s32 2, %v1169
        %v1171 = vrot.slane %v1131, %v1170
        %v1172 = vmul.f32 %v1171, %v1141
        %v1173 = vmul.f32 %v1171, %v1137
        %v1174 = vadd.f32 %v1166, %v1172
        %v1175 = vadd.f32 %v1167, %v1173
        %v1176 = vld [vmem:[%s7] sm:$0x1]
        %v1177 = vlaneseq
        %v1178 = vshrl.u32 %v1177, 7
        %v1179 = vsub.s32 0, %v1178
        %v1180 = vrot.slane %v1176, %v1179
        %v1181 = vadd.f32 %v1174, %v1180
        %v1182 = vadd.f32 %v1175, %v1180
        %1185 = vrot.lane.b32.xlu0 %v1181, 32
        %v1186 = vpop.permute.xlu0 %1185
        %1187 = vrot.lane.b32.xlu0 %v1182, 32
        %v1188 = vpop.permute.xlu0 %1187
        %v1191 = vmul.f32 %v1181, %v1186
        %v1192 = vmul.f32 %v1182, %v1188
        %v1193 = vld [vmem:[%s8] sm:$0xff]
        %v1194 = vld [vmem:[%s8 + $0x8] sm:$0xff]
        %v1197 = vrot.slane %v1191, 1
        %v1198 = vrot.slane %v1192, 1
        %v1199 = vsel %vm1158, %v1197, %v1198
        %1200 = vrot.lane.b32.xlu0 %v1197, 64
        %v1201 = vpop.permute.xlu0 %1200
        %1202 = vrot.lane.b32.xlu0 %v1199, 64
        %v1203 = vpop.permute.xlu0 %1202
        %1204 = vrot.lane.b32.xlu0 %v1198, 64
        %v1205 = vpop.permute.xlu0 %1204
        %v1209 = vsel %vm1158, 0.0, %v1201
        %v1210 = vlaneseq
        %v1211 = vshrl.u32 %v1210, 7
        %v1212 = vsub.s32 0, %v1211
        %v1213 = vrot.slane %v1193, %v1212
        %1214 = vrot.lane.b32.xlu0 %v1191, 64
        %v1215 = vpop.permute.xlu0 %1214
        %1216 = vrot.lane.b32.xlu0 %v1192, 64
        %v1217 = vpop.permute.xlu0 %1216
        %v1220 = vmul.f32 %v1213, %v1215
        %v1221 = vmul.f32 %v1213, %v1217
        %v1222 = vlaneseq
        %v1223 = vshrl.u32 %v1222, 7
        %v1224 = vsub.s32 1, %v1223
        %v1225 = vrot.slane %v1193, %v1224
        %v1226 = vmul.f32 %v1225, %v1209
        %v1227 = vmul.f32 %v1225, %v1203
        %v1228 = vmul.f32 %v1225, %v1205
        %v1232 = vrot.slane %v1226, 6
        %v1233 = vrot.slane %v1227, 6
        %v1234 = vsel %vm1134, %v1232, %v1233
        %v1235 = vrot.slane %v1228, 6
        %v1236 = vsel %vm1134, %v1233, %v1235
        %v1239 = vadd.f32 %v1220, %v1234
        %v1240 = vadd.f32 %v1221, %v1236
        %v1241 = vlaneseq
        %v1242 = vshrl.u32 %v1241, 7
        %v1243 = vsub.s32 2, %v1242
        %v1244 = vrot.slane %v1193, %v1243
        %v1245 = vmul.f32 %v1244, %v1209
        %v1246 = vmul.f32 %v1244, %v1203
        %v1247 = vmul.f32 %v1244, %v1205
        %vm1251 = vcmask 1042432
        %v1252 = vrot.slane %v1245, 5
        %v1253 = vrot.slane %v1246, 5
        %v1254 = vsel %vm1251, %v1252, %v1253
        %v1255 = vrot.slane %v1247, 5
        %v1256 = vsel %vm1251, %v1253, %v1255
        %v1259 = vadd.f32 %v1239, %v1254
        %v1260 = vadd.f32 %v1240, %v1256
        %v1261 = vlaneseq
        %v1262 = vshrl.u32 %v1261, 7
        %v1263 = vsub.s32 3, %v1262
        %v1264 = vrot.slane %v1193, %v1263
        %v1265 = vmul.f32 %v1264, %v1209
        %v1266 = vmul.f32 %v1264, %v1203
        %v1267 = vmul.f32 %v1264, %v1205
        %vm1271 = vcmask 1043456
        %v1272 = vrot.slane %v1265, 4
        %v1273 = vrot.slane %v1266, 4
        %v1274 = vsel %vm1271, %v1272, %v1273
        %v1275 = vrot.slane %v1267, 4
        %v1276 = vsel %vm1271, %v1273, %v1275
        %v1279 = vadd.f32 %v1259, %v1274
        %v1280 = vadd.f32 %v1260, %v1276
        %v1281 = vlaneseq
        %v1282 = vshrl.u32 %v1281, 7
        %v1283 = vsub.s32 4, %v1282
        %v1284 = vrot.slane %v1193, %v1283
        %v1285 = vmul.f32 %v1284, %v1209
        %v1286 = vmul.f32 %v1284, %v1203
        %v1287 = vmul.f32 %v1284, %v1205
        %vm1291 = vcmask 1044480
        %v1292 = vrot.slane %v1285, 3
        %v1293 = vrot.slane %v1286, 3
        %v1294 = vsel %vm1291, %v1292, %v1293
        %v1295 = vrot.slane %v1287, 3
        %v1296 = vsel %vm1291, %v1293, %v1295
        %v1299 = vadd.f32 %v1279, %v1294
        %v1300 = vadd.f32 %v1280, %v1296
        %v1301 = vlaneseq
        %v1302 = vshrl.u32 %v1301, 7
        %v1303 = vsub.s32 5, %v1302
        %v1304 = vrot.slane %v1193, %v1303
        %v1305 = vmul.f32 %v1304, %v1209
        %v1306 = vmul.f32 %v1304, %v1203
        %v1307 = vmul.f32 %v1304, %v1205
        %vm1311 = vcmask 1045504
        %v1312 = vrot.slane %v1305, 2
        %v1313 = vrot.slane %v1306, 2
        %v1314 = vsel %vm1311, %v1312, %v1313
        %v1315 = vrot.slane %v1307, 2
        %v1316 = vsel %vm1311, %v1313, %v1315
        %v1319 = vadd.f32 %v1299, %v1314
        %v1320 = vadd.f32 %v1300, %v1316
        %v1321 = vlaneseq
        %v1322 = vshrl.u32 %v1321, 7
        %v1323 = vsub.s32 6, %v1322
        %v1324 = vrot.slane %v1193, %v1323
        %v1325 = vmul.f32 %v1324, %v1209
        %v1326 = vmul.f32 %v1324, %v1203
        %v1327 = vmul.f32 %v1324, %v1205
        %v1331 = vrot.slane %v1325, 1
        %v1332 = vrot.slane %v1326, 1
        %v1333 = vsel %vm1158, %v1331, %v1332
        %v1334 = vrot.slane %v1327, 1
        %v1335 = vsel %vm1158, %v1332, %v1334
        %v1338 = vadd.f32 %v1319, %v1333
        %v1339 = vadd.f32 %v1320, %v1335
        %v1340 = vlaneseq
        %v1341 = vshrl.u32 %v1340, 7
        %v1342 = vsub.s32 7, %v1341
        %v1343 = vrot.slane %v1193, %v1342
        %v1344 = vmul.f32 %v1343, %v1209
        %v1345 = vmul.f32 %v1343, %v1203
        %v1346 = vadd.f32 %v1338, %v1344
        %v1347 = vadd.f32 %v1339, %v1345
        %v1348 = vlaneseq
        %v1349 = vshrl.u32 %v1348, 7
        %v1350 = vsub.s32 0, %v1349
        %v1351 = vrot.slane %v1194, %v1350
        %v1352 = vmul.f32 %v1351, 0.0
        %v1353 = vmul.f32 %v1351, %v1209
        %v1354 = vmul.f32 %v1351, %v1203
        %vm1358 = vcmask 1040384
        %v1359 = vrot.slane %v1352, 7
        %v1360 = vrot.slane %v1353, 7
        %v1361 = vsel %vm1358, %v1359, %v1360
        %v1362 = vrot.slane %v1354, 7
        %v1363 = vsel %vm1358, %v1360, %v1362
        %v1366 = vadd.f32 %v1346, %v1361
        %v1367 = vadd.f32 %v1347, %v1363
        %v1368 = vlaneseq
        %v1369 = vshrl.u32 %v1368, 7
        %v1370 = vsub.s32 1, %v1369
        %v1371 = vrot.slane %v1194, %v1370
        %v1372 = vmul.f32 %v1371, 0.0
        %v1373 = vmul.f32 %v1371, %v1209
        %v1374 = vmul.f32 %v1371, %v1203
        %v1378 = vrot.slane %v1372, 6
        %v1379 = vrot.slane %v1373, 6
        %v1380 = vsel %vm1134, %v1378, %v1379
        %v1381 = vrot.slane %v1374, 6
        %v1382 = vsel %vm1134, %v1379, %v1381
        %v1385 = vadd.f32 %v1366, %v1380
        %v1386 = vadd.f32 %v1367, %v1382
        %v1387 = vlaneseq
        %v1388 = vshrl.u32 %v1387, 7
        %v1389 = vsub.s32 2, %v1388
        %v1390 = vrot.slane %v1194, %v1389
        %v1391 = vmul.f32 %v1390, 0.0
        %v1392 = vmul.f32 %v1390, %v1209
        %v1393 = vmul.f32 %v1390, %v1203
        %v1397 = vrot.slane %v1391, 5
        %v1398 = vrot.slane %v1392, 5
        %v1399 = vsel %vm1251, %v1397, %v1398
        %v1400 = vrot.slane %v1393, 5
        %v1401 = vsel %vm1251, %v1398, %v1400
        %v1404 = vadd.f32 %v1385, %v1399
        %v1405 = vadd.f32 %v1386, %v1401
        %v1406 = vlaneseq
        %v1407 = vshrl.u32 %v1406, 7
        %v1408 = vsub.s32 3, %v1407
        %v1409 = vrot.slane %v1194, %v1408
        %v1410 = vmul.f32 %v1409, 0.0
        %v1411 = vmul.f32 %v1409, %v1209
        %v1412 = vmul.f32 %v1409, %v1203
        %v1416 = vrot.slane %v1410, 4
        %v1417 = vrot.slane %v1411, 4
        %v1418 = vsel %vm1271, %v1416, %v1417
        %v1419 = vrot.slane %v1412, 4
        %v1420 = vsel %vm1271, %v1417, %v1419
        %v1423 = vadd.f32 %v1404, %v1418
        %v1424 = vadd.f32 %v1405, %v1420
        %v1425 = vlaneseq
        %v1426 = vshrl.u32 %v1425, 7
        %v1427 = vsub.s32 4, %v1426
        %v1428 = vrot.slane %v1194, %v1427
        %v1429 = vmul.f32 %v1428, 0.0
        %v1430 = vmul.f32 %v1428, %v1209
        %v1431 = vmul.f32 %v1428, %v1203
        %v1435 = vrot.slane %v1429, 3
        %v1436 = vrot.slane %v1430, 3
        %v1437 = vsel %vm1291, %v1435, %v1436
        %v1438 = vrot.slane %v1431, 3
        %v1439 = vsel %vm1291, %v1436, %v1438
        %v1442 = vadd.f32 %v1423, %v1437
        %v1443 = vadd.f32 %v1424, %v1439
        %v1444 = vlaneseq
        %v1445 = vshrl.u32 %v1444, 7
        %v1446 = vsub.s32 5, %v1445
        %v1447 = vrot.slane %v1194, %v1446
        %v1448 = vmul.f32 %v1447, 0.0
        %v1449 = vmul.f32 %v1447, %v1209
        %v1450 = vmul.f32 %v1447, %v1203
        %v1454 = vrot.slane %v1448, 2
        %v1455 = vrot.slane %v1449, 2
        %v1456 = vsel %vm1311, %v1454, %v1455
        %v1457 = vrot.slane %v1450, 2
        %v1458 = vsel %vm1311, %v1455, %v1457
        %v1461 = vadd.f32 %v1442, %v1456
        %v1462 = vadd.f32 %v1443, %v1458
        %v1463 = vlaneseq
        %v1464 = vshrl.u32 %v1463, 7
        %v1465 = vsub.s32 6, %v1464
        %v1466 = vrot.slane %v1194, %v1465
        %v1467 = vmul.f32 %v1466, 0.0
        %v1468 = vmul.f32 %v1466, %v1209
        %v1469 = vmul.f32 %v1466, %v1203
        %v1473 = vrot.slane %v1467, 1
        %v1474 = vrot.slane %v1468, 1
        %v1475 = vsel %vm1158, %v1473, %v1474
        %v1476 = vrot.slane %v1469, 1
        %v1477 = vsel %vm1158, %v1474, %v1476
        %v1480 = vadd.f32 %v1461, %v1475
        %v1481 = vadd.f32 %v1462, %v1477
        %v1482 = vlaneseq
        %v1483 = vshrl.u32 %v1482, 7
        %v1484 = vsub.s32 7, %v1483
        %v1485 = vrot.slane %v1194, %v1484
        %v1486 = vmul.f32 %v1485, 0.0
        %v1487 = vmul.f32 %v1485, %v1209
        %v1488 = vadd.f32 %v1480, %v1486
        %v1489 = vadd.f32 %v1481, %v1487
        %v1490 = vld [vmem:[%s9] sm:$0x1]
        %v1491 = vlaneseq
        %v1492 = vshrl.u32 %v1491, 7
        %v1493 = vsub.s32 0, %v1492
        %v1494 = vrot.slane %v1490, %v1493
        %1496 = vrot.lane.b32.xlu0 %v1494, 64
        %v1497 = vpop.permute.xlu0 %1496
        %v1499 = vmul.f32 %v1191, %v1497
        %v1500 = vmul.f32 %v1192, %v1497
        %1503 = vrot.lane.b32.xlu0 %v1499, 64
        %v1504 = vpop.permute.xlu0 %1503
        %1505 = vrot.lane.b32.xlu0 %v1500, 64
        %v1506 = vpop.permute.xlu0 %1505
        %v1509 = vadd.f32 %v1488, %v1504
        %v1510 = vadd.f32 %v1489, %v1506
        %v1511 = vmul.f32 %v1509, %v1181
        %v1512 = vmul.f32 %v1510, %v1182
        %v1513 = vld [vmem:[%s10] sm:$0xf]
        %v1514 = vld [vmem:[%s10 + $0x4] sm:$0xf]
        %v1515 = vld [vmem:[%s10 + $0x8] sm:$0xf]
        %v1516 = vld [vmem:[%s10 + $0xc] sm:$0xf]
        %v1517 = vld [vmem:[%s11] sm:$0x1]
        %v1518 = vpack.c.bf16 %v1512, %v1511
        %v1519 = vlaneseq
        %v1520 = vshrl.u32 %v1519, 7
        %v1521 = vsub.s32 0, %v1520
        %v1522 = vrot.slane %v1517, %v1521
        %v1527 = vunpack.c.l.b16 %v1513
        %v1528 = vunpack.c.l.b16 %v1514
        %v1529 = vunpack.c.l.b16 %v1515
        %v1530 = vunpack.c.l.b16 %v1516
        %v1531 = vpack.c.b16 %v1528, %v1527
        %v1532 = vpack.c.b16 %v1530, %v1529
        %v1536 = vsel %vm1022, %v1518, 0
        %1538 = vmatprep.subr.bf16.mxu0 0
        %1539 = vmatpush1.bf16.msra.mxu0 %v1531
        %1540 = vmatprep.subr.bf16.mxu0 0
        %1541 = vmatpush1.bf16.msra.mxu0 %v1532
        %1542 = vmatprep.subr.bf16.mxu0 0
        %1543 = vmatpush1.bf16.msra.mxu0 0
        %1544 = vmatprep.subr.bf16.mxu0 0
        %1545 = vmatpush1.bf16.msra.mxu0 0
        %1546 = vmatprep.subr.bf16.mxu0 0
        %1547 = vmatpush1.bf16.msra.mxu0 0
        %1548 = vmatprep.subr.bf16.mxu0 0
        %1549 = vmatpush1.bf16.msra.mxu0 0
        %1550 = vmatprep.subr.bf16.mxu0 0
        %1551 = vmatpush1.bf16.msra.mxu0 0
        %1552 = vmatprep.subr.bf16.mxu0 0
        %1553 = vmatpush1.bf16.msra.mxu0 0
        %1554 = vmatprep.subr.bf16.mxu0 0
        %1555 = vmatpush1.bf16.msra.mxu0 0
        %1556 = vmatprep.subr.bf16.mxu0 0
        %1557 = vmatpush1.bf16.msra.mxu0 0
        %1558 = vmatprep.subr.bf16.mxu0 0
        %1559 = vmatpush1.bf16.msra.mxu0 0
        %1560 = vmatprep.subr.bf16.mxu0 0
        %1561 = vmatpush1.bf16.msra.mxu0 0
        %1562 = vmatprep.subr.bf16.mxu0 0
        %1563 = vmatpush1.bf16.msra.mxu0 0
        %1564 = vmatprep.subr.bf16.mxu0 0
        %1565 = vmatpush1.bf16.msra.mxu0 0
        %1566 = vmatprep.subr.bf16.mxu0 0
        %1567 = vmatpush1.bf16.msra.mxu0 0
        %1568 = vmatprep.subr.bf16.mxu0 0
        %1569 = vmatpush1.bf16.msra.mxu0 0
        %1570 = vmatprep.mubr.bf16.mxu0 0
        %1571 = vmatmul.mubr.bf16.gmra.mrb[0].mxu0 %v1536
        %v1572 = vpop.f32.mrb[0].mxu0
        %v1573 = vadd.f32 %v1522, %v1572
        %v1574 = vpop.f32.mrb[0].mxu0
        %v1575 = vpop.f32.mrb[0].mxu0
        %v1576 = vadd.f32 %v1522, %v1575
        %v1577 = vpop.f32.mrb[0].mxu0
        %1578 = vdwg.mxu0
        %v1579 = vadd.f32 %v1573, %v1018
        %v1580 = vadd.f32 %v1576, %v1019
        %v1581 = vld [vmem:[%s12] sm:$0x1]
        %v1582 = vld [vmem:[%s13] sm:$0x1]
        %v1583 = vsel %vm1022, %v1579, 0.0
        %1584 = vadd.xlane.f32.xlu0 %v1583
        %v1585 = vpop.xlane.xlu0 %1584
        %v1586 = vsel %vm1022, %v1580, 0.0
        %1587 = vadd.xlane.f32.xlu0 %v1586
        %v1588 = vpop.xlane.xlu0 %1587
        %v1589 = vmul.f32 %v1579, %v1579
        %v1590 = vmul.f32 %v1580, %v1580
        %v1591 = vsel %vm1022, %v1589, 0.0
        %1592 = vadd.xlane.f32.xlu0 %v1591
        %v1593 = vpop.xlane.xlu0 %1592
        %v1594 = vsel %vm1022, %v1590, 0.0
        %1595 = vadd.xlane.f32.xlu0 %v1594
        %v1596 = vpop.xlane.xlu0 %1595
        %v1597 = vmul.f32 %v1585, 0.03125
        %v1598 = vmul.f32 %v1588, 0.03125
        %v1599 = vmul.f32 %v1593, 0.03125
        %v1600 = vmul.f32 %v1596, 0.03125
        %v1601 = vmul.f32 %v1597, %v1597
        %v1602 = vmul.f32 %v1598, %v1598
        %v1603 = vsub.f32 %v1599, %v1601
        %v1604 = vsub.f32 %v1600, %v1602
        %v1605 = vsub.f32 %v1579, %v1597
        %v1606 = vsub.f32 %v1580, %v1598
        %v1607 = vadd.f32 %v1603, 1e-05
        %v1608 = vadd.f32 %v1604, 1e-05
        %v1609 = vrsqrt.pop %v1607
        %v1610 = vrsqrt.pop %v1608
        %v1611 = vmul.f32 %v1605, %v1609
        %v1612 = vmul.f32 %v1606, %v1610
        %v1613 = vlaneseq
        %v1614 = vshrl.u32 %v1613, 7
        %v1615 = vsub.s32 0, %v1614
        %v1616 = vrot.slane %v1581, %v1615
        %v1617 = vmul.f32 %v1611, %v1616
        %v1618 = vmul.f32 %v1612, %v1616
        %v1619 = vlaneseq
        %v1620 = vshrl.u32 %v1619, 7
        %v1621 = vsub.s32 0, %v1620
        %v1622 = vrot.slane %v1582, %v1621
        %v1623 = vadd.f32 %v1617, %v1622
        %v1624 = vadd.f32 %v1618, %v1622
        %v1625 = vld [vmem:[%s14] sm:$0xf]
        %v1626 = vld [vmem:[%s14 + $0x4] sm:$0xf]
        %v1627 = vld [vmem:[%s14 + $0x8] sm:$0xf]
        %v1628 = vld [vmem:[%s14 + $0xc] sm:$0xf]
        %v1629 = vld [vmem:[%s15] sm:$0x1]
        %v1630 = vpack.c.bf16 %v1624, %v1623
        %v1631 = vlaneseq
        %v1632 = vshrl.u32 %v1631, 7
        %v1633 = vsub.s32 0, %v1632
        %v1634 = vrot.slane %v1629, %v1633
        %v1639 = vunpack.c.l.b16 %v1625
        %v1640 = vunpack.c.l.b16 %v1626
        %v1641 = vunpack.c.l.b16 %v1627
        %v1642 = vunpack.c.l.b16 %v1628
        %v1643 = vpack.c.b16 %v1640, %v1639
        %v1644 = vpack.c.b16 %v1642, %v1641
        %v1648 = vsel %vm1022, %v1630, 0
        %1650 = vmatprep.subr.bf16.mxu0 0
        %1651 = vmatpush1.bf16.msra.mxu0 %v1643
        %1652 = vmatprep.subr.bf16.mxu0 0
        %1653 = vmatpush1.bf16.msra.mxu0 %v1644
        %1654 = vmatprep.subr.bf16.mxu0 0
        %1655 = vmatpush1.bf16.msra.mxu0 0
        %1656 = vmatprep.subr.bf16.mxu0 0
        %1657 = vmatpush1.bf16.msra.mxu0 0
        %1658 = vmatprep.subr.bf16.mxu0 0
        %1659 = vmatpush1.bf16.msra.mxu0 0
        %1660 = vmatprep.subr.bf16.mxu0 0
        %1661 = vmatpush1.bf16.msra.mxu0 0
        %1662 = vmatprep.subr.bf16.mxu0 0
        %1663 = vmatpush1.bf16.msra.mxu0 0
        %1664 = vmatprep.subr.bf16.mxu0 0
        %1665 = vmatpush1.bf16.msra.mxu0 0
        %1666 = vmatprep.subr.bf16.mxu0 0
        %1667 = vmatpush1.bf16.msra.mxu0 0
        %1668 = vmatprep.subr.bf16.mxu0 0
        %1669 = vmatpush1.bf16.msra.mxu0 0
        %1670 = vmatprep.subr.bf16.mxu0 0
        %1671 = vmatpush1.bf16.msra.mxu0 0
        %1672 = vmatprep.subr.bf16.mxu0 0
        %1673 = vmatpush1.bf16.msra.mxu0 0
        %1674 = vmatprep.subr.bf16.mxu0 0
        %1675 = vmatpush1.bf16.msra.mxu0 0
        %1676 = vmatprep.subr.bf16.mxu0 0
        %1677 = vmatpush1.bf16.msra.mxu0 0
        %1678 = vmatprep.subr.bf16.mxu0 0
        %1679 = vmatpush1.bf16.msra.mxu0 0
        %1680 = vmatprep.subr.bf16.mxu0 0
        %1681 = vmatpush1.bf16.msra.mxu0 0
        %1682 = vmatprep.mubr.bf16.mxu0 0
        %1683 = vmatmul.mubr.bf16.gmra.mrb[0].mxu0 %v1648
        %v1684 = vpop.f32.mrb[0].mxu0
        %v1685 = vadd.f32 %v1634, %v1684
        %v1686 = vpop.f32.mrb[0].mxu0
        %v1687 = vpop.f32.mrb[0].mxu0
        %v1688 = vadd.f32 %v1634, %v1687
        %v1689 = vpop.f32.mrb[0].mxu0
        %1690 = vdwg.mxu0
        %v1691 = vmul.f32 %v1685, 0.5
        %v1692 = vmul.f32 %v1688, 0.5
        %v1693 = vmul.f32 %v1685, %v1685
        %v1694 = vmul.f32 %v1688, %v1688
        %v1695 = vmul.f32 %v1693, %v1685
        %v1696 = vmul.f32 %v1694, %v1688
        %v1697 = vmul.f32 %v1695, 0.044715
        %v1698 = vmul.f32 %v1696, 0.044715
        %v1699 = vadd.f32 %v1685, %v1697
        %v1700 = vadd.f32 %v1688, %v1698
        %v1701 = vmul.f32 %v1699, 0.7978846
        %v1702 = vmul.f32 %v1700, 0.7978846
        %v1703 = vtanh.pop %v1701
        %v1704 = vtanh.pop %v1702
        %v1705 = vadd.f32 %v1703, 1.0
        %v1706 = vadd.f32 %v1704, 1.0
        %v1707 = vmul.f32 %v1691, %v1705
        %v1708 = vmul.f32 %v1692, %v1706
        %v1709 = vld [vmem:[%s16] sm:$0xf]
        %v1710 = vld [vmem:[%s16 + $0x4] sm:$0xf]
        %v1711 = vld [vmem:[%s16 + $0x8] sm:$0xf]
        %v1712 = vld [vmem:[%s16 + $0xc] sm:$0xf]
        %v1713 = vld [vmem:[%s16 + $0x10] sm:$0xf]
        %v1714 = vld [vmem:[%s16 + $0x14] sm:$0xf]
        %v1715 = vld [vmem:[%s16 + $0x18] sm:$0xf]
        %v1716 = vld [vmem:[%s16 + $0x1c] sm:$0xf]
        %v1717 = vld [vmem:[%s16 + $0x20] sm:$0xf]
        %v1718 = vld [vmem:[%s16 + $0x24] sm:$0xf]
        %v1719 = vld [vmem:[%s16 + $0x28] sm:$0xf]
        %v1720 = vld [vmem:[%s16 + $0x2c] sm:$0xf]
        %v1721 = vld [vmem:[%s16 + $0x30] sm:$0xf]
        %v1722 = vld [vmem:[%s16 + $0x34] sm:$0xf]
        %v1723 = vld [vmem:[%s16 + $0x38] sm:$0xf]
        %v1724 = vld [vmem:[%s16 + $0x3c] sm:$0xf]
        %v1725 = vld [vmem:[%s17] sm:$0x1]
        %v1726 = vpack.c.bf16 %v1708, %v1707
        %v1727 = vlaneseq
        %v1728 = vshrl.u32 %v1727, 7
        %v1729 = vsub.s32 0, %v1728
        %v1730 = vrot.slane %v1725, %v1729
        %v1747 = vunpack.c.l.b16 %v1709
        %v1748 = vunpack.c.l.b16 %v1710
        %v1749 = vunpack.c.l.b16 %v1711
        %v1750 = vunpack.c.l.b16 %v1712
        %v1751 = vunpack.c.l.b16 %v1713
        %v1752 = vunpack.c.l.b16 %v1714
        %v1753 = vunpack.c.l.b16 %v1715
        %v1754 = vunpack.c.l.b16 %v1716
        %v1755 = vunpack.c.l.b16 %v1717
        %v1756 = vunpack.c.l.b16 %v1718
        %v1757 = vunpack.c.l.b16 %v1719
        %v1758 = vunpack.c.l.b16 %v1720
        %v1759 = vunpack.c.l.b16 %v1721
        %v1760 = vunpack.c.l.b16 %v1722
        %v1761 = vunpack.c.l.b16 %v1723
        %v1762 = vunpack.c.l.b16 %v1724
        %v1763 = vpack.c.b16 %v1748, %v1747
        %v1764 = vpack.c.b16 %v1750, %v1749
        %v1765 = vpack.c.b16 %v1752, %v1751
        %v1766 = vpack.c.b16 %v1754, %v1753
        %v1767 = vpack.c.b16 %v1756, %v1755
        %v1768 = vpack.c.b16 %v1758, %v1757
        %v1769 = vpack.c.b16 %v1760, %v1759
        %v1770 = vpack.c.b16 %v1762, %v1761
        %1779 = vmatprep.subr.bf16.mxu0 0
        %1780 = vmatpush1.bf16.msra.mxu0 %v1763
        %1781 = vmatprep.subr.bf16.mxu0 0
        %1782 = vmatpush1.bf16.msra.mxu0 %v1764
        %1783 = vmatprep.subr.bf16.mxu0 0
        %1784 = vmatpush1.bf16.msra.mxu0 %v1765
        %1785 = vmatprep.subr.bf16.mxu0 0
        %1786 = vmatpush1.bf16.msra.mxu0 %v1766
        %1787 = vmatprep.subr.bf16.mxu0 0
        %1788 = vmatpush1.bf16.msra.mxu0 %v1767
        %1789 = vmatprep.subr.bf16.mxu0 0
        %1790 = vmatpush1.bf16.msra.mxu0 %v1768
        %1791 = vmatprep.subr.bf16.mxu0 0
        %1792 = vmatpush1.bf16.msra.mxu0 %v1769
        %1793 = vmatprep.subr.bf16.mxu0 0
        %1794 = vmatpush1.bf16.msra.mxu0 %v1770
        %1795 = vmatprep.subr.bf16.mxu0 0
        %1796 = vmatpush1.bf16.msra.mxu0 0
        %1797 = vmatprep.subr.bf16.mxu0 0
        %1798 = vmatpush1.bf16.msra.mxu0 0
        %1799 = vmatprep.subr.bf16.mxu0 0
        %1800 = vmatpush1.bf16.msra.mxu0 0
        %1801 = vmatprep.subr.bf16.mxu0 0
        %1802 = vmatpush1.bf16.msra.mxu0 0
        %1803 = vmatprep.subr.bf16.mxu0 0
        %1804 = vmatpush1.bf16.msra.mxu0 0
        %1805 = vmatprep.subr.bf16.mxu0 0
        %1806 = vmatpush1.bf16.msra.mxu0 0
        %1807 = vmatprep.subr.bf16.mxu0 0
        %1808 = vmatpush1.bf16.msra.mxu0 0
        %1809 = vmatprep.subr.bf16.mxu0 0
        %1810 = vmatpush1.bf16.msra.mxu0 0
        %1811 = vmatprep.mubr.bf16.mxu0 0
        %1812 = vmatmul.mubr.bf16.gmra.mrb[0].mxu0 %v1726
        %v1813 = vpop.f32.mrb[0].mxu0
        %v1814 = vadd.f32 %v1730, %v1813
        %v1815 = vpop.f32.mrb[0].mxu0
        %v1816 = vpop.f32.mrb[0].mxu0
        %v1817 = vadd.f32 %v1730, %v1816
        %v1818 = vpop.f32.mrb[0].mxu0
        %1819 = vdwg.mxu0
        %v1820 = vadd.f32 %v1814, %v1579
        %v1821 = vadd.f32 %v1817, %v1580
        %v1822 = vld [vmem:[%s2 + $0x1] sm:$0x1]
        %v1823 = vld [vmem:[%s3 + $0x1] sm:$0x1]
        %v1824 = vsel %vm1022, %v1820, 0.0
        %1825 = vadd.xlane.f32.xlu0 %v1824
        %v1826 = vpop.xlane.xlu0 %1825
        %v1827 = vsel %vm1022, %v1821, 0.0
        %1828 = vadd.xlane.f32.xlu0 %v1827
        %v1829 = vpop.xlane.xlu0 %1828
        %v1830 = vmul.f32 %v1820, %v1820
        %v1831 = vmul.f32 %v1821, %v1821
        %v1832 = vsel %vm1022, %v1830, 0.0
        %1833 = vadd.xlane.f32.xlu0 %v1832
        %v1834 = vpop.xlane.xlu0 %1833
        %v1835 = vsel %vm1022, %v1831, 0.0
        %1836 = vadd.xlane.f32.xlu0 %v1835
        %v1837 = vpop.xlane.xlu0 %1836
        %v1838 = vmul.f32 %v1826, 0.03125
        %v1839 = vmul.f32 %v1829, 0.03125
        %v1840 = vmul.f32 %v1834, 0.03125
        %v1841 = vmul.f32 %v1837, 0.03125
        %v1842 = vmul.f32 %v1838, %v1838
        %v1843 = vmul.f32 %v1839, %v1839
        %v1844 = vsub.f32 %v1840, %v1842
        %v1845 = vsub.f32 %v1841, %v1843
        %v1846 = vsub.f32 %v1820, %v1838
        %v1847 = vsub.f32 %v1821, %v1839
        %v1848 = vadd.f32 %v1844, 1e-05
        %v1849 = vadd.f32 %v1845, 1e-05
        %v1850 = vrsqrt.pop %v1848
        %v1851 = vrsqrt.pop %v1849
        %v1852 = vmul.f32 %v1846, %v1850
        %v1853 = vmul.f32 %v1847, %v1851
        %v1854 = vlaneseq
        %v1855 = vshrl.u32 %v1854, 7
        %v1856 = vsub.s32 0, %v1855
        %v1857 = vrot.slane %v1822, %v1856
        %v1858 = vmul.f32 %v1852, %v1857
        %v1859 = vmul.f32 %v1853, %v1857
        %v1860 = vlaneseq
        %v1861 = vshrl.u32 %v1860, 7
        %v1862 = vsub.s32 0, %v1861
        %v1863 = vrot.slane %v1823, %v1862
        %v1864 = vadd.f32 %v1858, %v1863
        %v1865 = vadd.f32 %v1859, %v1863
        %s1866 = scalar_lea.vmem %s4, 16
        %v1867 = vld [vmem:[%s1866] sm:$0xf]
        %v1868 = vld [vmem:[%s1866 + $0x4] sm:$0xf]
        %v1869 = vld [vmem:[%s1866 + $0x8] sm:$0xf]
        %v1870 = vld [vmem:[%s1866 + $0xc] sm:$0xf]
        %v1871 = vld [vmem:[%s5 + $0x1] sm:$0x1]
        %v1872 = vpack.c.bf16 %v1865, %v1864
        %v1873 = vlaneseq
        %v1874 = vshrl.u32 %v1873, 7
        %v1875 = vsub.s32 0, %v1874
        %v1876 = vrot.slane %v1871, %v1875
        %v1881 = vunpack.c.l.b16 %v1867
        %v1882 = vunpack.c.l.b16 %v1868
        %v1883 = vunpack.c.l.b16 %v1869
        %v1884 = vunpack.c.l.b16 %v1870
        %v1885 = vpack.c.b16 %v1882, %v1881
        %v1886 = vpack.c.b16 %v1884, %v1883
        %v1890 = vsel %vm1022, %v1872, 0
        %1892 = vmatprep.subr.bf16.mxu0 0
        %1893 = vmatpush1.bf16.msra.mxu0 %v1885
        %1894 = vmatprep.subr.bf16.mxu0 0
        %1895 = vmatpush1.bf16.msra.mxu0 %v1886
        %1896 = vmatprep.subr.bf16.mxu0 0
        %1897 = vmatpush1.bf16.msra.mxu0 0
        %1898 = vmatprep.subr.bf16.mxu0 0
        %1899 = vmatpush1.bf16.msra.mxu0 0
        %1900 = vmatprep.subr.bf16.mxu0 0
        %1901 = vmatpush1.bf16.msra.mxu0 0
        %1902 = vmatprep.subr.bf16.mxu0 0
        %1903 = vmatpush1.bf16.msra.mxu0 0
        %1904 = vmatprep.subr.bf16.mxu0 0
        %1905 = vmatpush1.bf16.msra.mxu0 0
        %1906 = vmatprep.subr.bf16.mxu0 0
        %1907 = vmatpush1.bf16.msra.mxu0 0
        %1908 = vmatprep.subr.bf16.mxu0 0
        %1909 = vmatpush1.bf16.msra.mxu0 0
        %1910 = vmatprep.subr.bf16.mxu0 0
        %1911 = vmatpush1.bf16.msra.mxu0 0
        %1912 = vmatprep.subr.bf16.mxu0 0
        %1913 = vmatpush1.bf16.msra.mxu0 0
        %1914 = vmatprep.subr.bf16.mxu0 0
        %1915 = vmatpush1.bf16.msra.mxu0 0
        %1916 = vmatprep.subr.bf16.mxu0 0
        %1917 = vmatpush1.bf16.msra.mxu0 0
        %1918 = vmatprep.subr.bf16.mxu0 0
        %1919 = vmatpush1.bf16.msra.mxu0 0
        %1920 = vmatprep.subr.bf16.mxu0 0
        %1921 = vmatpush1.bf16.msra.mxu0 0
        %1922 = vmatprep.subr.bf16.mxu0 0
        %1923 = vmatpush1.bf16.msra.mxu0 0
        %1924 = vmatprep.mubr.bf16.mxu0 0
        %1925 = vmatmul.mubr.bf16.gmra.mrb[0].mxu0 %v1890
        %v1926 = vpop.f32.mrb[0].mxu0
        %v1927 = vadd.f32 %v1876, %v1926
        %v1928 = vpop.f32.mrb[0].mxu0
        %v1929 = vpop.f32.mrb[0].mxu0
        %v1930 = vadd.f32 %v1876, %v1929
        %v1931 = vpop.f32.mrb[0].mxu0
        %1932 = vdwg.mxu0
        %s1933 = scalar_lea.vmem %s6, 4
        %v1934 = vld [vmem:[%s1933] sm:$0x7]
        %v1937 = vrot.slane %v1927, 6
        %v1938 = vrot.slane %v1930, 6
        %v1939 = vsel %vm1134, %v1937, %v1938
        %v1943 = vsel %vm1134, 0.0, %v1937
        %v1944 = vlaneseq
        %v1945 = vshrl.u32 %v1944, 7
        %v1946 = vsub.s32 0, %v1945
        %v1947 = vrot.slane %v1934, %v1946
        %v1948 = vmul.f32 %v1947, %v1927
        %v1949 = vmul.f32 %v1947, %v1930
        %v1950 = vlaneseq
        %v1951 = vshrl.u32 %v1950, 7
        %v1952 = vsub.s32 1, %v1951
        %v1953 = vrot.slane %v1934, %v1952
        %v1954 = vmul.f32 %v1953, %v1943
        %v1955 = vmul.f32 %v1953, %v1939
        %v1956 = vmul.f32 %v1953, %v1938
        %v1960 = vrot.slane %v1954, 1
        %v1961 = vrot.slane %v1955, 1
        %v1962 = vsel %vm1158, %v1960, %v1961
        %v1963 = vrot.slane %v1956, 1
        %v1964 = vsel %vm1158, %v1961, %v1963
        %v1967 = vadd.f32 %v1948, %v1962
        %v1968 = vadd.f32 %v1949, %v1964
        %v1969 = vlaneseq
        %v1970 = vshrl.u32 %v1969, 7
        %v1971 = vsub.s32 2, %v1970
        %v1972 = vrot.slane %v1934, %v1971
        %v1973 = vmul.f32 %v1972, %v1943
        %v1974 = vmul.f32 %v1972, %v1939
        %v1975 = vadd.f32 %v1967, %v1973
        %v1976 = vadd.f32 %v1968, %v1974
        %v1977 = vld [vmem:[%s7 + $0x1] sm:$0x1]
        %v1978 = vlaneseq
        %v1979 = vshrl.u32 %v1978, 7
        %v1980 = vsub.s32 0, %v1979
        %v1981 = vrot.slane %v1977, %v1980
        %v1982 = vadd.f32 %v1975, %v1981
        %v1983 = vadd.f32 %v1976, %v1981
        %1986 = vrot.lane.b32.xlu0 %v1982, 32
        %v1987 = vpop.permute.xlu0 %1986
        %1988 = vrot.lane.b32.xlu0 %v1983, 32
        %v1989 = vpop.permute.xlu0 %1988
        %v1992 = vmul.f32 %v1982, %v1987
        %v1993 = vmul.f32 %v1983, %v1989
        %s1994 = scalar_lea.vmem %s8, 16
        %v1995 = vld [vmem:[%s1994] sm:$0xff]
        %v1996 = vld [vmem:[%s1994 + $0x8] sm:$0xff]
        %v1999 = vrot.slane %v1992, 1
        %v2000 = vrot.slane %v1993, 1
        %v2001 = vsel %vm1158, %v1999, %v2000
        %2002 = vrot.lane.b32.xlu0 %v1999, 64
        %v2003 = vpop.permute.xlu0 %2002
        %2004 = vrot.lane.b32.xlu0 %v2001, 64
        %v2005 = vpop.permute.xlu0 %2004
        %2006 = vrot.lane.b32.xlu0 %v2000, 64
        %v2007 = vpop.permute.xlu0 %2006
        %v2011 = vsel %vm1158, 0.0, %v2003
        %v2012 = vlaneseq
        %v2013 = vshrl.u32 %v2012, 7
        %v2014 = vsub.s32 0, %v2013
        %v2015 = vrot.slane %v1995, %v2014
        %2016 = vrot.lane.b32.xlu0 %v1992, 64
        %v2017 = vpop.permute.xlu0 %2016
        %2018 = vrot.lane.b32.xlu0 %v1993, 64
        %v2019 = vpop.permute.xlu0 %2018
        %v2022 = vmul.f32 %v2015, %v2017
        %v2023 = vmul.f32 %v2015, %v2019
        %v2024 = vlaneseq
        %v2025 = vshrl.u32 %v2024, 7
        %v2026 = vsub.s32 1, %v2025
        %v2027 = vrot.slane %v1995, %v2026
        %v2028 = vmul.f32 %v2027, %v2011
        %v2029 = vmul.f32 %v2027, %v2005
        %v2030 = vmul.f32 %v2027, %v2007
        %v2034 = vrot.slane %v2028, 6
        %v2035 = vrot.slane %v2029, 6
        %v2036 = vsel %vm1134, %v2034, %v2035
        %v2037 = vrot.slane %v2030, 6
        %v2038 = vsel %vm1134, %v2035, %v2037
        %v2041 = vadd.f32 %v2022, %v2036
        %v2042 = vadd.f32 %v2023, %v2038
        %v2043 = vlaneseq
        %v2044 = vshrl.u32 %v2043, 7
        %v2045 = vsub.s32 2, %v2044
        %v2046 = vrot.slane %v1995, %v2045
        %v2047 = vmul.f32 %v2046, %v2011
        %v2048 = vmul.f32 %v2046, %v2005
        %v2049 = vmul.f32 %v2046, %v2007
        %v2053 = vrot.slane %v2047, 5
        %v2054 = vrot.slane %v2048, 5
        %v2055 = vsel %vm1251, %v2053, %v2054
        %v2056 = vrot.slane %v2049, 5
        %v2057 = vsel %vm1251, %v2054, %v2056
        %v2060 = vadd.f32 %v2041, %v2055
        %v2061 = vadd.f32 %v2042, %v2057
        %v2062 = vlaneseq
        %v2063 = vshrl.u32 %v2062, 7
        %v2064 = vsub.s32 3, %v2063
        %v2065 = vrot.slane %v1995, %v2064
        %v2066 = vmul.f32 %v2065, %v2011
        %v2067 = vmul.f32 %v2065, %v2005
        %v2068 = vmul.f32 %v2065, %v2007
        %v2072 = vrot.slane %v2066, 4
        %v2073 = vrot.slane %v2067, 4
        %v2074 = vsel %vm1271, %v2072, %v2073
        %v2075 = vrot.slane %v2068, 4
        %v2076 = vsel %vm1271, %v2073, %v2075
        %v2079 = vadd.f32 %v2060, %v2074
        %v2080 = vadd.f32 %v2061, %v2076
        %v2081 = vlaneseq
        %v2082 = vshrl.u32 %v2081, 7
        %v2083 = vsub.s32 4, %v2082
        %v2084 = vrot.slane %v1995, %v2083
        %v2085 = vmul.f32 %v2084, %v2011
        %v2086 = vmul.f32 %v2084, %v2005
        %v2087 = vmul.f32 %v2084, %v2007
        %v2091 = vrot.slane %v2085, 3
        %v2092 = vrot.slane %v2086, 3
        %v2093 = vsel %vm1291, %v2091, %v2092
        %v2094 = vrot.slane %v2087, 3
        %v2095 = vsel %vm1291, %v2092, %v2094
        %v2098 = vadd.f32 %v2079, %v2093
        %v2099 = vadd.f32 %v2080, %v2095
        %v2100 = vlaneseq
        %v2101 = vshrl.u32 %v2100, 7
        %v2102 = vsub.s32 5, %v2101
        %v2103 = vrot.slane %v1995, %v2102
        %v2104 = vmul.f32 %v2103, %v2011
        %v2105 = vmul.f32 %v2103, %v2005
        %v2106 = vmul.f32 %v2103, %v2007
        %v2110 = vrot.slane %v2104, 2
        %v2111 = vrot.slane %v2105, 2
        %v2112 = vsel %vm1311, %v2110, %v2111
        %v2113 = vrot.slane %v2106, 2
        %v2114 = vsel %vm1311, %v2111, %v2113
        %v2117 = vadd.f32 %v2098, %v2112
        %v2118 = vadd.f32 %v2099, %v2114
        %v2119 = vlaneseq
        %v2120 = vshrl.u32 %v2119, 7
        %v2121 = vsub.s32 6, %v2120
        %v2122 = vrot.slane %v1995, %v2121
        %v2123 = vmul.f32 %v2122, %v2011
        %v2124 = vmul.f32 %v2122, %v2005
        %v2125 = vmul.f32 %v2122, %v2007
        %v2129 = vrot.slane %v2123, 1
        %v2130 = vrot.slane %v2124, 1
        %v2131 = vsel %vm1158, %v2129, %v2130
        %v2132 = vrot.slane %v2125, 1
        %v2133 = vsel %vm1158, %v2130, %v2132
        %v2136 = vadd.f32 %v2117, %v2131
        %v2137 = vadd.f32 %v2118, %v2133
        %v2138 = vlaneseq
        %v2139 = vshrl.u32 %v2138, 7
        %v2140 = vsub.s32 7, %v2139
        %v2141 = vrot.slane %v1995, %v2140
        %v2142 = vmul.f32 %v2141, %v2011
        %v2143 = vmul.f32 %v2141, %v2005
        %v2144 = vadd.f32 %v2136, %v2142
        %v2145 = vadd.f32 %v2137, %v2143
        %v2146 = vlaneseq
        %v2147 = vshrl.u32 %v2146, 7
        %v2148 = vsub.s32 0, %v2147
        %v2149 = vrot.slane %v1996, %v2148
        %v2150 = vmul.f32 %v2149, 0.0
        %v2151 = vmul.f32 %v2149, %v2011
        %v2152 = vmul.f32 %v2149, %v2005
        %v2156 = vrot.slane %v2150, 7
        %v2157 = vrot.slane %v2151, 7
        %v2158 = vsel %vm1358, %v2156, %v2157
        %v2159 = vrot.slane %v2152, 7
        %v2160 = vsel %vm1358, %v2157, %v2159
        %v2163 = vadd.f32 %v2144, %v2158
        %v2164 = vadd.f32 %v2145, %v2160
        %v2165 = vlaneseq
        %v2166 = vshrl.u32 %v2165, 7
        %v2167 = vsub.s32 1, %v2166
        %v2168 = vrot.slane %v1996, %v2167
        %v2169 = vmul.f32 %v2168, 0.0
        %v2170 = vmul.f32 %v2168, %v2011
        %v2171 = vmul.f32 %v2168, %v2005
        %v2175 = vrot.slane %v2169, 6
        %v2176 = vrot.slane %v2170, 6
        %v2177 = vsel %vm1134, %v2175, %v2176
        %v2178 = vrot.slane %v2171, 6
        %v2179 = vsel %vm1134, %v2176, %v2178
        %v2182 = vadd.f32 %v2163, %v2177
        %v2183 = vadd.f32 %v2164, %v2179
        %v2184 = vlaneseq
        %v2185 = vshrl.u32 %v2184, 7
        %v2186 = vsub.s32 2, %v2185
        %v2187 = vrot.slane %v1996, %v2186
        %v2188 = vmul.f32 %v2187, 0.0
        %v2189 = vmul.f32 %v2187, %v2011
        %v2190 = vmul.f32 %v2187, %v2005
        %v2194 = vrot.slane %v2188, 5
        %v2195 = vrot.slane %v2189, 5
        %v2196 = vsel %vm1251, %v2194, %v2195
        %v2197 = vrot.slane %v2190, 5
        %v2198 = vsel %vm1251, %v2195, %v2197
        %v2201 = vadd.f32 %v2182, %v2196
        %v2202 = vadd.f32 %v2183, %v2198
        %v2203 = vlaneseq
        %v2204 = vshrl.u32 %v2203, 7
        %v2205 = vsub.s32 3, %v2204
        %v2206 = vrot.slane %v1996, %v2205
        %v2207 = vmul.f32 %v2206, 0.0
        %v2208 = vmul.f32 %v2206, %v2011
        %v2209 = vmul.f32 %v2206, %v2005
        %v2213 = vrot.slane %v2207, 4
        %v2214 = vrot.slane %v2208, 4
        %v2215 = vsel %vm1271, %v2213, %v2214
        %v2216 = vrot.slane %v2209, 4
        %v2217 = vsel %vm1271, %v2214, %v2216
        %v2220 = vadd.f32 %v2201, %v2215
        %v2221 = vadd.f32 %v2202, %v2217
        %v2222 = vlaneseq
        %v2223 = vshrl.u32 %v2222, 7
        %v2224 = vsub.s32 4, %v2223
        %v2225 = vrot.slane %v1996, %v2224
        %v2226 = vmul.f32 %v2225, 0.0
        %v2227 = vmul.f32 %v2225, %v2011
        %v2228 = vmul.f32 %v2225, %v2005
        %v2232 = vrot.slane %v2226, 3
        %v2233 = vrot.slane %v2227, 3
        %v2234 = vsel %vm1291, %v2232, %v2233
        %v2235 = vrot.slane %v2228, 3
        %v2236 = vsel %vm1291, %v2233, %v2235
        %v2239 = vadd.f32 %v2220, %v2234
        %v2240 = vadd.f32 %v2221, %v2236
        %v2241 = vlaneseq
        %v2242 = vshrl.u32 %v2241, 7
        %v2243 = vsub.s32 5, %v2242
        %v2244 = vrot.slane %v1996, %v2243
        %v2245 = vmul.f32 %v2244, 0.0
        %v2246 = vmul.f32 %v2244, %v2011
        %v2247 = vmul.f32 %v2244, %v2005
        %v2251 = vrot.slane %v2245, 2
        %v2252 = vrot.slane %v2246, 2
        %v2253 = vsel %vm1311, %v2251, %v2252
        %v2254 = vrot.slane %v2247, 2
        %v2255 = vsel %vm1311, %v2252, %v2254
        %v2258 = vadd.f32 %v2239, %v2253
        %v2259 = vadd.f32 %v2240, %v2255
        %v2260 = vlaneseq
        %v2261 = vshrl.u32 %v2260, 7
        %v2262 = vsub.s32 6, %v2261
        %v2263 = vrot.slane %v1996, %v2262
        %v2264 = vmul.f32 %v2263, 0.0
        %v2265 = vmul.f32 %v2263, %v2011
        %v2266 = vmul.f32 %v2263, %v2005
        %v2270 = vrot.slane %v2264, 1
        %v2271 = vrot.slane %v2265, 1
        %v2272 = vsel %vm1158, %v2270, %v2271
        %v2273 = vrot.slane %v2266, 1
        %v2274 = vsel %vm1158, %v2271, %v2273
        %v2277 = vadd.f32 %v2258, %v2272
        %v2278 = vadd.f32 %v2259, %v2274
        %v2279 = vlaneseq
        %v2280 = vshrl.u32 %v2279, 7
        %v2281 = vsub.s32 7, %v2280
        %v2282 = vrot.slane %v1996, %v2281
        %v2283 = vmul.f32 %v2282, 0.0
        %v2284 = vmul.f32 %v2282, %v2011
        %v2285 = vadd.f32 %v2277, %v2283
        %v2286 = vadd.f32 %v2278, %v2284
        %v2287 = vld [vmem:[%s9 + $0x1] sm:$0x1]
        %v2288 = vlaneseq
        %v2289 = vshrl.u32 %v2288, 7
        %v2290 = vsub.s32 0, %v2289
        %v2291 = vrot.slane %v2287, %v2290
        %2293 = vrot.lane.b32.xlu0 %v2291, 64
        %v2294 = vpop.permute.xlu0 %2293
        %v2296 = vmul.f32 %v1992, %v2294
        %v2297 = vmul.f32 %v1993, %v2294
        %2300 = vrot.lane.b32.xlu0 %v2296, 64
        %v2301 = vpop.permute.xlu0 %2300
        %2302 = vrot.lane.b32.xlu0 %v2297, 64
        %v2303 = vpop.permute.xlu0 %2302
        %v2306 = vadd.f32 %v2285, %v2301
        %v2307 = vadd.f32 %v2286, %v2303
        %v2308 = vmul.f32 %v2306, %v1982
        %v2309 = vmul.f32 %v2307, %v1983
        %s2310 = scalar_lea.vmem %s10, 16
        %v2311 = vld [vmem:[%s2310] sm:$0xf]
        %v2312 = vld [vmem:[%s2310 + $0x4] sm:$0xf]
        %v2313 = vld [vmem:[%s2310 + $0x8] sm:$0xf]
        %v2314 = vld [vmem:[%s2310 + $0xc] sm:$0xf]
        %v2315 = vld [vmem:[%s11 + $0x1] sm:$0x1]
        %v2316 = vpack.c.bf16 %v2309, %v2308
        %v2317 = vlaneseq
        %v2318 = vshrl.u32 %v2317, 7
        %v2319 = vsub.s32 0, %v2318
        %v2320 = vrot.slane %v2315, %v2319
        %v2325 = vunpack.c.l.b16 %v2311
        %v2326 = vunpack.c.l.b16 %v2312
        %v2327 = vunpack.c.l.b16 %v2313
        %v2328 = vunpack.c.l.b16 %v2314
        %v2329 = vpack.c.b16 %v2326, %v2325
        %v2330 = vpack.c.b16 %v2328, %v2327
        %v2334 = vsel %vm1022, %v2316, 0
        %2336 = vmatprep.subr.bf16.mxu0 0
        %2337 = vmatpush1.bf16.msra.mxu0 %v2329
        %2338 = vmatprep.subr.bf16.mxu0 0
        %2339 = vmatpush1.bf16.msra.mxu0 %v2330
        %2340 = vmatprep.subr.bf16.mxu0 0
        %2341 = vmatpush1.bf16.msra.mxu0 0
        %2342 = vmatprep.subr.bf16.mxu0 0
        %2343 = vmatpush1.bf16.msra.mxu0 0
        %2344 = vmatprep.subr.bf16.mxu0 0
        %2345 = vmatpush1.bf16.msra.mxu0 0
        %2346 = vmatprep.subr.bf16.mxu0 0
        %2347 = vmatpush1.bf16.msra.mxu0 0
        %2348 = vmatprep.subr.bf16.mxu0 0
        %2349 = vmatpush1.bf16.msra.mxu0 0
        %2350 = vmatprep.subr.bf16.mxu0 0
        %2351 = vmatpush1.bf16.msra.mxu0 0
        %2352 = vmatprep.subr.bf16.mxu0 0
        %2353 = vmatpush1.bf16.msra.mxu0 0
        %2354 = vmatprep.subr.bf16.mxu0 0
        %2355 = vmatpush1.bf16.msra.mxu0 0
        %2356 = vmatprep.subr.bf16.mxu0 0
        %2357 = vmatpush1.bf16.msra.mxu0 0
        %2358 = vmatprep.subr.bf16.mxu0 0
        %2359 = vmatpush1.bf16.msra.mxu0 0
        %2360 = vmatprep.subr.bf16.mxu0 0
        %2361 = vmatpush1.bf16.msra.mxu0 0
        %2362 = vmatprep.subr.bf16.mxu0 0
        %2363 = vmatpush1.bf16.msra.mxu0 0
        %2364 = vmatprep.subr.bf16.mxu0 0
        %2365 = vmatpush1.bf16.msra.mxu0 0
        %2366 = vmatprep.subr.bf16.mxu0 0
        %2367 = vmatpush1.bf16.msra.mxu0 0
        %2368 = vmatprep.mubr.bf16.mxu0 0
        %2369 = vmatmul.mubr.bf16.gmra.mrb[0].mxu0 %v2334
        %v2370 = vpop.f32.mrb[0].mxu0
        %v2371 = vadd.f32 %v2320, %v2370
        %v2372 = vpop.f32.mrb[0].mxu0
        %v2373 = vpop.f32.mrb[0].mxu0
        %v2374 = vadd.f32 %v2320, %v2373
        %v2375 = vpop.f32.mrb[0].mxu0
        %2376 = vdwg.mxu0
        %v2377 = vadd.f32 %v2371, %v1820
        %v2378 = vadd.f32 %v2374, %v1821
        %v2379 = vld [vmem:[%s12 + $0x1] sm:$0x1]
        %v2380 = vld [vmem:[%s13 + $0x1] sm:$0x1]
        %v2381 = vsel %vm1022, %v2377, 0.0
        %2382 = vadd.xlane.f32.xlu0 %v2381
        %v2383 = vpop.xlane.xlu0 %2382
        %v2384 = vsel %vm1022, %v2378, 0.0
        %2385 = vadd.xlane.f32.xlu0 %v2384
        %v2386 = vpop.xlane.xlu0 %2385
        %v2387 = vmul.f32 %v2377, %v2377
        %v2388 = vmul.f32 %v2378, %v2378
        %v2389 = vsel %vm1022, %v2387, 0.0
        %2390 = vadd.xlane.f32.xlu0 %v2389
        %v2391 = vpop.xlane.xlu0 %2390
        %v2392 = vsel %vm1022, %v2388, 0.0
        %2393 = vadd.xlane.f32.xlu0 %v2392
        %v2394 = vpop.xlane.xlu0 %2393
        %v2395 = vmul.f32 %v2383, 0.03125
        %v2396 = vmul.f32 %v2386, 0.03125
        %v2397 = vmul.f32 %v2391, 0.03125
        %v2398 = vmul.f32 %v2394, 0.03125
        %v2399 = vmul.f32 %v2395, %v2395
        %v2400 = vmul.f32 %v2396, %v2396
        %v2401 = vsub.f32 %v2397, %v2399
        %v2402 = vsub.f32 %v2398, %v2400
        %v2403 = vsub.f32 %v2377, %v2395
        %v2404 = vsub.f32 %v2378, %v2396
        %v2405 = vadd.f32 %v2401, 1e-05
        %v2406 = vadd.f32 %v2402, 1e-05
        %v2407 = vrsqrt.pop %v2405
        %v2408 = vrsqrt.pop %v2406
        %v2409 = vmul.f32 %v2403, %v2407
        %v2410 = vmul.f32 %v2404, %v2408
        %v2411 = vlaneseq
        %v2412 = vshrl.u32 %v2411, 7
        %v2413 = vsub.s32 0, %v2412
        %v2414 = vrot.slane %v2379, %v2413
        %v2415 = vmul.f32 %v2409, %v2414
        %v2416 = vmul.f32 %v2410, %v2414
        %v2417 = vlaneseq
        %v2418 = vshrl.u32 %v2417, 7
        %v2419 = vsub.s32 0, %v2418
        %v2420 = vrot.slane %v2380, %v2419
        %v2421 = vadd.f32 %v2415, %v2420
        %v2422 = vadd.f32 %v2416, %v2420
        %s2423 = scalar_lea.vmem %s14, 16
        %v2424 = vld [vmem:[%s2423] sm:$0xf]
        %v2425 = vld [vmem:[%s2423 + $0x4] sm:$0xf]
        %v2426 = vld [vmem:[%s2423 + $0x8] sm:$0xf]
        %v2427 = vld [vmem:[%s2423 + $0xc] sm:$0xf]
        %v2428 = vld [vmem:[%s15 + $0x1] sm:$0x1]
        %v2429 = vpack.c.bf16 %v2422, %v2421
        %v2430 = vlaneseq
        %v2431 = vshrl.u32 %v2430, 7
        %v2432 = vsub.s32 0, %v2431
        %v2433 = vrot.slane %v2428, %v2432
        %v2438 = vunpack.c.l.b16 %v2424
        %v2439 = vunpack.c.l.b16 %v2425
        %v2440 = vunpack.c.l.b16 %v2426
        %v2441 = vunpack.c.l.b16 %v2427
        %v2442 = vpack.c.b16 %v2439, %v2438
        %v2443 = vpack.c.b16 %v2441, %v2440
        %v2447 = vsel %vm1022, %v2429, 0
        %2449 = vmatprep.subr.bf16.mxu0 0
        %2450 = vmatpush1.bf16.msra.mxu0 %v2442
        %2451 = vmatprep.subr.bf16.mxu0 0
        %2452 = vmatpush1.bf16.msra.mxu0 %v2443
        %2453 = vmatprep.subr.bf16.mxu0 0
        %2454 = vmatpush1.bf16.msra.mxu0 0
        %2455 = vmatprep.subr.bf16.mxu0 0
        %2456 = vmatpush1.bf16.msra.mxu0 0
        %2457 = vmatprep.subr.bf16.mxu0 0
        %2458 = vmatpush1.bf16.msra.mxu0 0
        %2459 = vmatprep.subr.bf16.mxu0 0
        %2460 = vmatpush1.bf16.msra.mxu0 0
        %2461 = vmatprep.subr.bf16.mxu0 0
        %2462 = vmatpush1.bf16.msra.mxu0 0
        %2463 = vmatprep.subr.bf16.mxu0 0
        %2464 = vmatpush1.bf16.msra.mxu0 0
        %2465 = vmatprep.subr.bf16.mxu0 0
        %2466 = vmatpush1.bf16.msra.mxu0 0
        %2467 = vmatprep.subr.bf16.mxu0 0
        %2468 = vmatpush1.bf16.msra.mxu0 0
        %2469 = vmatprep.subr.bf16.mxu0 0
        %2470 = vmatpush1.bf16.msra.mxu0 0
        %2471 = vmatprep.subr.bf16.mxu0 0
        %2472 = vmatpush1.bf16.msra.mxu0 0
        %2473 = vmatprep.subr.bf16.mxu0 0
        %2474 = vmatpush1.bf16.msra.mxu0 0
        %2475 = vmatprep.subr.bf16.mxu0 0
        %2476 = vmatpush1.bf16.msra.mxu0 0
        %2477 = vmatprep.subr.bf16.mxu0 0
        %2478 = vmatpush1.bf16.msra.mxu0 0
        %2479 = vmatprep.subr.bf16.mxu0 0
        %2480 = vmatpush1.bf16.msra.mxu0 0
        %2481 = vmatprep.mubr.bf16.mxu0 0
        %2482 = vmatmul.mubr.bf16.gmra.mrb[0].mxu0 %v2447
        %v2483 = vpop.f32.mrb[0].mxu0
        %v2484 = vadd.f32 %v2433, %v2483
        %v2485 = vpop.f32.mrb[0].mxu0
        %v2486 = vpop.f32.mrb[0].mxu0
        %v2487 = vadd.f32 %v2433, %v2486
        %v2488 = vpop.f32.mrb[0].mxu0
        %2489 = vdwg.mxu0
        %v2490 = vmul.f32 %v2484, 0.5
        %v2491 = vmul.f32 %v2487, 0.5
        %v2492 = vmul.f32 %v2484, %v2484
        %v2493 = vmul.f32 %v2487, %v2487
        %v2494 = vmul.f32 %v2492, %v2484
        %v2495 = vmul.f32 %v2493, %v2487
        %v2496 = vmul.f32 %v2494, 0.044715
        %v2497 = vmul.f32 %v2495, 0.044715
        %v2498 = vadd.f32 %v2484, %v2496
        %v2499 = vadd.f32 %v2487, %v2497
        %v2500 = vmul.f32 %v2498, 0.7978846
        %v2501 = vmul.f32 %v2499, 0.7978846
        %v2502 = vtanh.pop %v2500
        %v2503 = vtanh.pop %v2501
        %v2504 = vadd.f32 %v2502, 1.0
        %v2505 = vadd.f32 %v2503, 1.0
        %v2506 = vmul.f32 %v2490, %v2504
        %v2507 = vmul.f32 %v2491, %v2505
        %s2508 = scalar_lea.vmem %s16, 64
        %v2509 = vld [vmem:[%s2508] sm:$0xf]
        %v2510 = vld [vmem:[%s2508 + $0x4] sm:$0xf]
        %v2511 = vld [vmem:[%s2508 + $0x8] sm:$0xf]
        %v2512 = vld [vmem:[%s2508 + $0xc] sm:$0xf]
        %v2513 = vld [vmem:[%s2508 + $0x10] sm:$0xf]
        %v2514 = vld [vmem:[%s2508 + $0x14] sm:$0xf]
        %v2515 = vld [vmem:[%s2508 + $0x18] sm:$0xf]
        %v2516 = vld [vmem:[%s2508 + $0x1c] sm:$0xf]
        %v2517 = vld [vmem:[%s2508 + $0x20] sm:$0xf]
        %v2518 = vld [vmem:[%s2508 + $0x24] sm:$0xf]
        %v2519 = vld [vmem:[%s2508 + $0x28] sm:$0xf]
        %v2520 = vld [vmem:[%s2508 + $0x2c] sm:$0xf]
        %v2521 = vld [vmem:[%s2508 + $0x30] sm:$0xf]
        %v2522 = vld [vmem:[%s2508 + $0x34] sm:$0xf]
        %v2523 = vld [vmem:[%s2508 + $0x38] sm:$0xf]
        %v2524 = vld [vmem:[%s2508 + $0x3c] sm:$0xf]
        %v2525 = vld [vmem:[%s17 + $0x1] sm:$0x1]
        %v2526 = vpack.c.bf16 %v2507, %v2506
        %v2527 = vlaneseq
        %v2528 = vshrl.u32 %v2527, 7
        %v2529 = vsub.s32 0, %v2528
        %v2530 = vrot.slane %v2525, %v2529
        %v2547 = vunpack.c.l.b16 %v2509
        %v2548 = vunpack.c.l.b16 %v2510
        %v2549 = vunpack.c.l.b16 %v2511
        %v2550 = vunpack.c.l.b16 %v2512
        %v2551 = vunpack.c.l.b16 %v2513
        %v2552 = vunpack.c.l.b16 %v2514
        %v2553 = vunpack.c.l.b16 %v2515
        %v2554 = vunpack.c.l.b16 %v2516
        %v2555 = vunpack.c.l.b16 %v2517
        %v2556 = vunpack.c.l.b16 %v2518
        %v2557 = vunpack.c.l.b16 %v2519
        %v2558 = vunpack.c.l.b16 %v2520
        %v2559 = vunpack.c.l.b16 %v2521
        %v2560 = vunpack.c.l.b16 %v2522
        %v2561 = vunpack.c.l.b16 %v2523
        %v2562 = vunpack.c.l.b16 %v2524
        %v2563 = vpack.c.b16 %v2548, %v2547
        %v2564 = vpack.c.b16 %v2550, %v2549
        %v2565 = vpack.c.b16 %v2552, %v2551
        %v2566 = vpack.c.b16 %v2554, %v2553
        %v2567 = vpack.c.b16 %v2556, %v2555
        %v2568 = vpack.c.b16 %v2558, %v2557
        %v2569 = vpack.c.b16 %v2560, %v2559
        %v2570 = vpack.c.b16 %v2562, %v2561
        %2579 = vmatprep.subr.bf16.mxu0 0
        %2580 = vmatpush1.bf16.msra.mxu0 %v2563
        %2581 = vmatprep.subr.bf16.mxu0 0
        %2582 = vmatpush1.bf16.msra.mxu0 %v2564
        %2583 = vmatprep.subr.bf16.mxu0 0
        %2584 = vmatpush1.bf16.msra.mxu0 %v2565
        %2585 = vmatprep.subr.bf16.mxu0 0
        %2586 = vmatpush1.bf16.msra.mxu0 %v2566
        %2587 = vmatprep.subr.bf16.mxu0 0
        %2588 = vmatpush1.bf16.msra.mxu0 %v2567
        %2589 = vmatprep.subr.bf16.mxu0 0
        %2590 = vmatpush1.bf16.msra.mxu0 %v2568
        %2591 = vmatprep.subr.bf16.mxu0 0
        %2592 = vmatpush1.bf16.msra.mxu0 %v2569
        %2593 = vmatprep.subr.bf16.mxu0 0
        %2594 = vmatpush1.bf16.msra.mxu0 %v2570
        %2595 = vmatprep.subr.bf16.mxu0 0
        %2596 = vmatpush1.bf16.msra.mxu0 0
        %2597 = vmatprep.subr.bf16.mxu0 0
        %2598 = vmatpush1.bf16.msra.mxu0 0
        %2599 = vmatprep.subr.bf16.mxu0 0
        %2600 = vmatpush1.bf16.msra.mxu0 0
        %2601 = vmatprep.subr.bf16.mxu0 0
        %2602 = vmatpush1.bf16.msra.mxu0 0
        %2603 = vmatprep.subr.bf16.mxu0 0
        %2604 = vmatpush1.bf16.msra.mxu0 0
        %2605 = vmatprep.subr.bf16.mxu0 0
        %2606 = vmatpush1.bf16.msra.mxu0 0
        %2607 = vmatprep.subr.bf16.mxu0 0
        %2608 = vmatpush1.bf16.msra.mxu0 0
        %2609 = vmatprep.subr.bf16.mxu0 0
        %2610 = vmatpush1.bf16.msra.mxu0 0
        %2611 = vmatprep.mubr.bf16.mxu0 0
        %2612 = vmatmul.mubr.bf16.gmra.mrb[0].mxu0 %v2526
        %v2613 = vpop.f32.mrb[0].mxu0
        %v2614 = vadd.f32 %v2530, %v2613
        %v2615 = vpop.f32.mrb[0].mxu0
        %v2616 = vpop.f32.mrb[0].mxu0
        %v2617 = vadd.f32 %v2530, %v2616
        %v2618 = vpop.f32.mrb[0].mxu0
        %2619 = vdwg.mxu0
        %v2620 = vadd.f32 %v2614, %v2377
        %v2621 = vadd.f32 %v2617, %v2378
        %v2622 = vld [vmem:[%s18] sm:$0x1]
        %v2623 = vld [vmem:[%s19] sm:$0x1]
        %v2624 = vsel %vm1022, %v2620, 0.0
        %2625 = vadd.xlane.f32.xlu0 %v2624
        %v2626 = vpop.xlane.xlu0 %2625
        %v2627 = vsel %vm1022, %v2621, 0.0
        %2628 = vadd.xlane.f32.xlu0 %v2627
        %v2629 = vpop.xlane.xlu0 %2628
        %v2630 = vmul.f32 %v2620, %v2620
        %v2631 = vmul.f32 %v2621, %v2621
        %v2632 = vsel %vm1022, %v2630, 0.0
        %2633 = vadd.xlane.f32.xlu0 %v2632
        %v2634 = vpop.xlane.xlu0 %2633
        %v2635 = vsel %vm1022, %v2631, 0.0
        %2636 = vadd.xlane.f32.xlu0 %v2635
        %v2637 = vpop.xlane.xlu0 %2636
        %v2638 = vmul.f32 %v2626, 0.03125
        %v2639 = vmul.f32 %v2629, 0.03125
        %v2640 = vmul.f32 %v2634, 0.03125
        %v2641 = vmul.f32 %v2637, 0.03125
        %v2642 = vmul.f32 %v2638, %v2638
        %v2643 = vmul.f32 %v2639, %v2639
        %v2644 = vsub.f32 %v2640, %v2642
        %v2645 = vsub.f32 %v2641, %v2643
        %v2646 = vsub.f32 %v2620, %v2638
        %v2647 = vsub.f32 %v2621, %v2639
        %v2648 = vadd.f32 %v2644, 1e-05
        %v2649 = vadd.f32 %v2645, 1e-05
        %v2650 = vrsqrt.pop %v2648
        %v2651 = vrsqrt.pop %v2649
        %v2652 = vmul.f32 %v2646, %v2650
        %v2653 = vmul.f32 %v2647, %v2651
        %v2655 = vlaneseq
        %v2656 = vshrl.u32 %v2655, 7
        %v2657 = vsub.s32 0, %v2656
        %v2658 = vrot.slane %v2622, %v2657
        %v2660 = vmul.f32 %v2652, %v2658
        %v2661 = vmul.f32 %v2653, %v2658
        %v2663 = vlaneseq
        %v2664 = vshrl.u32 %v2663, 7
        %v2665 = vsub.s32 0, %v2664
        %v2666 = vrot.slane %v2623, %v2665
        %v2668 = vadd.f32 %v2660, %v2666
        %v2669 = vadd.f32 %v2661, %v2666
        %2670 = vst.msk [vmem:[%s623] sm:$0xff] %vm1022, %v2668
        %2671 = vst.msk [vmem:[%s623 + $0x8] sm:$0xff] %vm1022, %v2669
        %s2672 = sand.u32 %s467, 1
        %s2673 = scalar_lea.sflag [#allocation3], %s2672
        %s2674 = sand.u32 %s467, 1
        %s2675 = smul.addr %s2674, 16
        %s2676 = scalar_lea.vmem [#allocation2], %s2675
        // Predicated region
        $region101: #{hyena_dna_forward.1} parent=99 // pred_check
          %p2677 = pneg %p477
        $region102: #{hyena_dna_forward.1} parent=99 // pred_check_branch
          %2679 = sbr.rel (%p2677) target = $region104
        $region103: #{hyena_dna_forward.1} parent=99 // pred_region
          %s2680 = smul.u32 2, %s34
          %s2682 = ssub.s32 256, 256
          %2683 = vsyncadd %s2673, %s2682
          %s2684 = smul.addr %s2680, 128
          %s2685 = scalar_lea.hbm %s20, %s2684
          %s2686 = sshll.u32 %s2676, 4
          %s2687 = int_to_ptr.vmem [resolvable:$true] %s2686
          %2692 = dma.vmem_to_hbm [thread:$0]  %s2687, 256, %s2685, %s2673, 128, 128, 8
        $region104: #{hyena_dna_forward.1} parent=99 // pred_fallthru
          _
      $region100: #{hyena_dna_forward.1} parent=5 // pred_fallthru
        _
      %p2693 = scmp.le.s32.totalorder 2, %s29
      // Predicated region
      $region105: #{hyena_dna_forward.1} parent=5 // pred_check
        %p2694 = pneg %p2693
      $region106: #{hyena_dna_forward.1} parent=5 // pred_check_branch
        %2696 = sbr.rel (%p2694) target = $region108
      $region107: #{hyena_dna_forward.1} parent=5 // pred_region
        %s2697 = ssub.s32 %s29, 2
        // Predicated region
        $region109: #{hyena_dna_forward.1} parent=107 // pred_check
          %p2698 = pneg %p483
        $region110: #{hyena_dna_forward.1} parent=107 // pred_check_branch
          %2700 = sbr.rel (%p2698) target = $region112
        $region111: #{hyena_dna_forward.1} parent=107 // pred_region
          %s2701 = sand.u32 %s468, 1
          %s2702 = scalar_lea.sflag [#allocation3], %s2701
          %s2703 = sand.u32 %s468, 1
          %s2704 = smul.addr %s2703, 16
          %s2705 = scalar_lea.vmem [#allocation2], %s2704
          %2706 = dma.done %s2702, 256
        $region112: #{hyena_dna_forward.1} parent=107 // pred_fallthru
          _
      $region108: #{hyena_dna_forward.1} parent=5 // pred_fallthru
        _
    $region6: #{hyena_dna_forward.1} parent=1 // loop_footer
      %s33 = sadd.s32 1, %s29
    $region7: #{hyena_dna_forward.1} parent=1 // loop_footer_branch
      %28 = sbr.rel target = $region3
    $region8: #{hyena_dna_forward.1} parent=1 // loop_exit
      _
    %2707 = vsyncpa [#allocation3], 1
    %s2708 = scalar_lea.sflag [#allocation3], 1
    %2709 = vsyncpa %s2708, 1

</llo_original>
